<compile_context>
chip_gen: v6e
topology: v6e:2x2x1
jax: 0.10.0
libtpu: 0.0.40
codegen_flags: <defaults>
</compile_context>

<pallas_src>
import functools

import jax
import jax.numpy as jnp
from jax import lax
from jax.experimental import pallas as pl
from jax.experimental.pallas import tpu as pltpu


# ----------------------------------------------------------------------------
# Fused Pallas kernel: whole RefineModule forward for one block of B samples
# ----------------------------------------------------------------------------
def _refine_kernel(x_ref, w111_ref, w_b11_ref, w_b12_ref, w_b13_ref,
                   w_cat_ref, gam_ref, bet_ref, mask_ref, seg_ref,
                   bcast_ref, member2_ref, o_ref, *,
                   eps, inv_group_elems,
                   taps_b11, taps_b12, taps_b13, taps_cat):
    """All refs live in VMEM.

    x_ref:       (Cin, B*HW)        block of B samples, lane-folded
    w111_ref:    (3*Cout, Cin)      stacked 1x1 weights [b0; b1_0; res]
    w_*_ref:     (Cout, T*Cin_s)    tap-stacked conv weights
    gam_ref:     (Cout, 7)          GroupNorm gammas, one column per stage
    bet_ref:     (Cout, 7)          GroupNorm betas
    mask_ref:    (n_off, B*HW)      f32 zero-padding border masks per offset
    seg_ref:     (B*HW, B)          per-sample segment-sum matrix
    bcast_ref:   (B, B*HW)          per-sample broadcast matrix (seg^T)
    member2_ref: (2*Cout, 2*Cout)   block-diag group-membership matrix
    o_ref:       (Cout, B*HW)       output block
    """
    cout = o_ref.shape[0]
    bhw = o_ref.shape[1]
    nb = seg_ref.shape[1]                       # samples per block (static)

    x = x_ref[...]                              # (Cin, B*HW), f32

    def shift_mask(xin, off, mrow):
        # Shift the flat spatial axis by `off` and zero the positions whose
        # source falls outside the (per-sample) image: 'same' zero padding.
        if mrow < 0:                            # centre tap: no shift, no mask
            return xin
        xs = pltpu.roll(xin, shift=(-off) % bhw, axis=1)
        return xs * mask_ref[mrow:mrow + 1, :]  # sublane-broadcast mask

    def conv(xin, w_ref, taps):
        # Stride-1 'same' conv as ONE matmul over the tap-stacked input.
        stack = jnp.concatenate(
            [shift_mask(xin, off, mrow) for off, mrow in taps], axis=0)
        return jnp.dot(w_ref[...], stack, preferred_element_type=jnp.float32)

    def group_norm(y, stage):
        # GroupNorm with per-sample statistics and folded affine. y: (Cout, BHW)
        gamma = gam_ref[:, stage:stage + 1]     # (Cout, 1)
        beta = bet_ref[:, stage:stage + 1]      # (Cout, 1)
        if nb == 1:
            s = jnp.sum(y, axis=1, keepdims=True)          # (Cout, 1)
            sq = jnp.sum(y * y, axis=1, keepdims=True)
        else:
            seg = seg_ref[...]
            s = jnp.dot(y, seg, preferred_element_type=jnp.float32)       # (Cout, B)
            sq = jnp.dot(y * y, seg, preferred_element_type=jnp.float32)  # (Cout, B)
        stats = jnp.concatenate([s, sq], axis=0)            # (2Cout, B)
        # Single membership matmul combines + broadcasts group stats per channel.
        g = jnp.dot(member2_ref[...], stats,
                    preferred_element_type=jnp.float32) * inv_group_elems
        mean = g[:cout]                                     # (Cout, B)
        var = jnp.maximum(g[cout:] - mean * mean, 0.0)      # biased, single pass
        scale = gamma * lax.rsqrt(var + eps)                # (Cout, B)
        shift = beta - mean * scale                         # (Cout, B)
        if nb == 1:
            return y * scale + shift                        # natural broadcast
        ss = jnp.concatenate([scale, shift], axis=0)        # (2Cout, B)
        ssf = jnp.dot(ss, bcast_ref[...],
                      preferred_element_type=jnp.float32)   # (2Cout, BHW)
        return y * ssf[:cout] + ssf[cout:]                  # single FMA epilogue

    # ---- fused 1x1 stage: branch0, branch1[0], conv_res share input x ------
    y111 = jnp.dot(w111_ref[...], x, preferred_element_type=jnp.float32)  # (3Cout, BHW)
    x0 = group_norm(y111[:cout], 0)                 # branch0
    t1 = group_norm(y111[cout:2 * cout], 1)         # branch1 stage 0
    x_res = group_norm(y111[2 * cout:], 6)          # conv_res

    # ---- rest of branch1 ----------------------------------------------------
    t1 = group_norm(conv(t1, w_b11_ref, taps_b11), 2)   # 1x3, pad (0,1)
    t1 = group_norm(conv(t1, w_b12_ref, taps_b12), 3)   # 3x1, pad (1,0)
    x1 = group_norm(conv(t1, w_b13_ref, taps_b13), 4)   # 3x3, pad 3, dil 3

    # ---- cat conv: x0/x1 fed straight into the tap stack (no (2Cout,HW) concat
    #      as a standalone intermediate; channel order matches torch.cat) ------
    pieces = []
    for off, mrow in taps_cat:
        pieces.append(shift_mask(x0, off, mrow))
        pieces.append(shift_mask(x1, off, mrow))
    cat_stack = jnp.concatenate(pieces, axis=0)          # (9*2*Cout, BHW)
    x_cat = group_norm(jnp.dot(w_cat_ref[...], cat_stack,
                               preferred_element_type=jnp.float32), 5)

    # ---- residual add + ReLU fused into the epilogue ------------------------
    o_ref[...] = jnp.maximum(x_cat + x_res, 0.0)


# ----------------------------------------------------------------------------
# Wrapper
# ----------------------------------------------------------------------------
def refine_forward(x_nchw, p, *, groups=8, eps=1e-5, samples_per_block=None):
    """RefineModule.forward.  x_nchw: (N, Cin, H, W) -> (N, Cout, H, W)."""
    n, cin, hgt, wid = x_nchw.shape
    hw = hgt * wid
    cout = p["b0"]["w"].shape[-1]
    assert cout % groups == 0, "GroupNorm requires Cout % groups == 0"
    cpg = cout // groups

    # ---- samples per grid block: lane width ~2048, keep >=2 steps when N>=2 --
    if samples_per_block is None:
        b_blk = max(1, 2048 // hw)
        if n >= 2:
            b_blk = min(b_blk, -(-n // 2))
        b_blk = max(1, min(b_blk, n))
    else:
        b_blk = max(1, min(samples_per_block, n))
    if (b_blk * hw) % 128 != 0:
        b_blk = n                      # single block: lane dim equals full array
    n_blocks = -(-n // b_blk)
    n_pad = n_blocks * b_blk
    bhw = b_blk * hw

    # ---- tap geometry --------------------------------------------------------
    def taps_for(kh, kw, ph, pw, dil):
        return [(ki * dil - ph, kj * dil - pw)
                for ki in range(kh) for kj in range(kw)]

    taps_b11 = taps_for(1, 3, 0, 1, 1)     # 1x3, pad (0,1)
    taps_b12 = taps_for(3, 1, 1, 0, 1)     # 3x1, pad (1,0)
    taps_b13 = taps_for(3, 3, 3, 3, 3)     # 3x3, pad 3, dil 3
    taps_cat = taps_for(3, 3, 1, 1, 1)     # 3x3, pad 1

    offsets = []
    for taps in (taps_b11, taps_b12, taps_b13, taps_cat):
        for o in taps:
            if o != (0, 0) and o not in offsets:
                offsets.append(o)
    mask_row = {o: i for i, o in enumerate(offsets)}

    def enc(taps):
        return tuple((dh * wid + dw, mask_row.get((dh, dw), -1))
                     for dh, dw in taps)

    # ---- grid-invariant constants, hoisted to the host -----------------------
    pos = jnp.arange(bhw, dtype=jnp.int32)
    r = pos % hw
    h_idx = r // wid
    w_idx = r % wid

    def make_mask(dh, dw):
        ok = ((h_idx + dh >= 0) & (h_idx + dh < hgt) &
              (w_idx + dw >= 0) & (w_idx + dw < wid))
        return ok.astype(jnp.float32)

    mask_arr = jnp.stack([make_mask(dh, dw) for dh, dw in offsets], axis=0)

    seg = (pos[:, None] // hw ==
           jnp.arange(b_blk, dtype=jnp.int32)[None, :]).astype(jnp.float32)
    bcast = jnp.transpose(seg)

    gi = jnp.arange(cout, dtype=jnp.int32) // cpg
    member = (gi[:, None] == gi[None, :]).astype(jnp.float32)
    member2 = jnp.kron(jnp.eye(2, dtype=jnp.float32), member)      # (2Cout, 2Cout)

    # ---- weight packing -------------------------------------------------------
    def prep_stack(w):
        # (kh, kw, Cin_s, Cout) -> (Cout, kh*kw*Cin_s), tap-major columns.
        kh, kw, ci_, co_ = w.shape
        return jnp.transpose(w.reshape(kh * kw, ci_, co_),
                             (2, 0, 1)).reshape(co_, kh * kw * ci_)

    w111 = jnp.concatenate([jnp.transpose(p["b0"]["w"][0, 0]),
                            jnp.transpose(p["b1_0"]["w"][0, 0]),
                            jnp.transpose(p["res"]["w"][0, 0])], axis=0)
    w_b11 = prep_stack(p["b1_1"]["w"])
    w_b12 = prep_stack(p["b1_2"]["w"])
    w_b13 = prep_stack(p["b1_3"]["w"])
    w_cat = prep_stack(p["cat"]["w"])

    stage_keys = ("b0", "b1_0", "b1_1", "b1_2", "b1_3", "cat", "res")
    gammas = jnp.stack([p[k]["g"] for k in stage_keys], axis=1)    # (Cout, 7)
    betas = jnp.stack([p[k]["b"] for k in stage_keys], axis=1)     # (Cout, 7)

    # ---- lane-folded input: (Cin, n_pad*HW), samples contiguous on lanes ------
    x_flat = x_nchw.reshape(n, cin, hw)
    if n_pad != n:
        x_flat = jnp.concatenate(
            [x_flat, jnp.zeros((n_pad - n, cin, hw), x_flat.dtype)], axis=0)
    x_lanes = jnp.transpose(x_flat, (1, 0, 2)).reshape(cin, n_pad * hw)

    consts = (w111, w_b11, w_b12, w_b13, w_cat, gammas, betas,
              mask_arr, seg, bcast, member2)

    def const_spec(a):
        nd = a.ndim
        return pl.BlockSpec(a.shape, lambda i, _n=nd: (0,) * _n)

    out = pl.pallas_call(
        functools.partial(
            _refine_kernel, eps=eps,
            inv_group_elems=1.0 / float(cpg * hw),
            taps_b11=enc(taps_b11), taps_b12=enc(taps_b12),
            taps_b13=enc(taps_b13), taps_cat=enc(taps_cat)),
        grid=(n_blocks,),
        in_specs=[pl.BlockSpec((cin, bhw), lambda i: (0, i))]
                 + [const_spec(a) for a in consts],
        out_specs=pl.BlockSpec((cout, bhw), lambda i: (0, i)),
        out_shape=jax.ShapeDtypeStruct((cout, n_pad * hw), jnp.float32),
        compiler_params=pltpu.CompilerParams(
            dimension_semantics=("parallel",)),    # sample blocks -> both TCs on v7x
    )(x_lanes, *consts)

    out = out.reshape(cout, n_pad, hw)
    out = jnp.transpose(out, (1, 0, 2))[:n]
    return out.reshape(n, cout, hgt, wid)


# ----------------------------------------------------------------------------
# Parameters (synthetic, deterministic)
# ----------------------------------------------------------------------------
def init_refine_params(key, in_ch, out_ch):
    """Conv weights ~ N(0, 0.05) in HWIO layout, GN gamma=1, beta=0."""
    def conv_w(k, kh, kw, cin, cout):
        return 0.05 * jax.random.normal(k, (kh, kw, cin, cout), jnp.float32)

    keys = jax.random.split(key, 7)
    p = {}
    p["b0"] = dict(w=conv_w(keys[0], 1, 1, in_ch, out_ch),
                   g=jnp.ones((out_ch,)), b=jnp.zeros((out_ch,)))
    p["b1_0"] = dict(w=conv_w(keys[1], 1, 1, in_ch, out_ch),
                     g=jnp.ones((out_ch,)), b=jnp.zeros((out_ch,)))
    p["b1_1"] = dict(w=conv_w(keys[2], 1, 3, out_ch, out_ch),
                     g=jnp.ones((out_ch,)), b=jnp.zeros((out_ch,)))
    p["b1_2"] = dict(w=conv_w(keys[3], 3, 1, out_ch, out_ch),
                     g=jnp.ones((out_ch,)), b=jnp.zeros((out_ch,)))
    p["b1_3"] = dict(w=conv_w(keys[4], 3, 3, out_ch, out_ch),
                     g=jnp.ones((out_ch,)), b=jnp.zeros((out_ch,)))
    p["cat"] = dict(w=conv_w(keys[5], 3, 3, 2 * out_ch, out_ch),
                    g=jnp.ones((out_ch,)), b=jnp.zeros((out_ch,)))
    p["res"] = dict(w=conv_w(keys[6], 1, 1, in_ch, out_ch),
                    g=jnp.ones((out_ch,)), b=jnp.zeros((out_ch,)))
    return p


# ----------------------------------------------------------------------------
# Pure-JAX reference (correctness check only)
# ----------------------------------------------------------------------------
def _ref_conv_gn(x, w, gamma, beta, pad, dil, groups=8, eps=1e-5):
    y = lax.conv_general_dilated(
        x, w, window_strides=(1, 1),
        padding=[(pad[0], pad[0]), (pad[1], pad[1])],
        rhs_dilation=(dil, dil),
        dimension_numbers=("NCHW", "HWIO", "NCHW"))
    n, c, h, wd = y.shape
    yr = y.reshape(n, groups, c // groups, h, wd)
    mean = yr.mean(axis=(2, 3, 4), keepdims=True)
    var = ((yr - mean) ** 2).mean(axis=(2, 3, 4), keepdims=True)
    yn = ((yr - mean) * lax.rsqrt(var + eps)).reshape(n, c, h, wd)
    return yn * gamma[None, :, None, None] + beta[None, :, None, None]


def _ref_forward(x, p):
    x0 = _ref_conv_gn(x, p["b0"]["w"], p["b0"]["g"], p["b0"]["b"], (0, 0), 1)
    t = _ref_conv_gn(x, p["b1_0"]["w"], p["b1_0"]["g"], p["b1_0"]["b"], (0, 0), 1)
    t = _ref_conv_gn(t, p["b1_1"]["w"], p["b1_1"]["g"], p["b1_1"]["b"], (0, 1), 1)
    t = _ref_conv_gn(t, p["b1_2"]["w"], p["b1_2"]["g"], p["b1_2"]["b"], (1, 0), 1)
    x1 = _ref_conv_gn(t, p["b1_3"]["w"], p["b1_3"]["g"], p["b1_3"]["b"], (3, 3), 3)
    x_cat = _ref_conv_gn(jnp.concatenate([x0, x1], axis=1),
                         p["cat"]["w"], p["cat"]["g"], p["cat"]["b"], (1, 1), 1)
    x_res = _ref_conv_gn(x, p["res"]["w"], p["res"]["g"], p["res"]["b"], (0, 0), 1)
    return jnp.maximum(x_cat + x_res, 0.0)


# ----------------------------------------------------------------------------
if __name__ == "__main__":
    key = jax.random.PRNGKey(0)
    k_x, k_p, k_x2 = jax.random.split(key, 3)

    # GroupNorm(8, out_channel) => out_channel must be a multiple of 8.
    N, IN_CH, OUT_CH, H, W = 2, 16, 16, 16, 16
    params = init_refine_params(k_p, IN_CH, OUT_CH)

    # Check 1: canonical small batch (N=2 -> 1 sample per grid step, 2 steps).
    x_nchw = jax.random.normal(k_x, (N, IN_CH, H, W), jnp.float32)
    out = jax.block_until_ready(refine_forward(x_nchw, params))
    ref = _ref_forward(x_nchw, params)
    assert out.shape == (N, OUT_CH, H, W)
    assert jnp.allclose(out, ref, rtol=1e-3, atol=1e-3), "mismatch vs JAX reference"

    # Check 2: exercises the lane-folded batched path (N=8 -> 4 samples/step, 2 steps).
    x_big = jax.random.normal(k_x2, (8, IN_CH, H, W), jnp.float32)
    out_big = jax.block_until_ready(refine_forward(x_big, params))
    ref_big = _ref_forward(x_big, params)
    assert out_big.shape == (8, OUT_CH, H, W)
    assert jnp.allclose(out_big, ref_big, rtol=1e-3, atol=1e-3), "batched mismatch"

    print("KERNEL_OK")
</pallas_src>

<mosaic_0001>
module attributes {stable_mosaic.version = 11 : i64} {
  func.func @_refine_kernel(%arg0: i32, %arg1: memref<16x256xf32, #tpu.memory_space<vmem>>, %arg2: memref<48x16xf32, #tpu.memory_space<vmem>>, %arg3: memref<16x48xf32, #tpu.memory_space<vmem>>, %arg4: memref<16x48xf32, #tpu.memory_space<vmem>>, %arg5: memref<16x144xf32, #tpu.memory_space<vmem>>, %arg6: memref<16x288xf32, #tpu.memory_space<vmem>>, %arg7: memref<16x7xf32, #tpu.memory_space<vmem>>, %arg8: memref<16x7xf32, #tpu.memory_space<vmem>>, %arg9: memref<16x256xf32, #tpu.memory_space<vmem>>, %arg10: memref<256x1xf32, #tpu.memory_space<vmem>>, %arg11: memref<1x256xf32, #tpu.memory_space<vmem>>, %arg12: memref<32x32xf32, #tpu.memory_space<vmem>>, %arg13: memref<16x256xf32, #tpu.memory_space<vmem>>) attributes {dimension_semantics = [#tpu.dimension_semantics<parallel>], iteration_bounds = array<i64: 2>, scalar_prefetch = 0 : i64, scratch_operands = 0 : i64, tpu.core_type = #tpu.core_type<tc>, window_params = [{transform_indices = @transform_0, window_bounds = array<i64: 16, 256>}, {pipeline_mode = #tpu.pipeline_mode<synchronous>, transform_indices = @transform_1, window_bounds = array<i64: 48, 16>}, {pipeline_mode = #tpu.pipeline_mode<synchronous>, transform_indices = @transform_2, window_bounds = array<i64: 16, 48>}, {pipeline_mode = #tpu.pipeline_mode<synchronous>, transform_indices = @transform_3, window_bounds = array<i64: 16, 48>}, {pipeline_mode = #tpu.pipeline_mode<synchronous>, transform_indices = @transform_4, window_bounds = array<i64: 16, 144>}, {pipeline_mode = #tpu.pipeline_mode<synchronous>, transform_indices = @transform_5, window_bounds = array<i64: 16, 288>}, {pipeline_mode = #tpu.pipeline_mode<synchronous>, transform_indices = @transform_6, window_bounds = array<i64: 16, 7>}, {pipeline_mode = #tpu.pipeline_mode<synchronous>, transform_indices = @transform_7, window_bounds = array<i64: 16, 7>}, {pipeline_mode = #tpu.pipeline_mode<synchronous>, transform_indices = @transform_8, window_bounds = array<i64: 16, 256>}, {pipeline_mode = #tpu.pipeline_mode<synchronous>, transform_indices = @transform_9, window_bounds = array<i64: 256, 1>}, {pipeline_mode = #tpu.pipeline_mode<synchronous>, transform_indices = @transform_10, window_bounds = array<i64: 1, 256>}, {pipeline_mode = #tpu.pipeline_mode<synchronous>, transform_indices = @transform_11, window_bounds = array<i64: 32, 32>}, {transform_indices = @transform_12, window_bounds = array<i64: 16, 256>}]} {
    %c0 = arith.constant 0 : index
    %c0_0 = arith.constant 0 : index
    %0 = vector.load %arg1[%c0, %c0_0] : memref<16x256xf32, #tpu.memory_space<vmem>>, vector<16x256xf32>
    %c0_1 = arith.constant 0 : index
    %c0_2 = arith.constant 0 : index
    %1 = vector.load %arg2[%c0_1, %c0_2] : memref<48x16xf32, #tpu.memory_space<vmem>>, vector<48x16xf32>
    %cst = arith.constant dense<0.000000e+00> : vector<48x256xf32>
    %2 = tpu.matmul %1, %0, %cst {dimension_numbers = #tpu.dot_dimension_numbers<[1], [0], [0], [1], [0, 0, 1, 1], [], []>} : vector<48x16xf32>, vector<16x256xf32>, vector<48x256xf32> -> vector<48x256xf32>
    %3 = vector.extract_strided_slice %2 {offsets = [0, 0], sizes = [16, 256], strides = [1, 1]} : vector<48x256xf32> to vector<16x256xf32>
    %c0_3 = arith.constant 0 : index
    %c0_4 = arith.constant 0 : index
    %4 = vector.load %arg7[%c0_3, %c0_4] : memref<16x7xf32, #tpu.memory_space<vmem>>, vector<16x1xf32>
    %c0_5 = arith.constant 0 : index
    %c0_6 = arith.constant 0 : index
    %5 = vector.load %arg8[%c0_5, %c0_6] : memref<16x7xf32, #tpu.memory_space<vmem>>, vector<16x1xf32>
    %cst_7 = arith.constant dense<0.000000e+00> : vector<16xf32>
    %6 = vector.multi_reduction <add>, %3, %cst_7 [1] : vector<16x256xf32> to vector<16xf32>
    %7 = vector.shape_cast %6 : vector<16xf32> to vector<16x1xf32>
    %8 = arith.mulf %3, %3 : vector<16x256xf32>
    %cst_8 = arith.constant dense<0.000000e+00> : vector<16xf32>
    %9 = vector.multi_reduction <add>, %8, %cst_8 [1] : vector<16x256xf32> to vector<16xf32>
    %10 = vector.shape_cast %9 : vector<16xf32> to vector<16x1xf32>
    %11 = tpu.concatenate %7, %10 in 0 : vector<16x1xf32>, vector<16x1xf32> -> vector<32x1xf32>
    %c0_9 = arith.constant 0 : index
    %c0_10 = arith.constant 0 : index
    %12 = vector.load %arg12[%c0_9, %c0_10] : memref<32x32xf32, #tpu.memory_space<vmem>>, vector<32x32xf32>
    %cst_11 = arith.constant dense<0.000000e+00> : vector<32x1xf32>
    %13 = tpu.matmul %12, %11, %cst_11 {dimension_numbers = #tpu.dot_dimension_numbers<[1], [0], [0], [1], [0, 0, 1, 1], [], []>} : vector<32x32xf32>, vector<32x1xf32>, vector<32x1xf32> -> vector<32x1xf32>
    %cst_12 = arith.constant 0.001953125 : f32
    %14 = vector.broadcast %cst_12 : f32 to vector<32x1xf32>
    %15 = arith.mulf %13, %14 : vector<32x1xf32>
    %16 = vector.extract_strided_slice %15 {offsets = [0, 0], sizes = [16, 1], strides = [1, 1]} : vector<32x1xf32> to vector<16x1xf32>
    %17 = vector.extract_strided_slice %15 {offsets = [16, 0], sizes = [16, 1], strides = [1, 1]} : vector<32x1xf32> to vector<16x1xf32>
    %18 = arith.mulf %16, %16 : vector<16x1xf32>
    %19 = arith.subf %17, %18 : vector<16x1xf32>
    %cst_13 = arith.constant 0.000000e+00 : f32
    %20 = vector.broadcast %cst_13 : f32 to vector<16x1xf32>
    %21 = arith.maximumf %19, %20 : vector<16x1xf32>
    %cst_14 = arith.constant 9.99999974E-6 : f32
    %22 = vector.broadcast %cst_14 : f32 to vector<16x1xf32>
    %23 = arith.addf %21, %22 : vector<16x1xf32>
    %24 = math.rsqrt %23 : vector<16x1xf32>
    %25 = arith.mulf %4, %24 : vector<16x1xf32>
    %26 = arith.mulf %16, %25 : vector<16x1xf32>
    %27 = arith.subf %5, %26 : vector<16x1xf32>
    %28 = vector.broadcast %25 : vector<16x1xf32> to vector<16x256xf32>
    %29 = arith.mulf %3, %28 : vector<16x256xf32>
    %30 = vector.broadcast %27 : vector<16x1xf32> to vector<16x256xf32>
    %31 = arith.addf %29, %30 : vector<16x256xf32>
    %32 = vector.extract_strided_slice %2 {offsets = [16, 0], sizes = [16, 256], strides = [1, 1]} : vector<48x256xf32> to vector<16x256xf32>
    %c0_15 = arith.constant 0 : index
    %c1 = arith.constant 1 : index
    %33 = vector.load %arg7[%c0_15, %c1] : memref<16x7xf32, #tpu.memory_space<vmem>>, vector<16x1xf32>
    %c0_16 = arith.constant 0 : index
    %c1_17 = arith.constant 1 : index
    %34 = vector.load %arg8[%c0_16, %c1_17] : memref<16x7xf32, #tpu.memory_space<vmem>>, vector<16x1xf32>
    %cst_18 = arith.constant dense<0.000000e+00> : vector<16xf32>
    %35 = vector.multi_reduction <add>, %32, %cst_18 [1] : vector<16x256xf32> to vector<16xf32>
    %36 = vector.shape_cast %35 : vector<16xf32> to vector<16x1xf32>
    %37 = arith.mulf %32, %32 : vector<16x256xf32>
    %cst_19 = arith.constant dense<0.000000e+00> : vector<16xf32>
    %38 = vector.multi_reduction <add>, %37, %cst_19 [1] : vector<16x256xf32> to vector<16xf32>
    %39 = vector.shape_cast %38 : vector<16xf32> to vector<16x1xf32>
    %40 = tpu.concatenate %36, %39 in 0 : vector<16x1xf32>, vector<16x1xf32> -> vector<32x1xf32>
    %c0_20 = arith.constant 0 : index
    %c0_21 = arith.constant 0 : index
    %41 = vector.load %arg12[%c0_20, %c0_21] : memref<32x32xf32, #tpu.memory_space<vmem>>, vector<32x32xf32>
    %cst_22 = arith.constant dense<0.000000e+00> : vector<32x1xf32>
    %42 = tpu.matmul %41, %40, %cst_22 {dimension_numbers = #tpu.dot_dimension_numbers<[1], [0], [0], [1], [0, 0, 1, 1], [], []>} : vector<32x32xf32>, vector<32x1xf32>, vector<32x1xf32> -> vector<32x1xf32>
    %cst_23 = arith.constant 0.001953125 : f32
    %43 = vector.broadcast %cst_23 : f32 to vector<32x1xf32>
    %44 = arith.mulf %42, %43 : vector<32x1xf32>
    %45 = vector.extract_strided_slice %44 {offsets = [0, 0], sizes = [16, 1], strides = [1, 1]} : vector<32x1xf32> to vector<16x1xf32>
    %46 = vector.extract_strided_slice %44 {offsets = [16, 0], sizes = [16, 1], strides = [1, 1]} : vector<32x1xf32> to vector<16x1xf32>
    %47 = arith.mulf %45, %45 : vector<16x1xf32>
    %48 = arith.subf %46, %47 : vector<16x1xf32>
    %cst_24 = arith.constant 0.000000e+00 : f32
    %49 = vector.broadcast %cst_24 : f32 to vector<16x1xf32>
    %50 = arith.maximumf %48, %49 : vector<16x1xf32>
    %cst_25 = arith.constant 9.99999974E-6 : f32
    %51 = vector.broadcast %cst_25 : f32 to vector<16x1xf32>
    %52 = arith.addf %50, %51 : vector<16x1xf32>
    %53 = math.rsqrt %52 : vector<16x1xf32>
    %54 = arith.mulf %33, %53 : vector<16x1xf32>
    %55 = arith.mulf %45, %54 : vector<16x1xf32>
    %56 = arith.subf %34, %55 : vector<16x1xf32>
    %57 = vector.broadcast %54 : vector<16x1xf32> to vector<16x256xf32>
    %58 = arith.mulf %32, %57 : vector<16x256xf32>
    %59 = vector.broadcast %56 : vector<16x1xf32> to vector<16x256xf32>
    %60 = arith.addf %58, %59 : vector<16x256xf32>
    %61 = vector.extract_strided_slice %2 {offsets = [32, 0], sizes = [16, 256], strides = [1, 1]} : vector<48x256xf32> to vector<16x256xf32>
    %c0_26 = arith.constant 0 : index
    %c6 = arith.constant 6 : index
    %62 = vector.load %arg7[%c0_26, %c6] : memref<16x7xf32, #tpu.memory_space<vmem>>, vector<16x1xf32>
    %c0_27 = arith.constant 0 : index
    %c6_28 = arith.constant 6 : index
    %63 = vector.load %arg8[%c0_27, %c6_28] : memref<16x7xf32, #tpu.memory_space<vmem>>, vector<16x1xf32>
    %cst_29 = arith.constant dense<0.000000e+00> : vector<16xf32>
    %64 = vector.multi_reduction <add>, %61, %cst_29 [1] : vector<16x256xf32> to vector<16xf32>
    %65 = vector.shape_cast %64 : vector<16xf32> to vector<16x1xf32>
    %66 = arith.mulf %61, %61 : vector<16x256xf32>
    %cst_30 = arith.constant dense<0.000000e+00> : vector<16xf32>
    %67 = vector.multi_reduction <add>, %66, %cst_30 [1] : vector<16x256xf32> to vector<16xf32>
    %68 = vector.shape_cast %67 : vector<16xf32> to vector<16x1xf32>
    %69 = tpu.concatenate %65, %68 in 0 : vector<16x1xf32>, vector<16x1xf32> -> vector<32x1xf32>
    %c0_31 = arith.constant 0 : index
    %c0_32 = arith.constant 0 : index
    %70 = vector.load %arg12[%c0_31, %c0_32] : memref<32x32xf32, #tpu.memory_space<vmem>>, vector<32x32xf32>
    %cst_33 = arith.constant dense<0.000000e+00> : vector<32x1xf32>
    %71 = tpu.matmul %70, %69, %cst_33 {dimension_numbers = #tpu.dot_dimension_numbers<[1], [0], [0], [1], [0, 0, 1, 1], [], []>} : vector<32x32xf32>, vector<32x1xf32>, vector<32x1xf32> -> vector<32x1xf32>
    %cst_34 = arith.constant 0.001953125 : f32
    %72 = vector.broadcast %cst_34 : f32 to vector<32x1xf32>
    %73 = arith.mulf %71, %72 : vector<32x1xf32>
    %74 = vector.extract_strided_slice %73 {offsets = [0, 0], sizes = [16, 1], strides = [1, 1]} : vector<32x1xf32> to vector<16x1xf32>
    %75 = vector.extract_strided_slice %73 {offsets = [16, 0], sizes = [16, 1], strides = [1, 1]} : vector<32x1xf32> to vector<16x1xf32>
    %76 = arith.mulf %74, %74 : vector<16x1xf32>
    %77 = arith.subf %75, %76 : vector<16x1xf32>
    %cst_35 = arith.constant 0.000000e+00 : f32
    %78 = vector.broadcast %cst_35 : f32 to vector<16x1xf32>
    %79 = arith.maximumf %77, %78 : vector<16x1xf32>
    %cst_36 = arith.constant 9.99999974E-6 : f32
    %80 = vector.broadcast %cst_36 : f32 to vector<16x1xf32>
    %81 = arith.addf %79, %80 : vector<16x1xf32>
    %82 = math.rsqrt %81 : vector<16x1xf32>
    %83 = arith.mulf %62, %82 : vector<16x1xf32>
    %84 = arith.mulf %74, %83 : vector<16x1xf32>
    %85 = arith.subf %63, %84 : vector<16x1xf32>
    %86 = vector.broadcast %83 : vector<16x1xf32> to vector<16x256xf32>
    %87 = arith.mulf %61, %86 : vector<16x256xf32>
    %88 = vector.broadcast %85 : vector<16x1xf32> to vector<16x256xf32>
    %89 = arith.addf %87, %88 : vector<16x256xf32>
    %c1_i32 = arith.constant 1 : i32
    %90 = tpu.dynamic_rotate %60 by %c1_i32 dim 1 : vector<16x256xf32>, i32 -> vector<16x256xf32>
    %c0_37 = arith.constant 0 : index
    %c0_38 = arith.constant 0 : index
    %91 = vector.load %arg9[%c0_37, %c0_38] : memref<16x256xf32, #tpu.memory_space<vmem>>, vector<1x256xf32>
    %92 = vector.broadcast %91 : vector<1x256xf32> to vector<16x256xf32>
    %93 = arith.mulf %90, %92 : vector<16x256xf32>
    %c255_i32 = arith.constant 255 : i32
    %94 = tpu.dynamic_rotate %60 by %c255_i32 dim 1 : vector<16x256xf32>, i32 -> vector<16x256xf32>
    %c1_39 = arith.constant 1 : index
    %c0_40 = arith.constant 0 : index
    %95 = vector.load %arg9[%c1_39, %c0_40] : memref<16x256xf32, #tpu.memory_space<vmem>>, vector<1x256xf32>
    %96 = vector.broadcast %95 : vector<1x256xf32> to vector<16x256xf32>
    %97 = arith.mulf %94, %96 : vector<16x256xf32>
    %98 = tpu.concatenate %93, %60, %97 in 0 : vector<16x256xf32>, vector<16x256xf32>, vector<16x256xf32> -> vector<48x256xf32>
    %c0_41 = arith.constant 0 : index
    %c0_42 = arith.constant 0 : index
    %99 = vector.load %arg3[%c0_41, %c0_42] : memref<16x48xf32, #tpu.memory_space<vmem>>, vector<16x48xf32>
    %cst_43 = arith.constant dense<0.000000e+00> : vector<16x256xf32>
    %100 = tpu.matmul %99, %98, %cst_43 {dimension_numbers = #tpu.dot_dimension_numbers<[1], [0], [0], [1], [0, 0, 1, 1], [], []>} : vector<16x48xf32>, vector<48x256xf32>, vector<16x256xf32> -> vector<16x256xf32>
    %c0_44 = arith.constant 0 : index
    %c2 = arith.constant 2 : index
    %101 = vector.load %arg7[%c0_44, %c2] : memref<16x7xf32, #tpu.memory_space<vmem>>, vector<16x1xf32>
    %c0_45 = arith.constant 0 : index
    %c2_46 = arith.constant 2 : index
    %102 = vector.load %arg8[%c0_45, %c2_46] : memref<16x7xf32, #tpu.memory_space<vmem>>, vector<16x1xf32>
    %cst_47 = arith.constant dense<0.000000e+00> : vector<16xf32>
    %103 = vector.multi_reduction <add>, %100, %cst_47 [1] : vector<16x256xf32> to vector<16xf32>
    %104 = vector.shape_cast %103 : vector<16xf32> to vector<16x1xf32>
    %105 = arith.mulf %100, %100 : vector<16x256xf32>
    %cst_48 = arith.constant dense<0.000000e+00> : vector<16xf32>
    %106 = vector.multi_reduction <add>, %105, %cst_48 [1] : vector<16x256xf32> to vector<16xf32>
    %107 = vector.shape_cast %106 : vector<16xf32> to vector<16x1xf32>
    %108 = tpu.concatenate %104, %107 in 0 : vector<16x1xf32>, vector<16x1xf32> -> vector<32x1xf32>
    %c0_49 = arith.constant 0 : index
    %c0_50 = arith.constant 0 : index
    %109 = vector.load %arg12[%c0_49, %c0_50] : memref<32x32xf32, #tpu.memory_space<vmem>>, vector<32x32xf32>
    %cst_51 = arith.constant dense<0.000000e+00> : vector<32x1xf32>
    %110 = tpu.matmul %109, %108, %cst_51 {dimension_numbers = #tpu.dot_dimension_numbers<[1], [0], [0], [1], [0, 0, 1, 1], [], []>} : vector<32x32xf32>, vector<32x1xf32>, vector<32x1xf32> -> vector<32x1xf32>
    %cst_52 = arith.constant 0.001953125 : f32
    %111 = vector.broadcast %cst_52 : f32 to vector<32x1xf32>
    %112 = arith.mulf %110, %111 : vector<32x1xf32>
    %113 = vector.extract_strided_slice %112 {offsets = [0, 0], sizes = [16, 1], strides = [1, 1]} : vector<32x1xf32> to vector<16x1xf32>
    %114 = vector.extract_strided_slice %112 {offsets = [16, 0], sizes = [16, 1], strides = [1, 1]} : vector<32x1xf32> to vector<16x1xf32>
    %115 = arith.mulf %113, %113 : vector<16x1xf32>
    %116 = arith.subf %114, %115 : vector<16x1xf32>
    %cst_53 = arith.constant 0.000000e+00 : f32
    %117 = vector.broadcast %cst_53 : f32 to vector<16x1xf32>
    %118 = arith.maximumf %116, %117 : vector<16x1xf32>
    %cst_54 = arith.constant 9.99999974E-6 : f32
    %119 = vector.broadcast %cst_54 : f32 to vector<16x1xf32>
    %120 = arith.addf %118, %119 : vector<16x1xf32>
    %121 = math.rsqrt %120 : vector<16x1xf32>
    %122 = arith.mulf %101, %121 : vector<16x1xf32>
    %123 = arith.mulf %113, %122 : vector<16x1xf32>
    %124 = arith.subf %102, %123 : vector<16x1xf32>
    %125 = vector.broadcast %122 : vector<16x1xf32> to vector<16x256xf32>
    %126 = arith.mulf %100, %125 : vector<16x256xf32>
    %127 = vector.broadcast %124 : vector<16x1xf32> to vector<16x256xf32>
    %128 = arith.addf %126, %127 : vector<16x256xf32>
    %c16_i32 = arith.constant 16 : i32
    %129 = tpu.dynamic_rotate %128 by %c16_i32 dim 1 : vector<16x256xf32>, i32 -> vector<16x256xf32>
    %c2_55 = arith.constant 2 : index
    %c0_56 = arith.constant 0 : index
    %130 = vector.load %arg9[%c2_55, %c0_56] : memref<16x256xf32, #tpu.memory_space<vmem>>, vector<1x256xf32>
    %131 = vector.broadcast %130 : vector<1x256xf32> to vector<16x256xf32>
    %132 = arith.mulf %129, %131 : vector<16x256xf32>
    %c240_i32 = arith.constant 240 : i32
    %133 = tpu.dynamic_rotate %128 by %c240_i32 dim 1 : vector<16x256xf32>, i32 -> vector<16x256xf32>
    %c3 = arith.constant 3 : index
    %c0_57 = arith.constant 0 : index
    %134 = vector.load %arg9[%c3, %c0_57] : memref<16x256xf32, #tpu.memory_space<vmem>>, vector<1x256xf32>
    %135 = vector.broadcast %134 : vector<1x256xf32> to vector<16x256xf32>
    %136 = arith.mulf %133, %135 : vector<16x256xf32>
    %137 = tpu.concatenate %132, %128, %136 in 0 : vector<16x256xf32>, vector<16x256xf32>, vector<16x256xf32> -> vector<48x256xf32>
    %c0_58 = arith.constant 0 : index
    %c0_59 = arith.constant 0 : index
    %138 = vector.load %arg4[%c0_58, %c0_59] : memref<16x48xf32, #tpu.memory_space<vmem>>, vector<16x48xf32>
    %cst_60 = arith.constant dense<0.000000e+00> : vector<16x256xf32>
    %139 = tpu.matmul %138, %137, %cst_60 {dimension_numbers = #tpu.dot_dimension_numbers<[1], [0], [0], [1], [0, 0, 1, 1], [], []>} : vector<16x48xf32>, vector<48x256xf32>, vector<16x256xf32> -> vector<16x256xf32>
    %c0_61 = arith.constant 0 : index
    %c3_62 = arith.constant 3 : index
    %140 = vector.load %arg7[%c0_61, %c3_62] : memref<16x7xf32, #tpu.memory_space<vmem>>, vector<16x1xf32>
    %c0_63 = arith.constant 0 : index
    %c3_64 = arith.constant 3 : index
    %141 = vector.load %arg8[%c0_63, %c3_64] : memref<16x7xf32, #tpu.memory_space<vmem>>, vector<16x1xf32>
    %cst_65 = arith.constant dense<0.000000e+00> : vector<16xf32>
    %142 = vector.multi_reduction <add>, %139, %cst_65 [1] : vector<16x256xf32> to vector<16xf32>
    %143 = vector.shape_cast %142 : vector<16xf32> to vector<16x1xf32>
    %144 = arith.mulf %139, %139 : vector<16x256xf32>
    %cst_66 = arith.constant dense<0.000000e+00> : vector<16xf32>
    %145 = vector.multi_reduction <add>, %144, %cst_66 [1] : vector<16x256xf32> to vector<16xf32>
    %146 = vector.shape_cast %145 : vector<16xf32> to vector<16x1xf32>
    %147 = tpu.concatenate %143, %146 in 0 : vector<16x1xf32>, vector<16x1xf32> -> vector<32x1xf32>
    %c0_67 = arith.constant 0 : index
    %c0_68 = arith.constant 0 : index
    %148 = vector.load %arg12[%c0_67, %c0_68] : memref<32x32xf32, #tpu.memory_space<vmem>>, vector<32x32xf32>
    %cst_69 = arith.constant dense<0.000000e+00> : vector<32x1xf32>
    %149 = tpu.matmul %148, %147, %cst_69 {dimension_numbers = #tpu.dot_dimension_numbers<[1], [0], [0], [1], [0, 0, 1, 1], [], []>} : vector<32x32xf32>, vector<32x1xf32>, vector<32x1xf32> -> vector<32x1xf32>
    %cst_70 = arith.constant 0.001953125 : f32
    %150 = vector.broadcast %cst_70 : f32 to vector<32x1xf32>
    %151 = arith.mulf %149, %150 : vector<32x1xf32>
    %152 = vector.extract_strided_slice %151 {offsets = [0, 0], sizes = [16, 1], strides = [1, 1]} : vector<32x1xf32> to vector<16x1xf32>
    %153 = vector.extract_strided_slice %151 {offsets = [16, 0], sizes = [16, 1], strides = [1, 1]} : vector<32x1xf32> to vector<16x1xf32>
    %154 = arith.mulf %152, %152 : vector<16x1xf32>
    %155 = arith.subf %153, %154 : vector<16x1xf32>
    %cst_71 = arith.constant 0.000000e+00 : f32
    %156 = vector.broadcast %cst_71 : f32 to vector<16x1xf32>
    %157 = arith.maximumf %155, %156 : vector<16x1xf32>
    %cst_72 = arith.constant 9.99999974E-6 : f32
    %158 = vector.broadcast %cst_72 : f32 to vector<16x1xf32>
    %159 = arith.addf %157, %158 : vector<16x1xf32>
    %160 = math.rsqrt %159 : vector<16x1xf32>
    %161 = arith.mulf %140, %160 : vector<16x1xf32>
    %162 = arith.mulf %152, %161 : vector<16x1xf32>
    %163 = arith.subf %141, %162 : vector<16x1xf32>
    %164 = vector.broadcast %161 : vector<16x1xf32> to vector<16x256xf32>
    %165 = arith.mulf %139, %164 : vector<16x256xf32>
    %166 = vector.broadcast %163 : vector<16x1xf32> to vector<16x256xf32>
    %167 = arith.addf %165, %166 : vector<16x256xf32>
    %c51_i32 = arith.constant 51 : i32
    %168 = tpu.dynamic_rotate %167 by %c51_i32 dim 1 : vector<16x256xf32>, i32 -> vector<16x256xf32>
    %c4 = arith.constant 4 : index
    %c0_73 = arith.constant 0 : index
    %169 = vector.load %arg9[%c4, %c0_73] : memref<16x256xf32, #tpu.memory_space<vmem>>, vector<1x256xf32>
    %170 = vector.broadcast %169 : vector<1x256xf32> to vector<16x256xf32>
    %171 = arith.mulf %168, %170 : vector<16x256xf32>
    %c48_i32 = arith.constant 48 : i32
    %172 = tpu.dynamic_rotate %167 by %c48_i32 dim 1 : vector<16x256xf32>, i32 -> vector<16x256xf32>
    %c5 = arith.constant 5 : index
    %c0_74 = arith.constant 0 : index
    %173 = vector.load %arg9[%c5, %c0_74] : memref<16x256xf32, #tpu.memory_space<vmem>>, vector<1x256xf32>
    %174 = vector.broadcast %173 : vector<1x256xf32> to vector<16x256xf32>
    %175 = arith.mulf %172, %174 : vector<16x256xf32>
    %c45_i32 = arith.constant 45 : i32
    %176 = tpu.dynamic_rotate %167 by %c45_i32 dim 1 : vector<16x256xf32>, i32 -> vector<16x256xf32>
    %c6_75 = arith.constant 6 : index
    %c0_76 = arith.constant 0 : index
    %177 = vector.load %arg9[%c6_75, %c0_76] : memref<16x256xf32, #tpu.memory_space<vmem>>, vector<1x256xf32>
    %178 = vector.broadcast %177 : vector<1x256xf32> to vector<16x256xf32>
    %179 = arith.mulf %176, %178 : vector<16x256xf32>
    %c3_i32 = arith.constant 3 : i32
    %180 = tpu.dynamic_rotate %167 by %c3_i32 dim 1 : vector<16x256xf32>, i32 -> vector<16x256xf32>
    %c7 = arith.constant 7 : index
    %c0_77 = arith.constant 0 : index
    %181 = vector.load %arg9[%c7, %c0_77] : memref<16x256xf32, #tpu.memory_space<vmem>>, vector<1x256xf32>
    %182 = vector.broadcast %181 : vector<1x256xf32> to vector<16x256xf32>
    %183 = arith.mulf %180, %182 : vector<16x256xf32>
    %c253_i32 = arith.constant 253 : i32
    %184 = tpu.dynamic_rotate %167 by %c253_i32 dim 1 : vector<16x256xf32>, i32 -> vector<16x256xf32>
    %c8 = arith.constant 8 : index
    %c0_78 = arith.constant 0 : index
    %185 = vector.load %arg9[%c8, %c0_78] : memref<16x256xf32, #tpu.memory_space<vmem>>, vector<1x256xf32>
    %186 = vector.broadcast %185 : vector<1x256xf32> to vector<16x256xf32>
    %187 = arith.mulf %184, %186 : vector<16x256xf32>
    %c211_i32 = arith.constant 211 : i32
    %188 = tpu.dynamic_rotate %167 by %c211_i32 dim 1 : vector<16x256xf32>, i32 -> vector<16x256xf32>
    %c9 = arith.constant 9 : index
    %c0_79 = arith.constant 0 : index
    %189 = vector.load %arg9[%c9, %c0_79] : memref<16x256xf32, #tpu.memory_space<vmem>>, vector<1x256xf32>
    %190 = vector.broadcast %189 : vector<1x256xf32> to vector<16x256xf32>
    %191 = arith.mulf %188, %190 : vector<16x256xf32>
    %c208_i32 = arith.constant 208 : i32
    %192 = tpu.dynamic_rotate %167 by %c208_i32 dim 1 : vector<16x256xf32>, i32 -> vector<16x256xf32>
    %c10 = arith.constant 10 : index
    %c0_80 = arith.constant 0 : index
    %193 = vector.load %arg9[%c10, %c0_80] : memref<16x256xf32, #tpu.memory_space<vmem>>, vector<1x256xf32>
    %194 = vector.broadcast %193 : vector<1x256xf32> to vector<16x256xf32>
    %195 = arith.mulf %192, %194 : vector<16x256xf32>
    %c205_i32 = arith.constant 205 : i32
    %196 = tpu.dynamic_rotate %167 by %c205_i32 dim 1 : vector<16x256xf32>, i32 -> vector<16x256xf32>
    %c11 = arith.constant 11 : index
    %c0_81 = arith.constant 0 : index
    %197 = vector.load %arg9[%c11, %c0_81] : memref<16x256xf32, #tpu.memory_space<vmem>>, vector<1x256xf32>
    %198 = vector.broadcast %197 : vector<1x256xf32> to vector<16x256xf32>
    %199 = arith.mulf %196, %198 : vector<16x256xf32>
    %200 = tpu.concatenate %171, %175, %179, %183, %167, %187, %191, %195, %199 in 0 : vector<16x256xf32>, vector<16x256xf32>, vector<16x256xf32>, vector<16x256xf32>, vector<16x256xf32>, vector<16x256xf32>, vector<16x256xf32>, vector<16x256xf32>, vector<16x256xf32> -> vector<144x256xf32>
    %c0_82 = arith.constant 0 : index
    %c0_83 = arith.constant 0 : index
    %201 = vector.load %arg5[%c0_82, %c0_83] : memref<16x144xf32, #tpu.memory_space<vmem>>, vector<16x144xf32>
    %cst_84 = arith.constant dense<0.000000e+00> : vector<16x256xf32>
    %202 = tpu.matmul %201, %200, %cst_84 {dimension_numbers = #tpu.dot_dimension_numbers<[1], [0], [0], [1], [0, 0, 1, 1], [], []>} : vector<16x144xf32>, vector<144x256xf32>, vector<16x256xf32> -> vector<16x256xf32>
    %c0_85 = arith.constant 0 : index
    %c4_86 = arith.constant 4 : index
    %203 = vector.load %arg7[%c0_85, %c4_86] : memref<16x7xf32, #tpu.memory_space<vmem>>, vector<16x1xf32>
    %c0_87 = arith.constant 0 : index
    %c4_88 = arith.constant 4 : index
    %204 = vector.load %arg8[%c0_87, %c4_88] : memref<16x7xf32, #tpu.memory_space<vmem>>, vector<16x1xf32>
    %cst_89 = arith.constant dense<0.000000e+00> : vector<16xf32>
    %205 = vector.multi_reduction <add>, %202, %cst_89 [1] : vector<16x256xf32> to vector<16xf32>
    %206 = vector.shape_cast %205 : vector<16xf32> to vector<16x1xf32>
    %207 = arith.mulf %202, %202 : vector<16x256xf32>
    %cst_90 = arith.constant dense<0.000000e+00> : vector<16xf32>
    %208 = vector.multi_reduction <add>, %207, %cst_90 [1] : vector<16x256xf32> to vector<16xf32>
    %209 = vector.shape_cast %208 : vector<16xf32> to vector<16x1xf32>
    %210 = tpu.concatenate %206, %209 in 0 : vector<16x1xf32>, vector<16x1xf32> -> vector<32x1xf32>
    %c0_91 = arith.constant 0 : index
    %c0_92 = arith.constant 0 : index
    %211 = vector.load %arg12[%c0_91, %c0_92] : memref<32x32xf32, #tpu.memory_space<vmem>>, vector<32x32xf32>
    %cst_93 = arith.constant dense<0.000000e+00> : vector<32x1xf32>
    %212 = tpu.matmul %211, %210, %cst_93 {dimension_numbers = #tpu.dot_dimension_numbers<[1], [0], [0], [1], [0, 0, 1, 1], [], []>} : vector<32x32xf32>, vector<32x1xf32>, vector<32x1xf32> -> vector<32x1xf32>
    %cst_94 = arith.constant 0.001953125 : f32
    %213 = vector.broadcast %cst_94 : f32 to vector<32x1xf32>
    %214 = arith.mulf %212, %213 : vector<32x1xf32>
    %215 = vector.extract_strided_slice %214 {offsets = [0, 0], sizes = [16, 1], strides = [1, 1]} : vector<32x1xf32> to vector<16x1xf32>
    %216 = vector.extract_strided_slice %214 {offsets = [16, 0], sizes = [16, 1], strides = [1, 1]} : vector<32x1xf32> to vector<16x1xf32>
    %217 = arith.mulf %215, %215 : vector<16x1xf32>
    %218 = arith.subf %216, %217 : vector<16x1xf32>
    %cst_95 = arith.constant 0.000000e+00 : f32
    %219 = vector.broadcast %cst_95 : f32 to vector<16x1xf32>
    %220 = arith.maximumf %218, %219 : vector<16x1xf32>
    %cst_96 = arith.constant 9.99999974E-6 : f32
    %221 = vector.broadcast %cst_96 : f32 to vector<16x1xf32>
    %222 = arith.addf %220, %221 : vector<16x1xf32>
    %223 = math.rsqrt %222 : vector<16x1xf32>
    %224 = arith.mulf %203, %223 : vector<16x1xf32>
    %225 = arith.mulf %215, %224 : vector<16x1xf32>
    %226 = arith.subf %204, %225 : vector<16x1xf32>
    %227 = vector.broadcast %224 : vector<16x1xf32> to vector<16x256xf32>
    %228 = arith.mulf %202, %227 : vector<16x256xf32>
    %229 = vector.broadcast %226 : vector<16x1xf32> to vector<16x256xf32>
    %230 = arith.addf %228, %229 : vector<16x256xf32>
    %c17_i32 = arith.constant 17 : i32
    %231 = tpu.dynamic_rotate %31 by %c17_i32 dim 1 : vector<16x256xf32>, i32 -> vector<16x256xf32>
    %c12 = arith.constant 12 : index
    %c0_97 = arith.constant 0 : index
    %232 = vector.load %arg9[%c12, %c0_97] : memref<16x256xf32, #tpu.memory_space<vmem>>, vector<1x256xf32>
    %233 = vector.broadcast %232 : vector<1x256xf32> to vector<16x256xf32>
    %234 = arith.mulf %231, %233 : vector<16x256xf32>
    %c17_i32_98 = arith.constant 17 : i32
    %235 = tpu.dynamic_rotate %230 by %c17_i32_98 dim 1 : vector<16x256xf32>, i32 -> vector<16x256xf32>
    %c12_99 = arith.constant 12 : index
    %c0_100 = arith.constant 0 : index
    %236 = vector.load %arg9[%c12_99, %c0_100] : memref<16x256xf32, #tpu.memory_space<vmem>>, vector<1x256xf32>
    %237 = vector.broadcast %236 : vector<1x256xf32> to vector<16x256xf32>
    %238 = arith.mulf %235, %237 : vector<16x256xf32>
    %c16_i32_101 = arith.constant 16 : i32
    %239 = tpu.dynamic_rotate %31 by %c16_i32_101 dim 1 : vector<16x256xf32>, i32 -> vector<16x256xf32>
    %c2_102 = arith.constant 2 : index
    %c0_103 = arith.constant 0 : index
    %240 = vector.load %arg9[%c2_102, %c0_103] : memref<16x256xf32, #tpu.memory_space<vmem>>, vector<1x256xf32>
    %241 = vector.broadcast %240 : vector<1x256xf32> to vector<16x256xf32>
    %242 = arith.mulf %239, %241 : vector<16x256xf32>
    %c16_i32_104 = arith.constant 16 : i32
    %243 = tpu.dynamic_rotate %230 by %c16_i32_104 dim 1 : vector<16x256xf32>, i32 -> vector<16x256xf32>
    %c2_105 = arith.constant 2 : index
    %c0_106 = arith.constant 0 : index
    %244 = vector.load %arg9[%c2_105, %c0_106] : memref<16x256xf32, #tpu.memory_space<vmem>>, vector<1x256xf32>
    %245 = vector.broadcast %244 : vector<1x256xf32> to vector<16x256xf32>
    %246 = arith.mulf %243, %245 : vector<16x256xf32>
    %c15_i32 = arith.constant 15 : i32
    %247 = tpu.dynamic_rotate %31 by %c15_i32 dim 1 : vector<16x256xf32>, i32 -> vector<16x256xf32>
    %c13 = arith.constant 13 : index
    %c0_107 = arith.constant 0 : index
    %248 = vector.load %arg9[%c13, %c0_107] : memref<16x256xf32, #tpu.memory_space<vmem>>, vector<1x256xf32>
    %249 = vector.broadcast %248 : vector<1x256xf32> to vector<16x256xf32>
    %250 = arith.mulf %247, %249 : vector<16x256xf32>
    %c15_i32_108 = arith.constant 15 : i32
    %251 = tpu.dynamic_rotate %230 by %c15_i32_108 dim 1 : vector<16x256xf32>, i32 -> vector<16x256xf32>
    %c13_109 = arith.constant 13 : index
    %c0_110 = arith.constant 0 : index
    %252 = vector.load %arg9[%c13_109, %c0_110] : memref<16x256xf32, #tpu.memory_space<vmem>>, vector<1x256xf32>
    %253 = vector.broadcast %252 : vector<1x256xf32> to vector<16x256xf32>
    %254 = arith.mulf %251, %253 : vector<16x256xf32>
    %c1_i32_111 = arith.constant 1 : i32
    %255 = tpu.dynamic_rotate %31 by %c1_i32_111 dim 1 : vector<16x256xf32>, i32 -> vector<16x256xf32>
    %c0_112 = arith.constant 0 : index
    %c0_113 = arith.constant 0 : index
    %256 = vector.load %arg9[%c0_112, %c0_113] : memref<16x256xf32, #tpu.memory_space<vmem>>, vector<1x256xf32>
    %257 = vector.broadcast %256 : vector<1x256xf32> to vector<16x256xf32>
    %258 = arith.mulf %255, %257 : vector<16x256xf32>
    %c1_i32_114 = arith.constant 1 : i32
    %259 = tpu.dynamic_rotate %230 by %c1_i32_114 dim 1 : vector<16x256xf32>, i32 -> vector<16x256xf32>
    %c0_115 = arith.constant 0 : index
    %c0_116 = arith.constant 0 : index
    %260 = vector.load %arg9[%c0_115, %c0_116] : memref<16x256xf32, #tpu.memory_space<vmem>>, vector<1x256xf32>
    %261 = vector.broadcast %260 : vector<1x256xf32> to vector<16x256xf32>
    %262 = arith.mulf %259, %261 : vector<16x256xf32>
    %c255_i32_117 = arith.constant 255 : i32
    %263 = tpu.dynamic_rotate %31 by %c255_i32_117 dim 1 : vector<16x256xf32>, i32 -> vector<16x256xf32>
    %c1_118 = arith.constant 1 : index
    %c0_119 = arith.constant 0 : index
    %264 = vector.load %arg9[%c1_118, %c0_119] : memref<16x256xf32, #tpu.memory_space<vmem>>, vector<1x256xf32>
    %265 = vector.broadcast %264 : vector<1x256xf32> to vector<16x256xf32>
    %266 = arith.mulf %263, %265 : vector<16x256xf32>
    %c255_i32_120 = arith.constant 255 : i32
    %267 = tpu.dynamic_rotate %230 by %c255_i32_120 dim 1 : vector<16x256xf32>, i32 -> vector<16x256xf32>
    %c1_121 = arith.constant 1 : index
    %c0_122 = arith.constant 0 : index
    %268 = vector.load %arg9[%c1_121, %c0_122] : memref<16x256xf32, #tpu.memory_space<vmem>>, vector<1x256xf32>
    %269 = vector.broadcast %268 : vector<1x256xf32> to vector<16x256xf32>
    %270 = arith.mulf %267, %269 : vector<16x256xf32>
    %c241_i32 = arith.constant 241 : i32
    %271 = tpu.dynamic_rotate %31 by %c241_i32 dim 1 : vector<16x256xf32>, i32 -> vector<16x256xf32>
    %c14 = arith.constant 14 : index
    %c0_123 = arith.constant 0 : index
    %272 = vector.load %arg9[%c14, %c0_123] : memref<16x256xf32, #tpu.memory_space<vmem>>, vector<1x256xf32>
    %273 = vector.broadcast %272 : vector<1x256xf32> to vector<16x256xf32>
    %274 = arith.mulf %271, %273 : vector<16x256xf32>
    %c241_i32_124 = arith.constant 241 : i32
    %275 = tpu.dynamic_rotate %230 by %c241_i32_124 dim 1 : vector<16x256xf32>, i32 -> vector<16x256xf32>
    %c14_125 = arith.constant 14 : index
    %c0_126 = arith.constant 0 : index
    %276 = vector.load %arg9[%c14_125, %c0_126] : memref<16x256xf32, #tpu.memory_space<vmem>>, vector<1x256xf32>
    %277 = vector.broadcast %276 : vector<1x256xf32> to vector<16x256xf32>
    %278 = arith.mulf %275, %277 : vector<16x256xf32>
    %c240_i32_127 = arith.constant 240 : i32
    %279 = tpu.dynamic_rotate %31 by %c240_i32_127 dim 1 : vector<16x256xf32>, i32 -> vector<16x256xf32>
    %c3_128 = arith.constant 3 : index
    %c0_129 = arith.constant 0 : index
    %280 = vector.load %arg9[%c3_128, %c0_129] : memref<16x256xf32, #tpu.memory_space<vmem>>, vector<1x256xf32>
    %281 = vector.broadcast %280 : vector<1x256xf32> to vector<16x256xf32>
    %282 = arith.mulf %279, %281 : vector<16x256xf32>
    %c240_i32_130 = arith.constant 240 : i32
    %283 = tpu.dynamic_rotate %230 by %c240_i32_130 dim 1 : vector<16x256xf32>, i32 -> vector<16x256xf32>
    %c3_131 = arith.constant 3 : index
    %c0_132 = arith.constant 0 : index
    %284 = vector.load %arg9[%c3_131, %c0_132] : memref<16x256xf32, #tpu.memory_space<vmem>>, vector<1x256xf32>
    %285 = vector.broadcast %284 : vector<1x256xf32> to vector<16x256xf32>
    %286 = arith.mulf %283, %285 : vector<16x256xf32>
    %c239_i32 = arith.constant 239 : i32
    %287 = tpu.dynamic_rotate %31 by %c239_i32 dim 1 : vector<16x256xf32>, i32 -> vector<16x256xf32>
    %c15 = arith.constant 15 : index
    %c0_133 = arith.constant 0 : index
    %288 = vector.load %arg9[%c15, %c0_133] : memref<16x256xf32, #tpu.memory_space<vmem>>, vector<1x256xf32>
    %289 = vector.broadcast %288 : vector<1x256xf32> to vector<16x256xf32>
    %290 = arith.mulf %287, %289 : vector<16x256xf32>
    %c239_i32_134 = arith.constant 239 : i32
    %291 = tpu.dynamic_rotate %230 by %c239_i32_134 dim 1 : vector<16x256xf32>, i32 -> vector<16x256xf32>
    %c15_135 = arith.constant 15 : index
    %c0_136 = arith.constant 0 : index
    %292 = vector.load %arg9[%c15_135, %c0_136] : memref<16x256xf32, #tpu.memory_space<vmem>>, vector<1x256xf32>
    %293 = vector.broadcast %292 : vector<1x256xf32> to vector<16x256xf32>
    %294 = arith.mulf %291, %293 : vector<16x256xf32>
    %295 = tpu.concatenate %234, %238, %242, %246, %250, %254, %258, %262, %31, %230, %266, %270, %274, %278, %282, %286 in 0 : vector<16x256xf32>, vector<16x256xf32>, vector<16x256xf32>, vector<16x256xf32>, vector<16x256xf32>, vector<16x256xf32>, vector<16x256xf32>, vector<16x256xf32>, vector<16x256xf32>, vector<16x256xf32>, vector<16x256xf32>, vector<16x256xf32>, vector<16x256xf32>, vector<16x256xf32>, vector<16x256xf32>, vector<16x256xf32> -> vector<256x256xf32>
    %296 = tpu.concatenate %290, %294 in 0 : vector<16x256xf32>, vector<16x256xf32> -> vector<32x256xf32>
    %297 = tpu.concatenate %295, %296 in 0 : vector<256x256xf32>, vector<32x256xf32> -> vector<288x256xf32>
    %c0_137 = arith.constant 0 : index
    %c0_138 = arith.constant 0 : index
    %298 = vector.load %arg6[%c0_137, %c0_138] : memref<16x288xf32, #tpu.memory_space<vmem>>, vector<16x288xf32>
    %cst_139 = arith.constant dense<0.000000e+00> : vector<16x256xf32>
    %299 = tpu.matmul %298, %297, %cst_139 {dimension_numbers = #tpu.dot_dimension_numbers<[1], [0], [0], [1], [0, 0, 1, 1], [], []>} : vector<16x288xf32>, vector<288x256xf32>, vector<16x256xf32> -> vector<16x256xf32>
    %c0_140 = arith.constant 0 : index
    %c5_141 = arith.constant 5 : index
    %300 = vector.load %arg7[%c0_140, %c5_141] : memref<16x7xf32, #tpu.memory_space<vmem>>, vector<16x1xf32>
    %c0_142 = arith.constant 0 : index
    %c5_143 = arith.constant 5 : index
    %301 = vector.load %arg8[%c0_142, %c5_143] : memref<16x7xf32, #tpu.memory_space<vmem>>, vector<16x1xf32>
    %cst_144 = arith.constant dense<0.000000e+00> : vector<16xf32>
    %302 = vector.multi_reduction <add>, %299, %cst_144 [1] : vector<16x256xf32> to vector<16xf32>
    %303 = vector.shape_cast %302 : vector<16xf32> to vector<16x1xf32>
    %304 = arith.mulf %299, %299 : vector<16x256xf32>
    %cst_145 = arith.constant dense<0.000000e+00> : vector<16xf32>
    %305 = vector.multi_reduction <add>, %304, %cst_145 [1] : vector<16x256xf32> to vector<16xf32>
    %306 = vector.shape_cast %305 : vector<16xf32> to vector<16x1xf32>
    %307 = tpu.concatenate %303, %306 in 0 : vector<16x1xf32>, vector<16x1xf32> -> vector<32x1xf32>
    %c0_146 = arith.constant 0 : index
    %c0_147 = arith.constant 0 : index
    %308 = vector.load %arg12[%c0_146, %c0_147] : memref<32x32xf32, #tpu.memory_space<vmem>>, vector<32x32xf32>
    %cst_148 = arith.constant dense<0.000000e+00> : vector<32x1xf32>
    %309 = tpu.matmul %308, %307, %cst_148 {dimension_numbers = #tpu.dot_dimension_numbers<[1], [0], [0], [1], [0, 0, 1, 1], [], []>} : vector<32x32xf32>, vector<32x1xf32>, vector<32x1xf32> -> vector<32x1xf32>
    %cst_149 = arith.constant 0.001953125 : f32
    %310 = vector.broadcast %cst_149 : f32 to vector<32x1xf32>
    %311 = arith.mulf %309, %310 : vector<32x1xf32>
    %312 = vector.extract_strided_slice %311 {offsets = [0, 0], sizes = [16, 1], strides = [1, 1]} : vector<32x1xf32> to vector<16x1xf32>
    %313 = vector.extract_strided_slice %311 {offsets = [16, 0], sizes = [16, 1], strides = [1, 1]} : vector<32x1xf32> to vector<16x1xf32>
    %314 = arith.mulf %312, %312 : vector<16x1xf32>
    %315 = arith.subf %313, %314 : vector<16x1xf32>
    %cst_150 = arith.constant 0.000000e+00 : f32
    %316 = vector.broadcast %cst_150 : f32 to vector<16x1xf32>
    %317 = arith.maximumf %315, %316 : vector<16x1xf32>
    %cst_151 = arith.constant 9.99999974E-6 : f32
    %318 = vector.broadcast %cst_151 : f32 to vector<16x1xf32>
    %319 = arith.addf %317, %318 : vector<16x1xf32>
    %320 = math.rsqrt %319 : vector<16x1xf32>
    %321 = arith.mulf %300, %320 : vector<16x1xf32>
    %322 = arith.mulf %312, %321 : vector<16x1xf32>
    %323 = arith.subf %301, %322 : vector<16x1xf32>
    %324 = vector.broadcast %321 : vector<16x1xf32> to vector<16x256xf32>
    %325 = arith.mulf %299, %324 : vector<16x256xf32>
    %326 = vector.broadcast %323 : vector<16x1xf32> to vector<16x256xf32>
    %327 = arith.addf %325, %326 : vector<16x256xf32>
    %328 = arith.addf %327, %89 : vector<16x256xf32>
    %cst_152 = arith.constant 0.000000e+00 : f32
    %329 = vector.broadcast %cst_152 : f32 to vector<16x256xf32>
    %330 = arith.maximumf %328, %329 : vector<16x256xf32>
    %c0_153 = arith.constant 0 : index
    %c0_154 = arith.constant 0 : index
    %331 = vector.load %arg13[%c0_153, %c0_154] : memref<16x256xf32, #tpu.memory_space<vmem>>, vector<16x256xf32>
    tpu.vector_store %arg13[%c0_153, %c0_154], %330 {strides = array<i32>} : memref<16x256xf32, #tpu.memory_space<vmem>>, vector<16x256xf32>,
    return
  }
  func.func @transform_0(%arg0: i32) -> (i32, i32) {
    %c0_i32 = arith.constant 0 : i32
    %c0_i32_0 = arith.constant 0 : i32
    return %c0_i32, %arg0 : i32, i32
  }
  func.func @transform_1(%arg0: i32) -> (i32, i32) {
    %c0_i32 = arith.constant 0 : i32
    %c0_i32_0 = arith.constant 0 : i32
    %c0_i32_1 = arith.constant 0 : i32
    return %c0_i32, %c0_i32_0 : i32, i32
  }
  func.func @transform_2(%arg0: i32) -> (i32, i32) {
    %c0_i32 = arith.constant 0 : i32
    %c0_i32_0 = arith.constant 0 : i32
    %c0_i32_1 = arith.constant 0 : i32
    return %c0_i32, %c0_i32_0 : i32, i32
  }
  func.func @transform_3(%arg0: i32) -> (i32, i32) {
    %c0_i32 = arith.constant 0 : i32
    %c0_i32_0 = arith.constant 0 : i32
    %c0_i32_1 = arith.constant 0 : i32
    return %c0_i32, %c0_i32_0 : i32, i32
  }
  func.func @transform_4(%arg0: i32) -> (i32, i32) {
    %c0_i32 = arith.constant 0 : i32
    %c0_i32_0 = arith.constant 0 : i32
    %c0_i32_1 = arith.constant 0 : i32
    return %c0_i32, %c0_i32_0 : i32, i32
  }
  func.func @transform_5(%arg0: i32) -> (i32, i32) {
    %c0_i32 = arith.constant 0 : i32
    %c0_i32_0 = arith.constant 0 : i32
    %c0_i32_1 = arith.constant 0 : i32
    return %c0_i32, %c0_i32_0 : i32, i32
  }
  func.func @transform_6(%arg0: i32) -> (i32, i32) {
    %c0_i32 = arith.constant 0 : i32
    %c0_i32_0 = arith.constant 0 : i32
    %c0_i32_1 = arith.constant 0 : i32
    return %c0_i32, %c0_i32_0 : i32, i32
  }
  func.func @transform_7(%arg0: i32) -> (i32, i32) {
    %c0_i32 = arith.constant 0 : i32
    %c0_i32_0 = arith.constant 0 : i32
    %c0_i32_1 = arith.constant 0 : i32
    return %c0_i32, %c0_i32_0 : i32, i32
  }
  func.func @transform_8(%arg0: i32) -> (i32, i32) {
    %c0_i32 = arith.constant 0 : i32
    %c0_i32_0 = arith.constant 0 : i32
    %c0_i32_1 = arith.constant 0 : i32
    return %c0_i32, %c0_i32_0 : i32, i32
  }
  func.func @transform_9(%arg0: i32) -> (i32, i32) {
    %c0_i32 = arith.constant 0 : i32
    %c0_i32_0 = arith.constant 0 : i32
    %c0_i32_1 = arith.constant 0 : i32
    return %c0_i32, %c0_i32_0 : i32, i32
  }
  func.func @transform_10(%arg0: i32) -> (i32, i32) {
    %c0_i32 = arith.constant 0 : i32
    %c0_i32_0 = arith.constant 0 : i32
    %c0_i32_1 = arith.constant 0 : i32
    return %c0_i32, %c0_i32_0 : i32, i32
  }
  func.func @transform_11(%arg0: i32) -> (i32, i32) {
    %c0_i32 = arith.constant 0 : i32
    %c0_i32_0 = arith.constant 0 : i32
    %c0_i32_1 = arith.constant 0 : i32
    return %c0_i32, %c0_i32_0 : i32, i32
  }
  func.func @transform_12(%arg0: i32) -> (i32, i32) {
    %c0_i32 = arith.constant 0 : i32
    %c0_i32_0 = arith.constant 0 : i32
    return %c0_i32, %arg0 : i32, i32
  }
}

</mosaic_0001>

<llo_original>
// kernel: tpu_custom_call.1
$region0: #{tpu_custom_call.1}
  #allocation0 [shape = 'u32[]', space=smem, size = 0x4, offset = 0x4, fixed_abs, tag = 'smem constant byte address 0x4 - core index']
  #allocation1 [shape = 'u32[144,128]{1,0:T(1,128)}', space=vmem, size = 0x12000, scoped, tag = 'internal scratch']
  %s0 = inlined_call_operand.vmem [shape: f32[16,512], index: 0, kind: input, shape index: {}]
  %s1 = inlined_call_operand.vmem [shape: f32[48,16], index: 1, kind: input, shape index: {}]
  %s2 = inlined_call_operand.vmem [shape: f32[16,48], index: 2, kind: input, shape index: {}]
  %s3 = inlined_call_operand.vmem [shape: f32[16,48], index: 3, kind: input, shape index: {}]
  %s4 = inlined_call_operand.vmem [shape: f32[16,144], index: 4, kind: input, shape index: {}]
  %s5 = inlined_call_operand.vmem [shape: f32[16,288], index: 5, kind: input, shape index: {}]
  %s6 = inlined_call_operand.vmem [shape: f32[16,7], index: 6, kind: input, shape index: {}]
  %s7 = inlined_call_operand.vmem [shape: f32[16,7], index: 7, kind: input, shape index: {}]
  %s8 = inlined_call_operand.vmem [shape: f32[16,256], index: 8, kind: input, shape index: {}]
  %s9 = inlined_call_operand.vmem [shape: f32[256,1], index: 9, kind: input, shape index: {}]
  %s10 = inlined_call_operand.vmem [shape: f32[1,256], index: 10, kind: input, shape index: {}]
  %s11 = inlined_call_operand.vmem [shape: f32[32,32], index: 11, kind: input, shape index: {}]
  %s12 = inlined_call_operand.hbm [shape: f32[16,512], index: 12, kind: output, shape index: {}]
  %s13 = sld [smem:[#allocation0]]
  $region104: #{tpu_custom_call.1} parent=0
    _
  %s15 = ssub.s32 1, %s13
  %s16 = scalar_select 0, %s15, %s13
  $region1: #{tpu_custom_call.1} parent=0
    #allocation2 [shape = 'u8[32768]{0}', space=vmem, size = 0x8000, scoped, tag = 'input window, operand 0']
    #allocation3 [shape = 'u8[32768]{0}', space=vmem, size = 0x8000, scoped, tag = 'output window, operand 0']
    #allocation4 [shape = 's32[2]{0}', space=sflag, size = 0x8, scoped, tag = 'scoped memory for tpu_custom_call.1']
    %17 = vsyncpa [#allocation4], 0
    %s18 = scalar_lea.sflag [#allocation4], 1
    %19 = vsyncpa %s18, 0
    loop: start=0, step=1, limit=4
    $region2: #{tpu_custom_call.1} parent=1 // loop_pre_header
      _
    $region3: #{tpu_custom_call.1} parent=1 // loop_header
      %s21 = sphi 0, %s25
      %p22 = scmp.ge.s32.totalorder %s21, 4
      %s31 = sphi 0, %s33
      %s34 = sphi 0, %s31
      %s35 = sphi 0, %s34
      %s51 = sphi 0, %s35
      %s55 = sphi 0, %s55
      %s57 = sphi 0, %s55
      %s58 = sphi 0, %s57
      %s72 = sphi 0, %s58
      %s76 = sphi 0, %s76
      %s78 = sphi 0, %s76
      %s79 = sphi 0, %s78
      %s93 = sphi 0, %s79
      %s97 = sphi 0, %s97
      %s99 = sphi 0, %s97
      %s100 = sphi 0, %s99
      %s114 = sphi 0, %s100
      %s118 = sphi 0, %s118
      %s120 = sphi 0, %s118
      %s121 = sphi 0, %s120
      %s135 = sphi 0, %s121
      %s139 = sphi 0, %s139
      %s141 = sphi 0, %s139
      %s142 = sphi 0, %s141
      %s156 = sphi 0, %s142
      %s160 = sphi 0, %s160
      %s162 = sphi 0, %s160
      %s163 = sphi 0, %s162
      %s177 = sphi 0, %s163
      %s181 = sphi 0, %s181
      %s183 = sphi 0, %s181
      %s184 = sphi 0, %s183
      %s198 = sphi 0, %s184
      %s202 = sphi 0, %s202
      %s204 = sphi 0, %s202
      %s205 = sphi 0, %s204
      %s219 = sphi 0, %s205
      %s223 = sphi 0, %s223
      %s225 = sphi 0, %s223
      %s226 = sphi 0, %s225
      %s240 = sphi 0, %s226
      %s244 = sphi 0, %s244
      %s246 = sphi 0, %s244
      %s247 = sphi 0, %s246
      %s261 = sphi 0, %s247
      %s265 = sphi 0, %s265
      %s267 = sphi 0, %s265
      %s268 = sphi 0, %s267
      %s282 = sphi 0, %s268
      %s288 = sphi 0, %s290
      %s291 = sphi 0, %s288
      %s292 = sphi 0, %s291
      %s308 = sphi 0, %s292
    $region4: #{tpu_custom_call.1} parent=1 // loop_header_branch
      %24 = sbr.rel (%p22) target = $region8
    $region5: #{tpu_custom_call.1} parent=1 // loop_body
      %s26 = ssub.s32 %s21, 1
      %s27 = ssub.s32 %s21, 2
      %s28 = sadd.s32 %s21, 1
      %s29 = ssub.s32 %s21, %s28
      %p30 = scmp.eq.s32.totalorder %s29, 0
      %s32 = sadd.s32 %s31, 1
      %s33 = scalar_select %p30, %s31, %s32
      %p36 = pneg %p30
      %p37 = scmp.eq.s32.totalorder %s21, 1
      %p38 = por %p36, %p37
      %p39 = scmp.ne.s32.totalorder %s31, %s34
      %p40 = scmp.eq.s32.totalorder %s21, 0
      %p41 = por %p39, %p40
      %p42 = scmp.ne.s32.totalorder %s31, %s34
      %p43 = scmp.eq.s32.totalorder %s26, 1
      %p44 = por %p42, %p43
      %p45 = scmp.ne.s32.totalorder %s34, %s35
      %p46 = scmp.eq.s32.totalorder %s26, 0
      %p47 = por %p45, %p46
      %p48 = scmp.ne.s32.totalorder %s34, %s35
      %p49 = scmp.eq.s32.totalorder %s27, 1
      %p50 = por %p48, %p49
      %p52 = scmp.ne.s32.totalorder %s35, %s51
      %p53 = scmp.eq.s32.totalorder %s27, 0
      %p54 = por %p52, %p53
      %s56 = sadd.s32 %s55, 1
      %p59 = scmp.eq.s32.totalorder %s21, 1
      %p60 = scmp.ne.s32.totalorder %s55, %s57
      %p61 = scmp.eq.s32.totalorder %s21, 0
      %p62 = por %p60, %p61
      %p63 = scmp.ne.s32.totalorder %s55, %s57
      %p64 = scmp.eq.s32.totalorder %s26, 1
      %p65 = por %p63, %p64
      %p66 = scmp.ne.s32.totalorder %s57, %s58
      %p67 = scmp.eq.s32.totalorder %s26, 0
      %p68 = por %p66, %p67
      %p69 = scmp.ne.s32.totalorder %s57, %s58
      %p70 = scmp.eq.s32.totalorder %s27, 1
      %p71 = por %p69, %p70
      %p73 = scmp.ne.s32.totalorder %s58, %s72
      %p74 = scmp.eq.s32.totalorder %s27, 0
      %p75 = por %p73, %p74
      %s77 = sadd.s32 %s76, 1
      %p80 = scmp.eq.s32.totalorder %s21, 1
      %p81 = scmp.ne.s32.totalorder %s76, %s78
      %p82 = scmp.eq.s32.totalorder %s21, 0
      %p83 = por %p81, %p82
      %p84 = scmp.ne.s32.totalorder %s76, %s78
      %p85 = scmp.eq.s32.totalorder %s26, 1
      %p86 = por %p84, %p85
      %p87 = scmp.ne.s32.totalorder %s78, %s79
      %p88 = scmp.eq.s32.totalorder %s26, 0
      %p89 = por %p87, %p88
      %p90 = scmp.ne.s32.totalorder %s78, %s79
      %p91 = scmp.eq.s32.totalorder %s27, 1
      %p92 = por %p90, %p91
      %p94 = scmp.ne.s32.totalorder %s79, %s93
      %p95 = scmp.eq.s32.totalorder %s27, 0
      %p96 = por %p94, %p95
      %s98 = sadd.s32 %s97, 1
      %p101 = scmp.eq.s32.totalorder %s21, 1
      %p102 = scmp.ne.s32.totalorder %s97, %s99
      %p103 = scmp.eq.s32.totalorder %s21, 0
      %p104 = por %p102, %p103
      %p105 = scmp.ne.s32.totalorder %s97, %s99
      %p106 = scmp.eq.s32.totalorder %s26, 1
      %p107 = por %p105, %p106
      %p108 = scmp.ne.s32.totalorder %s99, %s100
      %p109 = scmp.eq.s32.totalorder %s26, 0
      %p110 = por %p108, %p109
      %p111 = scmp.ne.s32.totalorder %s99, %s100
      %p112 = scmp.eq.s32.totalorder %s27, 1
      %p113 = por %p111, %p112
      %p115 = scmp.ne.s32.totalorder %s100, %s114
      %p116 = scmp.eq.s32.totalorder %s27, 0
      %p117 = por %p115, %p116
      %s119 = sadd.s32 %s118, 1
      %p122 = scmp.eq.s32.totalorder %s21, 1
      %p123 = scmp.ne.s32.totalorder %s118, %s120
      %p124 = scmp.eq.s32.totalorder %s21, 0
      %p125 = por %p123, %p124
      %p126 = scmp.ne.s32.totalorder %s118, %s120
      %p127 = scmp.eq.s32.totalorder %s26, 1
      %p128 = por %p126, %p127
      %p129 = scmp.ne.s32.totalorder %s120, %s121
      %p130 = scmp.eq.s32.totalorder %s26, 0
      %p131 = por %p129, %p130
      %p132 = scmp.ne.s32.totalorder %s120, %s121
      %p133 = scmp.eq.s32.totalorder %s27, 1
      %p134 = por %p132, %p133
      %p136 = scmp.ne.s32.totalorder %s121, %s135
      %p137 = scmp.eq.s32.totalorder %s27, 0
      %p138 = por %p136, %p137
      %s140 = sadd.s32 %s139, 1
      %p143 = scmp.eq.s32.totalorder %s21, 1
      %p144 = scmp.ne.s32.totalorder %s139, %s141
      %p145 = scmp.eq.s32.totalorder %s21, 0
      %p146 = por %p144, %p145
      %p147 = scmp.ne.s32.totalorder %s139, %s141
      %p148 = scmp.eq.s32.totalorder %s26, 1
      %p149 = por %p147, %p148
      %p150 = scmp.ne.s32.totalorder %s141, %s142
      %p151 = scmp.eq.s32.totalorder %s26, 0
      %p152 = por %p150, %p151
      %p153 = scmp.ne.s32.totalorder %s141, %s142
      %p154 = scmp.eq.s32.totalorder %s27, 1
      %p155 = por %p153, %p154
      %p157 = scmp.ne.s32.totalorder %s142, %s156
      %p158 = scmp.eq.s32.totalorder %s27, 0
      %p159 = por %p157, %p158
      %s161 = sadd.s32 %s160, 1
      %p164 = scmp.eq.s32.totalorder %s21, 1
      %p165 = scmp.ne.s32.totalorder %s160, %s162
      %p166 = scmp.eq.s32.totalorder %s21, 0
      %p167 = por %p165, %p166
      %p168 = scmp.ne.s32.totalorder %s160, %s162
      %p169 = scmp.eq.s32.totalorder %s26, 1
      %p170 = por %p168, %p169
      %p171 = scmp.ne.s32.totalorder %s162, %s163
      %p172 = scmp.eq.s32.totalorder %s26, 0
      %p173 = por %p171, %p172
      %p174 = scmp.ne.s32.totalorder %s162, %s163
      %p175 = scmp.eq.s32.totalorder %s27, 1
      %p176 = por %p174, %p175
      %p178 = scmp.ne.s32.totalorder %s163, %s177
      %p179 = scmp.eq.s32.totalorder %s27, 0
      %p180 = por %p178, %p179
      %s182 = sadd.s32 %s181, 1
      %p185 = scmp.eq.s32.totalorder %s21, 1
      %p186 = scmp.ne.s32.totalorder %s181, %s183
      %p187 = scmp.eq.s32.totalorder %s21, 0
      %p188 = por %p186, %p187
      %p189 = scmp.ne.s32.totalorder %s181, %s183
      %p190 = scmp.eq.s32.totalorder %s26, 1
      %p191 = por %p189, %p190
      %p192 = scmp.ne.s32.totalorder %s183, %s184
      %p193 = scmp.eq.s32.totalorder %s26, 0
      %p194 = por %p192, %p193
      %p195 = scmp.ne.s32.totalorder %s183, %s184
      %p196 = scmp.eq.s32.totalorder %s27, 1
      %p197 = por %p195, %p196
      %p199 = scmp.ne.s32.totalorder %s184, %s198
      %p200 = scmp.eq.s32.totalorder %s27, 0
      %p201 = por %p199, %p200
      %s203 = sadd.s32 %s202, 1
      %p206 = scmp.eq.s32.totalorder %s21, 1
      %p207 = scmp.ne.s32.totalorder %s202, %s204
      %p208 = scmp.eq.s32.totalorder %s21, 0
      %p209 = por %p207, %p208
      %p210 = scmp.ne.s32.totalorder %s202, %s204
      %p211 = scmp.eq.s32.totalorder %s26, 1
      %p212 = por %p210, %p211
      %p213 = scmp.ne.s32.totalorder %s204, %s205
      %p214 = scmp.eq.s32.totalorder %s26, 0
      %p215 = por %p213, %p214
      %p216 = scmp.ne.s32.totalorder %s204, %s205
      %p217 = scmp.eq.s32.totalorder %s27, 1
      %p218 = por %p216, %p217
      %p220 = scmp.ne.s32.totalorder %s205, %s219
      %p221 = scmp.eq.s32.totalorder %s27, 0
      %p222 = por %p220, %p221
      %s224 = sadd.s32 %s223, 1
      %p227 = scmp.eq.s32.totalorder %s21, 1
      %p228 = scmp.ne.s32.totalorder %s223, %s225
      %p229 = scmp.eq.s32.totalorder %s21, 0
      %p230 = por %p228, %p229
      %p231 = scmp.ne.s32.totalorder %s223, %s225
      %p232 = scmp.eq.s32.totalorder %s26, 1
      %p233 = por %p231, %p232
      %p234 = scmp.ne.s32.totalorder %s225, %s226
      %p235 = scmp.eq.s32.totalorder %s26, 0
      %p236 = por %p234, %p235
      %p237 = scmp.ne.s32.totalorder %s225, %s226
      %p238 = scmp.eq.s32.totalorder %s27, 1
      %p239 = por %p237, %p238
      %p241 = scmp.ne.s32.totalorder %s226, %s240
      %p242 = scmp.eq.s32.totalorder %s27, 0
      %p243 = por %p241, %p242
      %s245 = sadd.s32 %s244, 1
      %p248 = scmp.eq.s32.totalorder %s21, 1
      %p249 = scmp.ne.s32.totalorder %s244, %s246
      %p250 = scmp.eq.s32.totalorder %s21, 0
      %p251 = por %p249, %p250
      %p252 = scmp.ne.s32.totalorder %s244, %s246
      %p253 = scmp.eq.s32.totalorder %s26, 1
      %p254 = por %p252, %p253
      %p255 = scmp.ne.s32.totalorder %s246, %s247
      %p256 = scmp.eq.s32.totalorder %s26, 0
      %p257 = por %p255, %p256
      %p258 = scmp.ne.s32.totalorder %s246, %s247
      %p259 = scmp.eq.s32.totalorder %s27, 1
      %p260 = por %p258, %p259
      %p262 = scmp.ne.s32.totalorder %s247, %s261
      %p263 = scmp.eq.s32.totalorder %s27, 0
      %p264 = por %p262, %p263
      %s266 = sadd.s32 %s265, 1
      %p269 = scmp.eq.s32.totalorder %s21, 1
      %p270 = scmp.ne.s32.totalorder %s265, %s267
      %p271 = scmp.eq.s32.totalorder %s21, 0
      %p272 = por %p270, %p271
      %p273 = scmp.ne.s32.totalorder %s265, %s267
      %p274 = scmp.eq.s32.totalorder %s26, 1
      %p275 = por %p273, %p274
      %p276 = scmp.ne.s32.totalorder %s267, %s268
      %p277 = scmp.eq.s32.totalorder %s26, 0
      %p278 = por %p276, %p277
      %p279 = scmp.ne.s32.totalorder %s267, %s268
      %p280 = scmp.eq.s32.totalorder %s27, 1
      %p281 = por %p279, %p280
      %p283 = scmp.ne.s32.totalorder %s268, %s282
      %p284 = scmp.eq.s32.totalorder %s27, 0
      %p285 = por %p283, %p284
      %s286 = ssub.s32 %s21, %s28
      %p287 = scmp.eq.s32.totalorder %s286, 0
      %s289 = sadd.s32 %s288, 1
      %s290 = scalar_select %p287, %s288, %s289
      %p293 = pneg %p287
      %p294 = scmp.eq.s32.totalorder %s21, 1
      %p295 = por %p293, %p294
      %p296 = scmp.ne.s32.totalorder %s288, %s291
      %p297 = scmp.eq.s32.totalorder %s21, 0
      %p298 = por %p296, %p297
      %p299 = scmp.ne.s32.totalorder %s288, %s291
      %p300 = scmp.eq.s32.totalorder %s26, 1
      %p301 = por %p299, %p300
      %p302 = scmp.ne.s32.totalorder %s291, %s292
      %p303 = scmp.eq.s32.totalorder %s26, 0
      %p304 = por %p302, %p303
      %p305 = scmp.ne.s32.totalorder %s291, %s292
      %p306 = scmp.eq.s32.totalorder %s27, 1
      %p307 = por %p305, %p306
      %p309 = scmp.ne.s32.totalorder %s292, %s308
      %p310 = scmp.eq.s32.totalorder %s27, 0
      %p311 = por %p309, %p310
      %p312 = scmp.le.s32.totalorder 1, %s21
      %p313 = scmp.lt.s32.totalorder %s21, 3
      %p314 = pnand %p312, %p313
      %p315 = pneg %p314
      // Predicated region
      $region9: #{tpu_custom_call.1} parent=5 // pred_check
        _
      $region10: #{tpu_custom_call.1} parent=5 // pred_check_branch
        %317 = sbr.rel (%p314) target = $region12
      $region11: #{tpu_custom_call.1} parent=5 // pred_region
        %s318 = ssub.s32 %s21, 1
        // Predicated region
        $region13: #{tpu_custom_call.1} parent=11 // pred_check
          %p319 = pneg %p68
        $region14: #{tpu_custom_call.1} parent=11 // pred_check_branch
          %321 = sbr.rel (%p319) target = $region16
        $region15: #{tpu_custom_call.1} parent=11 // pred_region
          _
        $region16: #{tpu_custom_call.1} parent=11 // pred_fallthru
          _
        // Predicated region
        $region17: #{tpu_custom_call.1} parent=11 // pred_check
          %p322 = pneg %p89
        $region18: #{tpu_custom_call.1} parent=11 // pred_check_branch
          %324 = sbr.rel (%p322) target = $region20
        $region19: #{tpu_custom_call.1} parent=11 // pred_region
          _
        $region20: #{tpu_custom_call.1} parent=11 // pred_fallthru
          _
        // Predicated region
        $region21: #{tpu_custom_call.1} parent=11 // pred_check
          %p325 = pneg %p110
        $region22: #{tpu_custom_call.1} parent=11 // pred_check_branch
          %327 = sbr.rel (%p325) target = $region24
        $region23: #{tpu_custom_call.1} parent=11 // pred_region
          _
        $region24: #{tpu_custom_call.1} parent=11 // pred_fallthru
          _
        // Predicated region
        $region25: #{tpu_custom_call.1} parent=11 // pred_check
          %p328 = pneg %p131
        $region26: #{tpu_custom_call.1} parent=11 // pred_check_branch
          %330 = sbr.rel (%p328) target = $region28
        $region27: #{tpu_custom_call.1} parent=11 // pred_region
          _
        $region28: #{tpu_custom_call.1} parent=11 // pred_fallthru
          _
        // Predicated region
        $region29: #{tpu_custom_call.1} parent=11 // pred_check
          %p331 = pneg %p152
        $region30: #{tpu_custom_call.1} parent=11 // pred_check_branch
          %333 = sbr.rel (%p331) target = $region32
        $region31: #{tpu_custom_call.1} parent=11 // pred_region
          _
        $region32: #{tpu_custom_call.1} parent=11 // pred_fallthru
          _
        // Predicated region
        $region33: #{tpu_custom_call.1} parent=11 // pred_check
          %p334 = pneg %p173
        $region34: #{tpu_custom_call.1} parent=11 // pred_check_branch
          %336 = sbr.rel (%p334) target = $region36
        $region35: #{tpu_custom_call.1} parent=11 // pred_region
          _
        $region36: #{tpu_custom_call.1} parent=11 // pred_fallthru
          _
        // Predicated region
        $region37: #{tpu_custom_call.1} parent=11 // pred_check
          %p337 = pneg %p194
        $region38: #{tpu_custom_call.1} parent=11 // pred_check_branch
          %339 = sbr.rel (%p337) target = $region40
        $region39: #{tpu_custom_call.1} parent=11 // pred_region
          _
        $region40: #{tpu_custom_call.1} parent=11 // pred_fallthru
          _
        // Predicated region
        $region41: #{tpu_custom_call.1} parent=11 // pred_check
          %p340 = pneg %p215
        $region42: #{tpu_custom_call.1} parent=11 // pred_check_branch
          %342 = sbr.rel (%p340) target = $region44
        $region43: #{tpu_custom_call.1} parent=11 // pred_region
          _
        $region44: #{tpu_custom_call.1} parent=11 // pred_fallthru
          _
        // Predicated region
        $region45: #{tpu_custom_call.1} parent=11 // pred_check
          %p343 = pneg %p236
        $region46: #{tpu_custom_call.1} parent=11 // pred_check_branch
          %345 = sbr.rel (%p343) target = $region48
        $region47: #{tpu_custom_call.1} parent=11 // pred_region
          _
        $region48: #{tpu_custom_call.1} parent=11 // pred_fallthru
          _
        // Predicated region
        $region49: #{tpu_custom_call.1} parent=11 // pred_check
          %p346 = pneg %p257
        $region50: #{tpu_custom_call.1} parent=11 // pred_check_branch
          %348 = sbr.rel (%p346) target = $region52
        $region51: #{tpu_custom_call.1} parent=11 // pred_region
          _
        $region52: #{tpu_custom_call.1} parent=11 // pred_fallthru
          _
        // Predicated region
        $region53: #{tpu_custom_call.1} parent=11 // pred_check
          %p349 = pneg %p278
        $region54: #{tpu_custom_call.1} parent=11 // pred_check_branch
          %351 = sbr.rel (%p349) target = $region56
        $region55: #{tpu_custom_call.1} parent=11 // pred_region
          _
        $region56: #{tpu_custom_call.1} parent=11 // pred_fallthru
          _
      $region12: #{tpu_custom_call.1} parent=5 // pred_fallthru
        _
      %p352 = scmp.lt.s32.totalorder %s21, 2
      // Predicated region
      $region57: #{tpu_custom_call.1} parent=5 // pred_check
        %p353 = pneg %p352
      $region58: #{tpu_custom_call.1} parent=5 // pred_check_branch
        %355 = sbr.rel (%p353) target = $region60
      $region59: #{tpu_custom_call.1} parent=5 // pred_region
        // Predicated region
        $region61: #{tpu_custom_call.1} parent=59 // pred_check
          %p356 = pneg %p41
        $region62: #{tpu_custom_call.1} parent=59 // pred_check_branch
          %358 = sbr.rel (%p356) target = $region64
        $region63: #{tpu_custom_call.1} parent=59 // pred_region
          %s359 = sand.u32 %s31, 1
          %s360 = sand.u32 %s31, 1
          %s361 = smul.addr %s360, 32
          %s362 = scalar_lea.vmem [#allocation2], %s361
          %s363 = smul.u32 2, %s21
          %s364 = smul.addr %s363, 8
          %s365 = scalar_lea.vmem %s0, %s364
          // Predicated region
          $region65: #{tpu_custom_call.1} parent=63 // pred_check
            _
          $region66: #{tpu_custom_call.1} parent=63 // pred_check_branch
            %367 = sbr.rel (0) target = $region68
          $region67: #{tpu_custom_call.1} parent=63 // pred_region
            // Predicated region
            $region69: #{tpu_custom_call.1} parent=67 // pred_check
              _
            $region70: #{tpu_custom_call.1} parent=67 // pred_check_branch
              %369 = sbr.rel (0) target = $region72
            $region71: #{tpu_custom_call.1} parent=67 // pred_region
              loop: start=0, step=1, limit=1
              $region73: #{tpu_custom_call.1} parent=71 // loop_pre_header
                _
              $region74: #{tpu_custom_call.1} parent=71 // loop_header
                %s371 = sphi 0, %s375
                %p372 = scmp.ge.s32.totalorder %s371, 1
                %s376 = sphi %s365, %s365
                %s377 = sphi %s362, %s362
              $region75: #{tpu_custom_call.1} parent=71 // loop_header_branch
                %374 = sbr.rel (%p372) target = $region79
              $region76: #{tpu_custom_call.1} parent=71 // loop_body
                %v378 = vld [vmem:[%s376] sm:$0xff]
                %379 = vst [vmem:[%s377] sm:$0xff] %v378
                %v380 = vld [vmem:[%s376 + $0x8] sm:$0xff]
                %381 = vst [vmem:[%s377 + $0x8] sm:$0xff] %v380
                %v382 = vld [vmem:[%s376 + $0x20] sm:$0xff]
                %383 = vst [vmem:[%s377 + $0x10] sm:$0xff] %v382
                %v384 = vld [vmem:[%s376 + $0x28] sm:$0xff]
                %385 = vst [vmem:[%s377 + $0x18] sm:$0xff] %v384
              $region77: #{tpu_custom_call.1} parent=71 // loop_footer
                %s375 = sadd.s32 1, %s371
              $region78: #{tpu_custom_call.1} parent=71 // loop_footer_branch
                %370 = sbr.rel target = $region74
              $region79: #{tpu_custom_call.1} parent=71 // loop_exit
                _
            $region72: #{tpu_custom_call.1} parent=67 // pred_fallthru
              _
            // Predicated region
            $region80: #{tpu_custom_call.1} parent=67 // pred_check
              _
            $region81: #{tpu_custom_call.1} parent=67 // pred_check_branch
              %387 = sbr.rel target = $region83
            $region82: #{tpu_custom_call.1} parent=67 // pred_region
              _
            $region83: #{tpu_custom_call.1} parent=67 // pred_fallthru
              _
          $region68: #{tpu_custom_call.1} parent=63 // pred_fallthru
            _
          %388 = vnop
        $region64: #{tpu_custom_call.1} parent=59 // pred_fallthru
          _
      $region60: #{tpu_custom_call.1} parent=5 // pred_fallthru
        _
      %p389 = scmp.le.s32.totalorder 1, %s21
      %p390 = scmp.lt.s32.totalorder %s21, 3
      %p391 = pnand %p389, %p390
      %p392 = pneg %p391
      // Predicated region
      $region84: #{tpu_custom_call.1} parent=5 // pred_check
        _
      $region85: #{tpu_custom_call.1} parent=5 // pred_check_branch
        %394 = sbr.rel (%p391) target = $region87
      $region86: #{tpu_custom_call.1} parent=5 // pred_region
        %s395 = ssub.s32 %s21, 1
        %s396 = sand.u32 %s34, 1
        %s397 = sand.u32 %s34, 1
        %s398 = smul.addr %s397, 32
        %s399 = scalar_lea.vmem [#allocation2], %s398
        // Predicated region
        $region88: #{tpu_custom_call.1} parent=86 // pred_check
          %p400 = pneg %p47
        $region89: #{tpu_custom_call.1} parent=86 // pred_check_branch
          %402 = sbr.rel (%p400) target = $region91
        $region90: #{tpu_custom_call.1} parent=86 // pred_region
          _
        $region91: #{tpu_custom_call.1} parent=86 // pred_fallthru
          _
        %s403 = sand.u32 %s34, 1
        %s404 = sand.u32 %s34, 1
        %s405 = smul.addr %s404, 32
        %s406 = scalar_lea.vmem [#allocation2], %s405
        %p407 = pneg %p47
        %p408 = pneg %p44
        %p409 = pneg %p68
        %p410 = pneg %p65
        %p411 = pneg %p89
        %p412 = pneg %p86
        %p413 = pneg %p110
        %p414 = pneg %p107
        %p415 = pneg %p131
        %p416 = pneg %p128
        %p417 = pneg %p152
        %p418 = pneg %p149
        %p419 = pneg %p173
        %p420 = pneg %p170
        %p421 = pneg %p194
        %p422 = pneg %p191
        %p423 = pneg %p215
        %p424 = pneg %p212
        %p425 = pneg %p236
        %p426 = pneg %p233
        %p427 = pneg %p257
        %p428 = pneg %p254
        %p429 = pneg %p278
        %p430 = pneg %p275
        %p431 = pneg %p304
        %p432 = pneg %p301
        %s433 = sand.u32 %s291, 1
        %s434 = scalar_lea.sflag [#allocation4], %s433
        %s435 = sand.u32 %s291, 1
        %s436 = smul.addr %s435, 32
        %s437 = scalar_lea.vmem [#allocation3], %s436
        %s438 = smul.u32 2, %s26
        %s439 = smul.u32 2, %s26
        %v440 = vld [vmem:[%s399] sm:$0xff]
        %v441 = vld [vmem:[%s399 + $0x8] sm:$0xff]
        %v442 = vld [vmem:[%s399 + $0x10] sm:$0xff]
        %v443 = vld [vmem:[%s399 + $0x18] sm:$0xff]
        %v444 = vld [vmem:[%s1] sm:$0xff]
        %v445 = vld [vmem:[%s1 + $0x8] sm:$0xff]
        %v446 = vld [vmem:[%s1 + $0x10] sm:$0xff]
        %v447 = vld [vmem:[%s1 + $0x18] sm:$0xff]
        %v448 = vld [vmem:[%s1 + $0x20] sm:$0xff]
        %v449 = vld [vmem:[%s1 + $0x28] sm:$0xff]
        %vm450 = vcmask 130048
        %v452 = vsel %vm450, %v444, 0
        %v455 = vsel %vm450, %v445, 0
        %v458 = vsel %vm450, %v446, 0
        %v461 = vsel %vm450, %v447, 0
        %v464 = vsel %vm450, %v448, 0
        %v467 = vsel %vm450, %v449, 0
        %469 = vmatprep.subr.mxu0 0.0
        %470 = vmatpush1.msra.mxu0 0.0
        %471 = vmatprep.subr.mxu0 0.0
        %472 = vmatpush1.msra.mxu0 0.0
        %473 = vmatprep.subr.mxu0 0.0
        %474 = vmatpush1.msra.mxu0 0.0
        %475 = vmatprep.subr.mxu0 0.0
        %476 = vmatpush1.msra.mxu0 0.0
        %477 = vmatprep.subr.mxu0 0.0
        %478 = vmatpush1.msra.mxu0 0.0
        %479 = vmatprep.subr.mxu0 0.0
        %480 = vmatpush1.msra.mxu0 0.0
        %481 = vmatprep.subr.mxu0 0.0
        %482 = vmatpush1.msra.mxu0 0.0
        %483 = vmatprep.subr.mxu0 0.0
        %484 = vmatpush1.msra.mxu0 0.0
        %485 = vmatprep.subr.mxu0 0.0
        %486 = vmatpush1.msra.mxu0 0.0
        %487 = vmatprep.subr.mxu0 0.0
        %488 = vmatpush1.msra.mxu0 0.0
        %489 = vmatprep.subr.mxu0 0.0
        %490 = vmatpush1.msra.mxu0 0.0
        %491 = vmatprep.subr.mxu0 0.0
        %492 = vmatpush1.msra.mxu0 0.0
        %493 = vmatprep.subr.mxu0 0.0
        %494 = vmatpush1.msra.mxu0 0.0
        %495 = vmatprep.subr.mxu0 0.0
        %496 = vmatpush1.msra.mxu0 0.0
        %497 = vmatprep.subr.mxu0 %v443
        %498 = vmatpush1.msra.mxu0 %v442
        %499 = vmatprep.subr.mxu0 %v441
        %500 = vmatpush1.msra.mxu0 %v440
        %501 = vmatprep.subr.mxu0 0.0
        %502 = vmatpush2.msra.mxu0 0.0
        %503 = vmatprep.subr.mxu0 0.0
        %504 = vmatpush2.msra.mxu0 0.0
        %505 = vmatprep.subr.mxu0 0.0
        %506 = vmatpush2.msra.mxu0 0.0
        %507 = vmatprep.subr.mxu0 0.0
        %508 = vmatpush2.msra.mxu0 0.0
        %509 = vmatprep.subr.mxu0 0.0
        %510 = vmatpush2.msra.mxu0 0.0
        %511 = vmatprep.subr.mxu0 0.0
        %512 = vmatpush2.msra.mxu0 0.0
        %513 = vmatprep.subr.mxu0 0.0
        %514 = vmatpush2.msra.mxu0 0.0
        %515 = vmatprep.subr.mxu0 0.0
        %516 = vmatpush2.msra.mxu0 0.0
        %517 = vmatprep.subr.mxu0 0.0
        %518 = vmatpush2.msra.mxu0 0.0
        %519 = vmatprep.subr.mxu0 0.0
        %520 = vmatpush2.msra.mxu0 0.0
        %521 = vmatprep.subr.mxu0 0.0
        %522 = vmatpush2.msra.mxu0 0.0
        %523 = vmatprep.subr.mxu0 0.0
        %524 = vmatpush2.msra.mxu0 0.0
        %525 = vmatprep.subr.mxu0 0.0
        %526 = vmatpush2.msra.mxu0 0.0
        %527 = vmatprep.subr.mxu0 0.0
        %528 = vmatpush2.msra.mxu0 0.0
        %529 = vmatprep.subr.mxu0 0.0
        %530 = vmatpush2.msra.mxu0 0.0
        %531 = vmatprep.subr.mxu0 0.0
        %532 = vmatpush2.msra.mxu0 0.0
        %533 = vmatprep.mubr.f32.mxu0 0.0
        %534 = vmatmul.mubr.f32.gmra.mxu0 %v452
        %v535 = vpop.f32.mrf.mxu0
        %v536 = vadd.f32 0.0, %v535
        %v537 = vpop.f32.mrf.mxu0
        %v538 = vadd.f32 0.0, %v537
        %539 = vmatprep.mubr.f32.mxu0 0.0
        %540 = vmatmul.mubr.f32.gmra.mxu0 %v455
        %v541 = vpop.f32.mrf.mxu0
        %v542 = vadd.f32 0.0, %v541
        %v543 = vpop.f32.mrf.mxu0
        %v544 = vadd.f32 0.0, %v543
        %545 = vmatprep.mubr.f32.mxu0 0.0
        %546 = vmatmul.mubr.f32.gmra.mxu0 %v458
        %v547 = vpop.f32.mrf.mxu0
        %v548 = vadd.f32 0.0, %v547
        %v549 = vpop.f32.mrf.mxu0
        %v550 = vadd.f32 0.0, %v549
        %551 = vmatprep.mubr.f32.mxu0 0.0
        %552 = vmatmul.mubr.f32.gmra.mxu0 %v461
        %v553 = vpop.f32.mrf.mxu0
        %v554 = vadd.f32 0.0, %v553
        %v555 = vpop.f32.mrf.mxu0
        %v556 = vadd.f32 0.0, %v555
        %557 = vmatprep.mubr.f32.mxu0 0.0
        %558 = vmatmul.mubr.f32.gmra.mxu0 %v464
        %v559 = vpop.f32.mrf.mxu0
        %v560 = vadd.f32 0.0, %v559
        %v561 = vpop.f32.mrf.mxu0
        %v562 = vadd.f32 0.0, %v561
        %563 = vmatprep.mubr.f32.mxu0 0.0
        %564 = vmatmul.mubr.f32.gmra.mxu0 %v467
        %v565 = vpop.f32.mrf.mxu0
        %v566 = vadd.f32 0.0, %v565
        %v567 = vpop.f32.mrf.mxu0
        %v568 = vadd.f32 0.0, %v567
        %569 = vdwg.mxu0
        %v570 = vld [vmem:[%s6] sm:$0xff]
        %v571 = vld [vmem:[%s6 + $0x8] sm:$0xff]
        %v572 = vld [vmem:[%s7] sm:$0xff]
        %v573 = vld [vmem:[%s7 + $0x8] sm:$0xff]
        %v574 = vadd.f32 %v536, %v538
        %575 = vadd.xlane.f32.xlu0 %v574
        %v576 = vpop.xlane.xlu0 %575
        %v577 = vadd.f32 %v542, %v544
        %578 = vadd.xlane.f32.xlu0 %v577
        %v579 = vpop.xlane.xlu0 %578
        %v580 = vmul.f32 %v536, %v536
        %v581 = vmul.f32 %v538, %v538
        %v582 = vmul.f32 %v542, %v542
        %v583 = vmul.f32 %v544, %v544
        %v584 = vadd.f32 %v580, %v581
        %585 = vadd.xlane.f32.xlu0 %v584
        %v586 = vpop.xlane.xlu0 %585
        %v587 = vadd.f32 %v582, %v583
        %588 = vadd.xlane.f32.xlu0 %v587
        %v589 = vpop.xlane.xlu0 %588
        %v590 = vld [vmem:[%s11] sm:$0xff]
        %v591 = vld [vmem:[%s11 + $0x8] sm:$0xff]
        %v592 = vld [vmem:[%s11 + $0x10] sm:$0xff]
        %v593 = vld [vmem:[%s11 + $0x18] sm:$0xff]
        %vm594 = vcmask 261120
        %v596 = vsel %vm594, %v590, 0
        %v599 = vsel %vm594, %v591, 0
        %v602 = vsel %vm594, %v592, 0
        %v605 = vsel %vm594, %v593, 0
        %607 = vmatprep.subr.mxu0 0.0
        %608 = vmatpush1.msra.mxu0 0.0
        %609 = vmatprep.subr.mxu0 0.0
        %610 = vmatpush1.msra.mxu0 0.0
        %611 = vmatprep.subr.mxu0 0.0
        %612 = vmatpush1.msra.mxu0 0.0
        %613 = vmatprep.subr.mxu0 0.0
        %614 = vmatpush1.msra.mxu0 0.0
        %615 = vmatprep.subr.mxu0 0.0
        %616 = vmatpush1.msra.mxu0 0.0
        %617 = vmatprep.subr.mxu0 0.0
        %618 = vmatpush1.msra.mxu0 0.0
        %619 = vmatprep.subr.mxu0 0.0
        %620 = vmatpush1.msra.mxu0 0.0
        %621 = vmatprep.subr.mxu0 0.0
        %622 = vmatpush1.msra.mxu0 0.0
        %623 = vmatprep.subr.mxu0 0.0
        %624 = vmatpush1.msra.mxu0 0.0
        %625 = vmatprep.subr.mxu0 0.0
        %626 = vmatpush1.msra.mxu0 0.0
        %627 = vmatprep.subr.mxu0 0.0
        %628 = vmatpush1.msra.mxu0 0.0
        %629 = vmatprep.subr.mxu0 0.0
        %630 = vmatpush1.msra.mxu0 0.0
        %631 = vmatprep.subr.mxu0 0.0
        %632 = vmatpush1.msra.mxu0 %v589
        %633 = vmatprep.subr.mxu0 0.0
        %634 = vmatpush1.msra.mxu0 %v586
        %635 = vmatprep.subr.mxu0 0.0
        %636 = vmatpush1.msra.mxu0 %v579
        %637 = vmatprep.subr.mxu0 0.0
        %638 = vmatpush1.msra.mxu0 %v576
        %639 = vmatprep.subr.mxu0 0.0
        %640 = vmatpush2.msra.mxu0 0.0
        %641 = vmatprep.subr.mxu0 0.0
        %642 = vmatpush2.msra.mxu0 0.0
        %643 = vmatprep.subr.mxu0 0.0
        %644 = vmatpush2.msra.mxu0 0.0
        %645 = vmatprep.subr.mxu0 0.0
        %646 = vmatpush2.msra.mxu0 0.0
        %647 = vmatprep.subr.mxu0 0.0
        %648 = vmatpush2.msra.mxu0 0.0
        %649 = vmatprep.subr.mxu0 0.0
        %650 = vmatpush2.msra.mxu0 0.0
        %651 = vmatprep.subr.mxu0 0.0
        %652 = vmatpush2.msra.mxu0 0.0
        %653 = vmatprep.subr.mxu0 0.0
        %654 = vmatpush2.msra.mxu0 0.0
        %655 = vmatprep.subr.mxu0 0.0
        %656 = vmatpush2.msra.mxu0 0.0
        %657 = vmatprep.subr.mxu0 0.0
        %658 = vmatpush2.msra.mxu0 0.0
        %659 = vmatprep.subr.mxu0 0.0
        %660 = vmatpush2.msra.mxu0 0.0
        %661 = vmatprep.subr.mxu0 0.0
        %662 = vmatpush2.msra.mxu0 0.0
        %663 = vmatprep.subr.mxu0 0.0
        %664 = vmatpush2.msra.mxu0 0.0
        %665 = vmatprep.subr.mxu0 0.0
        %666 = vmatpush2.msra.mxu0 0.0
        %667 = vmatprep.subr.mxu0 0.0
        %668 = vmatpush2.msra.mxu0 0.0
        %669 = vmatprep.subr.mxu0 0.0
        %670 = vmatpush2.msra.mxu0 0.0
        %671 = vmatprep.mubr.f32.mxu0 0.0
        %672 = vmatmul.mubr.f32.gmra.mxu0 %v596
        %v673 = vpop.f32.mrf.mxu0
        %v674 = vadd.f32 0.0, %v673
        %v675 = vpop.f32.mrf.mxu0
        %676 = vmatprep.mubr.f32.mxu0 0.0
        %677 = vmatmul.mubr.f32.gmra.mxu0 %v599
        %v678 = vpop.f32.mrf.mxu0
        %v679 = vadd.f32 0.0, %v678
        %v680 = vpop.f32.mrf.mxu0
        %681 = vmatprep.mubr.f32.mxu0 0.0
        %682 = vmatmul.mubr.f32.gmra.mxu0 %v602
        %v683 = vpop.f32.mrf.mxu0
        %v684 = vadd.f32 0.0, %v683
        %v685 = vpop.f32.mrf.mxu0
        %686 = vmatprep.mubr.f32.mxu0 0.0
        %687 = vmatmul.mubr.f32.gmra.mxu0 %v605
        %v688 = vpop.f32.mrf.mxu0
        %v689 = vadd.f32 0.0, %v688
        %v690 = vpop.f32.mrf.mxu0
        %691 = vdwg.mxu0
        %v692 = vmul.f32 %v674, 0.001953125
        %v693 = vmul.f32 %v679, 0.001953125
        %v694 = vmul.f32 %v684, 0.001953125
        %v695 = vmul.f32 %v689, 0.001953125
        %v696 = vmul.f32 %v692, %v692
        %v697 = vmul.f32 %v693, %v693
        %v698 = vsub.f32 %v694, %v696
        %v699 = vsub.f32 %v695, %v697
        %v700 = vmax.f32 %v698, 0.0
        %v701 = vmax.f32 %v699, 0.0
        %v702 = vadd.f32 %v700, 1e-05
        %v703 = vadd.f32 %v701, 1e-05
        %v704 = vrsqrt.pop %v702
        %v705 = vrsqrt.pop %v703
        %v706 = vmul.f32 %v570, %v704
        %v707 = vmul.f32 %v571, %v705
        %v708 = vmul.f32 %v692, %v706
        %v709 = vmul.f32 %v693, %v707
        %v710 = vsub.f32 %v572, %v708
        %v711 = vsub.f32 %v573, %v709
        %713 = vset.pattern.permute.xlu0 0
        %714 = vperm.xlu0 %713, %v706
        %v715 = vpop.permute.xlu0 %714
        %718 = vset.pattern.permute.xlu0 0
        %719 = vperm.xlu0 %718, %v707
        %v720 = vpop.permute.xlu0 %719
        %v722 = vmul.f32 %v536, %v715
        %v723 = vmul.f32 %v538, %v715
        %v724 = vmul.f32 %v542, %v720
        %v725 = vmul.f32 %v544, %v720
        %727 = vset.pattern.permute.xlu0 0
        %728 = vperm.xlu0 %727, %v710
        %v729 = vpop.permute.xlu0 %728
        %732 = vset.pattern.permute.xlu0 0
        %733 = vperm.xlu0 %732, %v711
        %v734 = vpop.permute.xlu0 %733
        %v736 = vadd.f32 %v722, %v729
        %v737 = vadd.f32 %v723, %v729
        %v738 = vadd.f32 %v724, %v734
        %v739 = vadd.f32 %v725, %v734
        %v740 = vadd.f32 %v548, %v550
        %741 = vadd.xlane.f32.xlu0 %v740
        %v742 = vpop.xlane.xlu0 %741
        %v743 = vadd.f32 %v554, %v556
        %744 = vadd.xlane.f32.xlu0 %v743
        %v745 = vpop.xlane.xlu0 %744
        %v746 = vmul.f32 %v548, %v548
        %v747 = vmul.f32 %v550, %v550
        %v748 = vmul.f32 %v554, %v554
        %v749 = vmul.f32 %v556, %v556
        %v750 = vadd.f32 %v746, %v747
        %751 = vadd.xlane.f32.xlu0 %v750
        %v752 = vpop.xlane.xlu0 %751
        %v753 = vadd.f32 %v748, %v749
        %754 = vadd.xlane.f32.xlu0 %v753
        %v755 = vpop.xlane.xlu0 %754
        %756 = vmatprep.subr.mxu0 0.0
        %757 = vmatpush1.msra.mxu0 0.0
        %758 = vmatprep.subr.mxu0 0.0
        %759 = vmatpush1.msra.mxu0 0.0
        %760 = vmatprep.subr.mxu0 0.0
        %761 = vmatpush1.msra.mxu0 0.0
        %762 = vmatprep.subr.mxu0 0.0
        %763 = vmatpush1.msra.mxu0 0.0
        %764 = vmatprep.subr.mxu0 0.0
        %765 = vmatpush1.msra.mxu0 0.0
        %766 = vmatprep.subr.mxu0 0.0
        %767 = vmatpush1.msra.mxu0 0.0
        %768 = vmatprep.subr.mxu0 0.0
        %769 = vmatpush1.msra.mxu0 0.0
        %770 = vmatprep.subr.mxu0 0.0
        %771 = vmatpush1.msra.mxu0 0.0
        %772 = vmatprep.subr.mxu0 0.0
        %773 = vmatpush1.msra.mxu0 0.0
        %774 = vmatprep.subr.mxu0 0.0
        %775 = vmatpush1.msra.mxu0 0.0
        %776 = vmatprep.subr.mxu0 0.0
        %777 = vmatpush1.msra.mxu0 0.0
        %778 = vmatprep.subr.mxu0 0.0
        %779 = vmatpush1.msra.mxu0 0.0
        %780 = vmatprep.subr.mxu0 0.0
        %781 = vmatpush1.msra.mxu0 %v755
        %782 = vmatprep.subr.mxu0 0.0
        %783 = vmatpush1.msra.mxu0 %v752
        %784 = vmatprep.subr.mxu0 0.0
        %785 = vmatpush1.msra.mxu0 %v745
        %786 = vmatprep.subr.mxu0 0.0
        %787 = vmatpush1.msra.mxu0 %v742
        %788 = vmatprep.subr.mxu0 0.0
        %789 = vmatpush2.msra.mxu0 0.0
        %790 = vmatprep.subr.mxu0 0.0
        %791 = vmatpush2.msra.mxu0 0.0
        %792 = vmatprep.subr.mxu0 0.0
        %793 = vmatpush2.msra.mxu0 0.0
        %794 = vmatprep.subr.mxu0 0.0
        %795 = vmatpush2.msra.mxu0 0.0
        %796 = vmatprep.subr.mxu0 0.0
        %797 = vmatpush2.msra.mxu0 0.0
        %798 = vmatprep.subr.mxu0 0.0
        %799 = vmatpush2.msra.mxu0 0.0
        %800 = vmatprep.subr.mxu0 0.0
        %801 = vmatpush2.msra.mxu0 0.0
        %802 = vmatprep.subr.mxu0 0.0
        %803 = vmatpush2.msra.mxu0 0.0
        %804 = vmatprep.subr.mxu0 0.0
        %805 = vmatpush2.msra.mxu0 0.0
        %806 = vmatprep.subr.mxu0 0.0
        %807 = vmatpush2.msra.mxu0 0.0
        %808 = vmatprep.subr.mxu0 0.0
        %809 = vmatpush2.msra.mxu0 0.0
        %810 = vmatprep.subr.mxu0 0.0
        %811 = vmatpush2.msra.mxu0 0.0
        %812 = vmatprep.subr.mxu0 0.0
        %813 = vmatpush2.msra.mxu0 0.0
        %814 = vmatprep.subr.mxu0 0.0
        %815 = vmatpush2.msra.mxu0 0.0
        %816 = vmatprep.subr.mxu0 0.0
        %817 = vmatpush2.msra.mxu0 0.0
        %818 = vmatprep.subr.mxu0 0.0
        %819 = vmatpush2.msra.mxu0 0.0
        %820 = vmatprep.mubr.f32.mxu0 0.0
        %821 = vmatmul.mubr.f32.gmra.mxu0 %v596
        %v822 = vpop.f32.mrf.mxu0
        %v823 = vadd.f32 0.0, %v822
        %v824 = vpop.f32.mrf.mxu0
        %825 = vmatprep.mubr.f32.mxu0 0.0
        %826 = vmatmul.mubr.f32.gmra.mxu0 %v599
        %v827 = vpop.f32.mrf.mxu0
        %v828 = vadd.f32 0.0, %v827
        %v829 = vpop.f32.mrf.mxu0
        %830 = vmatprep.mubr.f32.mxu0 0.0
        %831 = vmatmul.mubr.f32.gmra.mxu0 %v602
        %v832 = vpop.f32.mrf.mxu0
        %v833 = vadd.f32 0.0, %v832
        %v834 = vpop.f32.mrf.mxu0
        %835 = vmatprep.mubr.f32.mxu0 0.0
        %836 = vmatmul.mubr.f32.gmra.mxu0 %v605
        %v837 = vpop.f32.mrf.mxu0
        %v838 = vadd.f32 0.0, %v837
        %v839 = vpop.f32.mrf.mxu0
        %840 = vdwg.mxu0
        %v841 = vmul.f32 %v823, 0.001953125
        %v842 = vmul.f32 %v828, 0.001953125
        %v843 = vmul.f32 %v833, 0.001953125
        %v844 = vmul.f32 %v838, 0.001953125
        %v845 = vmul.f32 %v841, %v841
        %v846 = vmul.f32 %v842, %v842
        %v847 = vsub.f32 %v843, %v845
        %v848 = vsub.f32 %v844, %v846
        %v849 = vmax.f32 %v847, 0.0
        %v850 = vmax.f32 %v848, 0.0
        %v851 = vadd.f32 %v849, 1e-05
        %v852 = vadd.f32 %v850, 1e-05
        %v853 = vrsqrt.pop %v851
        %v854 = vrsqrt.pop %v852
        %857 = vrot.lane.b32.xlu0 %v853, 1
        %v858 = vpop.permute.xlu0 %857
        %859 = vrot.lane.b32.xlu0 %v854, 1
        %v860 = vpop.permute.xlu0 %859
        %v863 = vmul.f32 %v570, %v858
        %v864 = vmul.f32 %v571, %v860
        %867 = vrot.lane.b32.xlu0 %v863, 127
        %v868 = vpop.permute.xlu0 %867
        %869 = vrot.lane.b32.xlu0 %v864, 127
        %v870 = vpop.permute.xlu0 %869
        %v873 = vmul.f32 %v841, %v868
        %v874 = vmul.f32 %v842, %v870
        %877 = vrot.lane.b32.xlu0 %v873, 1
        %v878 = vpop.permute.xlu0 %877
        %879 = vrot.lane.b32.xlu0 %v874, 1
        %v880 = vpop.permute.xlu0 %879
        %v883 = vsub.f32 %v572, %v878
        %v884 = vsub.f32 %v573, %v880
        %885 = vset.pattern.permute.xlu0 1
        %886 = vperm.xlu0 %885, %v863
        %v887 = vpop.permute.xlu0 %886
        %889 = vset.pattern.permute.xlu0 1
        %890 = vperm.xlu0 %889, %v864
        %v891 = vpop.permute.xlu0 %890
        %v893 = vmul.f32 %v548, %v887
        %v894 = vmul.f32 %v550, %v887
        %v895 = vmul.f32 %v554, %v891
        %v896 = vmul.f32 %v556, %v891
        %898 = vset.pattern.permute.xlu0 1
        %899 = vperm.xlu0 %898, %v883
        %v900 = vpop.permute.xlu0 %899
        %903 = vset.pattern.permute.xlu0 1
        %904 = vperm.xlu0 %903, %v884
        %v905 = vpop.permute.xlu0 %904
        %v907 = vadd.f32 %v893, %v900
        %v908 = vadd.f32 %v894, %v900
        %v909 = vadd.f32 %v895, %v905
        %v910 = vadd.f32 %v896, %v905
        %v911 = vadd.f32 %v560, %v562
        %912 = vadd.xlane.f32.xlu0 %v911
        %v913 = vpop.xlane.xlu0 %912
        %v914 = vadd.f32 %v566, %v568
        %915 = vadd.xlane.f32.xlu0 %v914
        %v916 = vpop.xlane.xlu0 %915
        %v917 = vmul.f32 %v560, %v560
        %v918 = vmul.f32 %v562, %v562
        %v919 = vmul.f32 %v566, %v566
        %v920 = vmul.f32 %v568, %v568
        %v921 = vadd.f32 %v917, %v918
        %922 = vadd.xlane.f32.xlu0 %v921
        %v923 = vpop.xlane.xlu0 %922
        %v924 = vadd.f32 %v919, %v920
        %925 = vadd.xlane.f32.xlu0 %v924
        %v926 = vpop.xlane.xlu0 %925
        %927 = vmatprep.subr.mxu0 0.0
        %928 = vmatpush1.msra.mxu0 0.0
        %929 = vmatprep.subr.mxu0 0.0
        %930 = vmatpush1.msra.mxu0 0.0
        %931 = vmatprep.subr.mxu0 0.0
        %932 = vmatpush1.msra.mxu0 0.0
        %933 = vmatprep.subr.mxu0 0.0
        %934 = vmatpush1.msra.mxu0 0.0
        %935 = vmatprep.subr.mxu0 0.0
        %936 = vmatpush1.msra.mxu0 0.0
        %937 = vmatprep.subr.mxu0 0.0
        %938 = vmatpush1.msra.mxu0 0.0
        %939 = vmatprep.subr.mxu0 0.0
        %940 = vmatpush1.msra.mxu0 0.0
        %941 = vmatprep.subr.mxu0 0.0
        %942 = vmatpush1.msra.mxu0 0.0
        %943 = vmatprep.subr.mxu0 0.0
        %944 = vmatpush1.msra.mxu0 0.0
        %945 = vmatprep.subr.mxu0 0.0
        %946 = vmatpush1.msra.mxu0 0.0
        %947 = vmatprep.subr.mxu0 0.0
        %948 = vmatpush1.msra.mxu0 0.0
        %949 = vmatprep.subr.mxu0 0.0
        %950 = vmatpush1.msra.mxu0 0.0
        %951 = vmatprep.subr.mxu0 0.0
        %952 = vmatpush1.msra.mxu0 %v926
        %953 = vmatprep.subr.mxu0 0.0
        %954 = vmatpush1.msra.mxu0 %v923
        %955 = vmatprep.subr.mxu0 0.0
        %956 = vmatpush1.msra.mxu0 %v916
        %957 = vmatprep.subr.mxu0 0.0
        %958 = vmatpush1.msra.mxu0 %v913
        %959 = vmatprep.subr.mxu0 0.0
        %960 = vmatpush2.msra.mxu0 0.0
        %961 = vmatprep.subr.mxu0 0.0
        %962 = vmatpush2.msra.mxu0 0.0
        %963 = vmatprep.subr.mxu0 0.0
        %964 = vmatpush2.msra.mxu0 0.0
        %965 = vmatprep.subr.mxu0 0.0
        %966 = vmatpush2.msra.mxu0 0.0
        %967 = vmatprep.subr.mxu0 0.0
        %968 = vmatpush2.msra.mxu0 0.0
        %969 = vmatprep.subr.mxu0 0.0
        %970 = vmatpush2.msra.mxu0 0.0
        %971 = vmatprep.subr.mxu0 0.0
        %972 = vmatpush2.msra.mxu0 0.0
        %973 = vmatprep.subr.mxu0 0.0
        %974 = vmatpush2.msra.mxu0 0.0
        %975 = vmatprep.subr.mxu0 0.0
        %976 = vmatpush2.msra.mxu0 0.0
        %977 = vmatprep.subr.mxu0 0.0
        %978 = vmatpush2.msra.mxu0 0.0
        %979 = vmatprep.subr.mxu0 0.0
        %980 = vmatpush2.msra.mxu0 0.0
        %981 = vmatprep.subr.mxu0 0.0
        %982 = vmatpush2.msra.mxu0 0.0
        %983 = vmatprep.subr.mxu0 0.0
        %984 = vmatpush2.msra.mxu0 0.0
        %985 = vmatprep.subr.mxu0 0.0
        %986 = vmatpush2.msra.mxu0 0.0
        %987 = vmatprep.subr.mxu0 0.0
        %988 = vmatpush2.msra.mxu0 0.0
        %989 = vmatprep.subr.mxu0 0.0
        %990 = vmatpush2.msra.mxu0 0.0
        %991 = vmatprep.mubr.f32.mxu0 0.0
        %992 = vmatmul.mubr.f32.gmra.mxu0 %v596
        %v993 = vpop.f32.mrf.mxu0
        %v994 = vadd.f32 0.0, %v993
        %v995 = vpop.f32.mrf.mxu0
        %996 = vmatprep.mubr.f32.mxu0 0.0
        %997 = vmatmul.mubr.f32.gmra.mxu0 %v599
        %v998 = vpop.f32.mrf.mxu0
        %v999 = vadd.f32 0.0, %v998
        %v1000 = vpop.f32.mrf.mxu0
        %1001 = vmatprep.mubr.f32.mxu0 0.0
        %1002 = vmatmul.mubr.f32.gmra.mxu0 %v602
        %v1003 = vpop.f32.mrf.mxu0
        %v1004 = vadd.f32 0.0, %v1003
        %v1005 = vpop.f32.mrf.mxu0
        %1006 = vmatprep.mubr.f32.mxu0 0.0
        %1007 = vmatmul.mubr.f32.gmra.mxu0 %v605
        %v1008 = vpop.f32.mrf.mxu0
        %v1009 = vadd.f32 0.0, %v1008
        %v1010 = vpop.f32.mrf.mxu0
        %1011 = vdwg.mxu0
        %v1012 = vmul.f32 %v994, 0.001953125
        %v1013 = vmul.f32 %v999, 0.001953125
        %v1014 = vmul.f32 %v1004, 0.001953125
        %v1015 = vmul.f32 %v1009, 0.001953125
        %v1016 = vmul.f32 %v1012, %v1012
        %v1017 = vmul.f32 %v1013, %v1013
        %v1018 = vsub.f32 %v1014, %v1016
        %v1019 = vsub.f32 %v1015, %v1017
        %v1020 = vmax.f32 %v1018, 0.0
        %v1021 = vmax.f32 %v1019, 0.0
        %v1022 = vadd.f32 %v1020, 1e-05
        %v1023 = vadd.f32 %v1021, 1e-05
        %v1024 = vrsqrt.pop %v1022
        %v1025 = vrsqrt.pop %v1023
        %1028 = vrot.lane.b32.xlu0 %v1024, 6
        %v1029 = vpop.permute.xlu0 %1028
        %1030 = vrot.lane.b32.xlu0 %v1025, 6
        %v1031 = vpop.permute.xlu0 %1030
        %v1034 = vmul.f32 %v570, %v1029
        %v1035 = vmul.f32 %v571, %v1031
        %1038 = vrot.lane.b32.xlu0 %v1034, 122
        %v1039 = vpop.permute.xlu0 %1038
        %1040 = vrot.lane.b32.xlu0 %v1035, 122
        %v1041 = vpop.permute.xlu0 %1040
        %v1044 = vmul.f32 %v1012, %v1039
        %v1045 = vmul.f32 %v1013, %v1041
        %1048 = vrot.lane.b32.xlu0 %v1044, 6
        %v1049 = vpop.permute.xlu0 %1048
        %1050 = vrot.lane.b32.xlu0 %v1045, 6
        %v1051 = vpop.permute.xlu0 %1050
        %v1054 = vsub.f32 %v572, %v1049
        %v1055 = vsub.f32 %v573, %v1051
        %1056 = vset.pattern.permute.xlu0 6
        %1057 = vperm.xlu0 %1056, %v1034
        %v1058 = vpop.permute.xlu0 %1057
        %1060 = vset.pattern.permute.xlu0 6
        %1061 = vperm.xlu0 %1060, %v1035
        %v1062 = vpop.permute.xlu0 %1061
        %v1064 = vmul.f32 %v560, %v1058
        %v1065 = vmul.f32 %v562, %v1058
        %v1066 = vmul.f32 %v566, %v1062
        %v1067 = vmul.f32 %v568, %v1062
        %1069 = vset.pattern.permute.xlu0 6
        %1070 = vperm.xlu0 %1069, %v1054
        %v1071 = vpop.permute.xlu0 %1070
        %1074 = vset.pattern.permute.xlu0 6
        %1075 = vperm.xlu0 %1074, %v1055
        %v1076 = vpop.permute.xlu0 %1075
        %v1078 = vadd.f32 %v1064, %v1071
        %v1079 = vadd.f32 %v1065, %v1071
        %v1080 = vadd.f32 %v1066, %v1076
        %v1081 = vadd.f32 %v1067, %v1076
        %1082 = vrot.lane.b32.xlu0 %v907, 1
        %v1083 = vpop.permute.xlu0 %1082
        %1084 = vrot.lane.b32.xlu0 %v909, 1
        %v1085 = vpop.permute.xlu0 %1084
        %1086 = vrot.lane.b32.xlu0 %v908, 1
        %v1087 = vpop.permute.xlu0 %1086
        %1088 = vrot.lane.b32.xlu0 %v910, 1
        %v1089 = vpop.permute.xlu0 %1088
        %v1090 = vlaneseq
        %v1091 = vand.u32 %v1090, 127
        %vm1092 = vcmp.lt.s32.totalorder %v1091, 1
        %v1093 = vsel %vm1092, %v1083, %v1087
        %v1094 = vsel %vm1092, %v1085, %v1089
        %v1095 = vsel %vm1092, %v1087, %v1083
        %v1096 = vsel %vm1092, %v1089, %v1085
        %v1097 = vld [vmem:[%s8] ss:$8 sm:$0x3]
        %v1099 = vlaneseq
        %v1100 = vshrl.u32 %v1099, 7
        %v1101 = vsub.s32 0, %v1100
        %v1102 = vrot.slane %v1097, %v1101
        %v1103 = vlaneseq
        %v1104 = vshrl.u32 %v1103, 7
        %v1105 = vsub.s32 1, %v1104
        %v1106 = vrot.slane %v1097, %v1105
        %v1109 = vmul.f32 %v1095, %v1102
        %v1110 = vmul.f32 %v1093, %v1106
        %v1111 = vmul.f32 %v1096, %v1102
        %v1112 = vmul.f32 %v1094, %v1106
        %1113 = vrot.lane.b32.xlu0 %v907, 127
        %v1114 = vpop.permute.xlu0 %1113
        %1115 = vrot.lane.b32.xlu0 %v909, 127
        %v1116 = vpop.permute.xlu0 %1115
        %1117 = vrot.lane.b32.xlu0 %v908, 127
        %v1118 = vpop.permute.xlu0 %1117
        %1119 = vrot.lane.b32.xlu0 %v910, 127
        %v1120 = vpop.permute.xlu0 %1119
        %vm1121 = vcmp.lt.s32.totalorder %v1091, 127
        %v1122 = vsel %vm1121, %v1114, %v1118
        %v1123 = vsel %vm1121, %v1116, %v1120
        %v1124 = vsel %vm1121, %v1118, %v1114
        %v1125 = vsel %vm1121, %v1120, %v1116
        %s1126 = scalar_lea.vmem %s8, 1
        %v1127 = vld [vmem:[%s1126] ss:$8 sm:$0x3]
        %v1129 = vlaneseq
        %v1130 = vshrl.u32 %v1129, 7
        %v1131 = vsub.s32 0, %v1130
        %v1132 = vrot.slane %v1127, %v1131
        %v1133 = vlaneseq
        %v1134 = vshrl.u32 %v1133, 7
        %v1135 = vsub.s32 1, %v1134
        %v1136 = vrot.slane %v1127, %v1135
        %v1139 = vmul.f32 %v1122, %v1132
        %v1140 = vmul.f32 %v1124, %v1136
        %v1141 = vmul.f32 %v1123, %v1132
        %v1142 = vmul.f32 %v1125, %v1136
        %v1143 = vld [vmem:[%s2] sm:$0xff]
        %v1144 = vld [vmem:[%s2 + $0x8] sm:$0xff]
        %vm1145 = vcmask 392192
        %v1147 = vsel %vm1145, %v1143, 0
        %v1150 = vsel %vm1145, %v1144, 0
        %1152 = vmatprep.subr.mxu0 0.0
        %1153 = vmatpush1.msra.mxu0 0.0
        %1154 = vmatprep.subr.mxu0 0.0
        %1155 = vmatpush1.msra.mxu0 0.0
        %1156 = vmatprep.subr.mxu0 0.0
        %1157 = vmatpush1.msra.mxu0 0.0
        %1158 = vmatprep.subr.mxu0 0.0
        %1159 = vmatpush1.msra.mxu0 0.0
        %1160 = vmatprep.subr.mxu0 0.0
        %1161 = vmatpush1.msra.mxu0 0.0
        %1162 = vmatprep.subr.mxu0 0.0
        %1163 = vmatpush1.msra.mxu0 0.0
        %1164 = vmatprep.subr.mxu0 0.0
        %1165 = vmatpush1.msra.mxu0 0.0
        %1166 = vmatprep.subr.mxu0 0.0
        %1167 = vmatpush1.msra.mxu0 0.0
        %1168 = vmatprep.subr.mxu0 0.0
        %1169 = vmatpush1.msra.mxu0 0.0
        %1170 = vmatprep.subr.mxu0 0.0
        %1171 = vmatpush1.msra.mxu0 0.0
        %1172 = vmatprep.subr.mxu0 %v1142
        %1173 = vmatpush1.msra.mxu0 %v1141
        %1174 = vmatprep.subr.mxu0 %v1140
        %1175 = vmatpush1.msra.mxu0 %v1139
        %1176 = vmatprep.subr.mxu0 %v910
        %1177 = vmatpush1.msra.mxu0 %v909
        %1178 = vmatprep.subr.mxu0 %v908
        %1179 = vmatpush1.msra.mxu0 %v907
        %1180 = vmatprep.subr.mxu0 %v1112
        %1181 = vmatpush1.msra.mxu0 %v1111
        %1182 = vmatprep.subr.mxu0 %v1110
        %1183 = vmatpush1.msra.mxu0 %v1109
        %1184 = vmatprep.subr.mxu0 0.0
        %1185 = vmatpush2.msra.mxu0 0.0
        %1186 = vmatprep.subr.mxu0 0.0
        %1187 = vmatpush2.msra.mxu0 0.0
        %1188 = vmatprep.subr.mxu0 0.0
        %1189 = vmatpush2.msra.mxu0 0.0
        %1190 = vmatprep.subr.mxu0 0.0
        %1191 = vmatpush2.msra.mxu0 0.0
        %1192 = vmatprep.subr.mxu0 0.0
        %1193 = vmatpush2.msra.mxu0 0.0
        %1194 = vmatprep.subr.mxu0 0.0
        %1195 = vmatpush2.msra.mxu0 0.0
        %1196 = vmatprep.subr.mxu0 0.0
        %1197 = vmatpush2.msra.mxu0 0.0
        %1198 = vmatprep.subr.mxu0 0.0
        %1199 = vmatpush2.msra.mxu0 0.0
        %1200 = vmatprep.subr.mxu0 0.0
        %1201 = vmatpush2.msra.mxu0 0.0
        %1202 = vmatprep.subr.mxu0 0.0
        %1203 = vmatpush2.msra.mxu0 0.0
        %1204 = vmatprep.subr.mxu0 0.0
        %1205 = vmatpush2.msra.mxu0 0.0
        %1206 = vmatprep.subr.mxu0 0.0
        %1207 = vmatpush2.msra.mxu0 0.0
        %1208 = vmatprep.subr.mxu0 0.0
        %1209 = vmatpush2.msra.mxu0 0.0
        %1210 = vmatprep.subr.mxu0 0.0
        %1211 = vmatpush2.msra.mxu0 0.0
        %1212 = vmatprep.subr.mxu0 0.0
        %1213 = vmatpush2.msra.mxu0 0.0
        %1214 = vmatprep.subr.mxu0 0.0
        %1215 = vmatpush2.msra.mxu0 0.0
        %1216 = vmatprep.mubr.f32.mxu0 0.0
        %1217 = vmatmul.mubr.f32.gmra.mxu0 %v1147
        %v1218 = vpop.f32.mrf.mxu0
        %v1219 = vadd.f32 0.0, %v1218
        %v1220 = vpop.f32.mrf.mxu0
        %v1221 = vadd.f32 0.0, %v1220
        %1222 = vmatprep.mubr.f32.mxu0 0.0
        %1223 = vmatmul.mubr.f32.gmra.mxu0 %v1150
        %v1224 = vpop.f32.mrf.mxu0
        %v1225 = vadd.f32 0.0, %v1224
        %v1226 = vpop.f32.mrf.mxu0
        %v1227 = vadd.f32 0.0, %v1226
        %1228 = vdwg.mxu0
        %v1229 = vadd.f32 %v1219, %v1221
        %1230 = vadd.xlane.f32.xlu0 %v1229
        %v1231 = vpop.xlane.xlu0 %1230
        %v1232 = vadd.f32 %v1225, %v1227
        %1233 = vadd.xlane.f32.xlu0 %v1232
        %v1234 = vpop.xlane.xlu0 %1233
        %v1235 = vmul.f32 %v1219, %v1219
        %v1236 = vmul.f32 %v1221, %v1221
        %v1237 = vmul.f32 %v1225, %v1225
        %v1238 = vmul.f32 %v1227, %v1227
        %v1239 = vadd.f32 %v1235, %v1236
        %1240 = vadd.xlane.f32.xlu0 %v1239
        %v1241 = vpop.xlane.xlu0 %1240
        %v1242 = vadd.f32 %v1237, %v1238
        %1243 = vadd.xlane.f32.xlu0 %v1242
        %v1244 = vpop.xlane.xlu0 %1243
        %1245 = vmatprep.subr.mxu0 0.0
        %1246 = vmatpush1.msra.mxu0 0.0
        %1247 = vmatprep.subr.mxu0 0.0
        %1248 = vmatpush1.msra.mxu0 0.0
        %1249 = vmatprep.subr.mxu0 0.0
        %1250 = vmatpush1.msra.mxu0 0.0
        %1251 = vmatprep.subr.mxu0 0.0
        %1252 = vmatpush1.msra.mxu0 0.0
        %1253 = vmatprep.subr.mxu0 0.0
        %1254 = vmatpush1.msra.mxu0 0.0
        %1255 = vmatprep.subr.mxu0 0.0
        %1256 = vmatpush1.msra.mxu0 0.0
        %1257 = vmatprep.subr.mxu0 0.0
        %1258 = vmatpush1.msra.mxu0 0.0
        %1259 = vmatprep.subr.mxu0 0.0
        %1260 = vmatpush1.msra.mxu0 0.0
        %1261 = vmatprep.subr.mxu0 0.0
        %1262 = vmatpush1.msra.mxu0 0.0
        %1263 = vmatprep.subr.mxu0 0.0
        %1264 = vmatpush1.msra.mxu0 0.0
        %1265 = vmatprep.subr.mxu0 0.0
        %1266 = vmatpush1.msra.mxu0 0.0
        %1267 = vmatprep.subr.mxu0 0.0
        %1268 = vmatpush1.msra.mxu0 0.0
        %1269 = vmatprep.subr.mxu0 0.0
        %1270 = vmatpush1.msra.mxu0 %v1244
        %1271 = vmatprep.subr.mxu0 0.0
        %1272 = vmatpush1.msra.mxu0 %v1241
        %1273 = vmatprep.subr.mxu0 0.0
        %1274 = vmatpush1.msra.mxu0 %v1234
        %1275 = vmatprep.subr.mxu0 0.0
        %1276 = vmatpush1.msra.mxu0 %v1231
        %1277 = vmatprep.subr.mxu0 0.0
        %1278 = vmatpush2.msra.mxu0 0.0
        %1279 = vmatprep.subr.mxu0 0.0
        %1280 = vmatpush2.msra.mxu0 0.0
        %1281 = vmatprep.subr.mxu0 0.0
        %1282 = vmatpush2.msra.mxu0 0.0
        %1283 = vmatprep.subr.mxu0 0.0
        %1284 = vmatpush2.msra.mxu0 0.0
        %1285 = vmatprep.subr.mxu0 0.0
        %1286 = vmatpush2.msra.mxu0 0.0
        %1287 = vmatprep.subr.mxu0 0.0
        %1288 = vmatpush2.msra.mxu0 0.0
        %1289 = vmatprep.subr.mxu0 0.0
        %1290 = vmatpush2.msra.mxu0 0.0
        %1291 = vmatprep.subr.mxu0 0.0
        %1292 = vmatpush2.msra.mxu0 0.0
        %1293 = vmatprep.subr.mxu0 0.0
        %1294 = vmatpush2.msra.mxu0 0.0
        %1295 = vmatprep.subr.mxu0 0.0
        %1296 = vmatpush2.msra.mxu0 0.0
        %1297 = vmatprep.subr.mxu0 0.0
        %1298 = vmatpush2.msra.mxu0 0.0
        %1299 = vmatprep.subr.mxu0 0.0
        %1300 = vmatpush2.msra.mxu0 0.0
        %1301 = vmatprep.subr.mxu0 0.0
        %1302 = vmatpush2.msra.mxu0 0.0
        %1303 = vmatprep.subr.mxu0 0.0
        %1304 = vmatpush2.msra.mxu0 0.0
        %1305 = vmatprep.subr.mxu0 0.0
        %1306 = vmatpush2.msra.mxu0 0.0
        %1307 = vmatprep.subr.mxu0 0.0
        %1308 = vmatpush2.msra.mxu0 0.0
        %1309 = vmatprep.mubr.f32.mxu0 0.0
        %1310 = vmatmul.mubr.f32.gmra.mxu0 %v596
        %v1311 = vpop.f32.mrf.mxu0
        %v1312 = vadd.f32 0.0, %v1311
        %v1313 = vpop.f32.mrf.mxu0
        %1314 = vmatprep.mubr.f32.mxu0 0.0
        %1315 = vmatmul.mubr.f32.gmra.mxu0 %v599
        %v1316 = vpop.f32.mrf.mxu0
        %v1317 = vadd.f32 0.0, %v1316
        %v1318 = vpop.f32.mrf.mxu0
        %1319 = vmatprep.mubr.f32.mxu0 0.0
        %1320 = vmatmul.mubr.f32.gmra.mxu0 %v602
        %v1321 = vpop.f32.mrf.mxu0
        %v1322 = vadd.f32 0.0, %v1321
        %v1323 = vpop.f32.mrf.mxu0
        %1324 = vmatprep.mubr.f32.mxu0 0.0
        %1325 = vmatmul.mubr.f32.gmra.mxu0 %v605
        %v1326 = vpop.f32.mrf.mxu0
        %v1327 = vadd.f32 0.0, %v1326
        %v1328 = vpop.f32.mrf.mxu0
        %1329 = vdwg.mxu0
        %v1330 = vmul.f32 %v1312, 0.001953125
        %v1331 = vmul.f32 %v1317, 0.001953125
        %v1332 = vmul.f32 %v1322, 0.001953125
        %v1333 = vmul.f32 %v1327, 0.001953125
        %v1334 = vmul.f32 %v1330, %v1330
        %v1335 = vmul.f32 %v1331, %v1331
        %v1336 = vsub.f32 %v1332, %v1334
        %v1337 = vsub.f32 %v1333, %v1335
        %v1338 = vmax.f32 %v1336, 0.0
        %v1339 = vmax.f32 %v1337, 0.0
        %v1340 = vadd.f32 %v1338, 1e-05
        %v1341 = vadd.f32 %v1339, 1e-05
        %v1342 = vrsqrt.pop %v1340
        %v1343 = vrsqrt.pop %v1341
        %1346 = vrot.lane.b32.xlu0 %v1342, 2
        %v1347 = vpop.permute.xlu0 %1346
        %1348 = vrot.lane.b32.xlu0 %v1343, 2
        %v1349 = vpop.permute.xlu0 %1348
        %v1352 = vmul.f32 %v570, %v1347
        %v1353 = vmul.f32 %v571, %v1349
        %1356 = vrot.lane.b32.xlu0 %v1352, 126
        %v1357 = vpop.permute.xlu0 %1356
        %1358 = vrot.lane.b32.xlu0 %v1353, 126
        %v1359 = vpop.permute.xlu0 %1358
        %v1362 = vmul.f32 %v1330, %v1357
        %v1363 = vmul.f32 %v1331, %v1359
        %1366 = vrot.lane.b32.xlu0 %v1362, 2
        %v1367 = vpop.permute.xlu0 %1366
        %1368 = vrot.lane.b32.xlu0 %v1363, 2
        %v1369 = vpop.permute.xlu0 %1368
        %v1372 = vsub.f32 %v572, %v1367
        %v1373 = vsub.f32 %v573, %v1369
        %1374 = vset.pattern.permute.xlu0 2
        %1375 = vperm.xlu0 %1374, %v1352
        %v1376 = vpop.permute.xlu0 %1375
        %1378 = vset.pattern.permute.xlu0 2
        %1379 = vperm.xlu0 %1378, %v1353
        %v1380 = vpop.permute.xlu0 %1379
        %v1382 = vmul.f32 %v1219, %v1376
        %v1383 = vmul.f32 %v1221, %v1376
        %v1384 = vmul.f32 %v1225, %v1380
        %v1385 = vmul.f32 %v1227, %v1380
        %1387 = vset.pattern.permute.xlu0 2
        %1388 = vperm.xlu0 %1387, %v1372
        %v1389 = vpop.permute.xlu0 %1388
        %1392 = vset.pattern.permute.xlu0 2
        %1393 = vperm.xlu0 %1392, %v1373
        %v1394 = vpop.permute.xlu0 %1393
        %v1396 = vadd.f32 %v1382, %v1389
        %v1397 = vadd.f32 %v1383, %v1389
        %v1398 = vadd.f32 %v1384, %v1394
        %v1399 = vadd.f32 %v1385, %v1394
        %1400 = vrot.lane.b32.xlu0 %v1396, 16
        %v1401 = vpop.permute.xlu0 %1400
        %1402 = vrot.lane.b32.xlu0 %v1398, 16
        %v1403 = vpop.permute.xlu0 %1402
        %1404 = vrot.lane.b32.xlu0 %v1397, 16
        %v1405 = vpop.permute.xlu0 %1404
        %1406 = vrot.lane.b32.xlu0 %v1399, 16
        %v1407 = vpop.permute.xlu0 %1406
        %vm1408 = vcmp.lt.s32.totalorder %v1091, 16
        %v1409 = vsel %vm1408, %v1401, %v1405
        %v1410 = vsel %vm1408, %v1403, %v1407
        %v1411 = vsel %vm1408, %v1405, %v1401
        %v1412 = vsel %vm1408, %v1407, %v1403
        %s1413 = scalar_lea.vmem %s8, 2
        %v1414 = vld [vmem:[%s1413] ss:$8 sm:$0x3]
        %v1416 = vlaneseq
        %v1417 = vshrl.u32 %v1416, 7
        %v1418 = vsub.s32 0, %v1417
        %v1419 = vrot.slane %v1414, %v1418
        %v1420 = vlaneseq
        %v1421 = vshrl.u32 %v1420, 7
        %v1422 = vsub.s32 1, %v1421
        %v1423 = vrot.slane %v1414, %v1422
        %v1426 = vmul.f32 %v1411, %v1419
        %v1427 = vmul.f32 %v1409, %v1423
        %v1428 = vmul.f32 %v1412, %v1419
        %v1429 = vmul.f32 %v1410, %v1423
        %1430 = vrot.lane.b32.xlu0 %v1396, 112
        %v1431 = vpop.permute.xlu0 %1430
        %1432 = vrot.lane.b32.xlu0 %v1398, 112
        %v1433 = vpop.permute.xlu0 %1432
        %1434 = vrot.lane.b32.xlu0 %v1397, 112
        %v1435 = vpop.permute.xlu0 %1434
        %1436 = vrot.lane.b32.xlu0 %v1399, 112
        %v1437 = vpop.permute.xlu0 %1436
        %vm1438 = vcmp.lt.s32.totalorder %v1091, 112
        %v1439 = vsel %vm1438, %v1431, %v1435
        %v1440 = vsel %vm1438, %v1433, %v1437
        %v1441 = vsel %vm1438, %v1435, %v1431
        %v1442 = vsel %vm1438, %v1437, %v1433
        %s1443 = scalar_lea.vmem %s8, 3
        %v1444 = vld [vmem:[%s1443] ss:$8 sm:$0x3]
        %v1446 = vlaneseq
        %v1447 = vshrl.u32 %v1446, 7
        %v1448 = vsub.s32 0, %v1447
        %v1449 = vrot.slane %v1444, %v1448
        %v1450 = vlaneseq
        %v1451 = vshrl.u32 %v1450, 7
        %v1452 = vsub.s32 1, %v1451
        %v1453 = vrot.slane %v1444, %v1452
        %v1456 = vmul.f32 %v1439, %v1449
        %v1457 = vmul.f32 %v1441, %v1453
        %v1458 = vmul.f32 %v1440, %v1449
        %v1459 = vmul.f32 %v1442, %v1453
        %v1460 = vld [vmem:[%s3] sm:$0xff]
        %v1461 = vld [vmem:[%s3 + $0x8] sm:$0xff]
        %v1463 = vsel %vm1145, %v1460, 0
        %v1466 = vsel %vm1145, %v1461, 0
        %1468 = vmatprep.subr.mxu0 0.0
        %1469 = vmatpush1.msra.mxu0 0.0
        %1470 = vmatprep.subr.mxu0 0.0
        %1471 = vmatpush1.msra.mxu0 0.0
        %1472 = vmatprep.subr.mxu0 0.0
        %1473 = vmatpush1.msra.mxu0 0.0
        %1474 = vmatprep.subr.mxu0 0.0
        %1475 = vmatpush1.msra.mxu0 0.0
        %1476 = vmatprep.subr.mxu0 0.0
        %1477 = vmatpush1.msra.mxu0 0.0
        %1478 = vmatprep.subr.mxu0 0.0
        %1479 = vmatpush1.msra.mxu0 0.0
        %1480 = vmatprep.subr.mxu0 0.0
        %1481 = vmatpush1.msra.mxu0 0.0
        %1482 = vmatprep.subr.mxu0 0.0
        %1483 = vmatpush1.msra.mxu0 0.0
        %1484 = vmatprep.subr.mxu0 0.0
        %1485 = vmatpush1.msra.mxu0 0.0
        %1486 = vmatprep.subr.mxu0 0.0
        %1487 = vmatpush1.msra.mxu0 0.0
        %1488 = vmatprep.subr.mxu0 %v1459
        %1489 = vmatpush1.msra.mxu0 %v1458
        %1490 = vmatprep.subr.mxu0 %v1457
        %1491 = vmatpush1.msra.mxu0 %v1456
        %1492 = vmatprep.subr.mxu0 %v1399
        %1493 = vmatpush1.msra.mxu0 %v1398
        %1494 = vmatprep.subr.mxu0 %v1397
        %1495 = vmatpush1.msra.mxu0 %v1396
        %1496 = vmatprep.subr.mxu0 %v1429
        %1497 = vmatpush1.msra.mxu0 %v1428
        %1498 = vmatprep.subr.mxu0 %v1427
        %1499 = vmatpush1.msra.mxu0 %v1426
        %1500 = vmatprep.subr.mxu0 0.0
        %1501 = vmatpush2.msra.mxu0 0.0
        %1502 = vmatprep.subr.mxu0 0.0
        %1503 = vmatpush2.msra.mxu0 0.0
        %1504 = vmatprep.subr.mxu0 0.0
        %1505 = vmatpush2.msra.mxu0 0.0
        %1506 = vmatprep.subr.mxu0 0.0
        %1507 = vmatpush2.msra.mxu0 0.0
        %1508 = vmatprep.subr.mxu0 0.0
        %1509 = vmatpush2.msra.mxu0 0.0
        %1510 = vmatprep.subr.mxu0 0.0
        %1511 = vmatpush2.msra.mxu0 0.0
        %1512 = vmatprep.subr.mxu0 0.0
        %1513 = vmatpush2.msra.mxu0 0.0
        %1514 = vmatprep.subr.mxu0 0.0
        %1515 = vmatpush2.msra.mxu0 0.0
        %1516 = vmatprep.subr.mxu0 0.0
        %1517 = vmatpush2.msra.mxu0 0.0
        %1518 = vmatprep.subr.mxu0 0.0
        %1519 = vmatpush2.msra.mxu0 0.0
        %1520 = vmatprep.subr.mxu0 0.0
        %1521 = vmatpush2.msra.mxu0 0.0
        %1522 = vmatprep.subr.mxu0 0.0
        %1523 = vmatpush2.msra.mxu0 0.0
        %1524 = vmatprep.subr.mxu0 0.0
        %1525 = vmatpush2.msra.mxu0 0.0
        %1526 = vmatprep.subr.mxu0 0.0
        %1527 = vmatpush2.msra.mxu0 0.0
        %1528 = vmatprep.subr.mxu0 0.0
        %1529 = vmatpush2.msra.mxu0 0.0
        %1530 = vmatprep.subr.mxu0 0.0
        %1531 = vmatpush2.msra.mxu0 0.0
        %1532 = vmatprep.mubr.f32.mxu0 0.0
        %1533 = vmatmul.mubr.f32.gmra.mxu0 %v1463
        %v1534 = vpop.f32.mrf.mxu0
        %v1535 = vadd.f32 0.0, %v1534
        %v1536 = vpop.f32.mrf.mxu0
        %v1537 = vadd.f32 0.0, %v1536
        %1538 = vmatprep.mubr.f32.mxu0 0.0
        %1539 = vmatmul.mubr.f32.gmra.mxu0 %v1466
        %v1540 = vpop.f32.mrf.mxu0
        %v1541 = vadd.f32 0.0, %v1540
        %v1542 = vpop.f32.mrf.mxu0
        %v1543 = vadd.f32 0.0, %v1542
        %1544 = vdwg.mxu0
        %v1545 = vadd.f32 %v1535, %v1537
        %1546 = vadd.xlane.f32.xlu0 %v1545
        %v1547 = vpop.xlane.xlu0 %1546
        %v1548 = vadd.f32 %v1541, %v1543
        %1549 = vadd.xlane.f32.xlu0 %v1548
        %v1550 = vpop.xlane.xlu0 %1549
        %v1551 = vmul.f32 %v1535, %v1535
        %v1552 = vmul.f32 %v1537, %v1537
        %v1553 = vmul.f32 %v1541, %v1541
        %v1554 = vmul.f32 %v1543, %v1543
        %v1555 = vadd.f32 %v1551, %v1552
        %1556 = vadd.xlane.f32.xlu0 %v1555
        %v1557 = vpop.xlane.xlu0 %1556
        %v1558 = vadd.f32 %v1553, %v1554
        %1559 = vadd.xlane.f32.xlu0 %v1558
        %v1560 = vpop.xlane.xlu0 %1559
        %1561 = vmatprep.subr.mxu0 0.0
        %1562 = vmatpush1.msra.mxu0 0.0
        %1563 = vmatprep.subr.mxu0 0.0
        %1564 = vmatpush1.msra.mxu0 0.0
        %1565 = vmatprep.subr.mxu0 0.0
        %1566 = vmatpush1.msra.mxu0 0.0
        %1567 = vmatprep.subr.mxu0 0.0
        %1568 = vmatpush1.msra.mxu0 0.0
        %1569 = vmatprep.subr.mxu0 0.0
        %1570 = vmatpush1.msra.mxu0 0.0
        %1571 = vmatprep.subr.mxu0 0.0
        %1572 = vmatpush1.msra.mxu0 0.0
        %1573 = vmatprep.subr.mxu0 0.0
        %1574 = vmatpush1.msra.mxu0 0.0
        %1575 = vmatprep.subr.mxu0 0.0
        %1576 = vmatpush1.msra.mxu0 0.0
        %1577 = vmatprep.subr.mxu0 0.0
        %1578 = vmatpush1.msra.mxu0 0.0
        %1579 = vmatprep.subr.mxu0 0.0
        %1580 = vmatpush1.msra.mxu0 0.0
        %1581 = vmatprep.subr.mxu0 0.0
        %1582 = vmatpush1.msra.mxu0 0.0
        %1583 = vmatprep.subr.mxu0 0.0
        %1584 = vmatpush1.msra.mxu0 0.0
        %1585 = vmatprep.subr.mxu0 0.0
        %1586 = vmatpush1.msra.mxu0 %v1560
        %1587 = vmatprep.subr.mxu0 0.0
        %1588 = vmatpush1.msra.mxu0 %v1557
        %1589 = vmatprep.subr.mxu0 0.0
        %1590 = vmatpush1.msra.mxu0 %v1550
        %1591 = vmatprep.subr.mxu0 0.0
        %1592 = vmatpush1.msra.mxu0 %v1547
        %1593 = vmatprep.subr.mxu0 0.0
        %1594 = vmatpush2.msra.mxu0 0.0
        %1595 = vmatprep.subr.mxu0 0.0
        %1596 = vmatpush2.msra.mxu0 0.0
        %1597 = vmatprep.subr.mxu0 0.0
        %1598 = vmatpush2.msra.mxu0 0.0
        %1599 = vmatprep.subr.mxu0 0.0
        %1600 = vmatpush2.msra.mxu0 0.0
        %1601 = vmatprep.subr.mxu0 0.0
        %1602 = vmatpush2.msra.mxu0 0.0
        %1603 = vmatprep.subr.mxu0 0.0
        %1604 = vmatpush2.msra.mxu0 0.0
        %1605 = vmatprep.subr.mxu0 0.0
        %1606 = vmatpush2.msra.mxu0 0.0
        %1607 = vmatprep.subr.mxu0 0.0
        %1608 = vmatpush2.msra.mxu0 0.0
        %1609 = vmatprep.subr.mxu0 0.0
        %1610 = vmatpush2.msra.mxu0 0.0
        %1611 = vmatprep.subr.mxu0 0.0
        %1612 = vmatpush2.msra.mxu0 0.0
        %1613 = vmatprep.subr.mxu0 0.0
        %1614 = vmatpush2.msra.mxu0 0.0
        %1615 = vmatprep.subr.mxu0 0.0
        %1616 = vmatpush2.msra.mxu0 0.0
        %1617 = vmatprep.subr.mxu0 0.0
        %1618 = vmatpush2.msra.mxu0 0.0
        %1619 = vmatprep.subr.mxu0 0.0
        %1620 = vmatpush2.msra.mxu0 0.0
        %1621 = vmatprep.subr.mxu0 0.0
        %1622 = vmatpush2.msra.mxu0 0.0
        %1623 = vmatprep.subr.mxu0 0.0
        %1624 = vmatpush2.msra.mxu0 0.0
        %1625 = vmatprep.mubr.f32.mxu0 0.0
        %1626 = vmatmul.mubr.f32.gmra.mxu0 %v596
        %v1627 = vpop.f32.mrf.mxu0
        %v1628 = vadd.f32 0.0, %v1627
        %v1629 = vpop.f32.mrf.mxu0
        %1630 = vmatprep.mubr.f32.mxu0 0.0
        %1631 = vmatmul.mubr.f32.gmra.mxu0 %v599
        %v1632 = vpop.f32.mrf.mxu0
        %v1633 = vadd.f32 0.0, %v1632
        %v1634 = vpop.f32.mrf.mxu0
        %1635 = vmatprep.mubr.f32.mxu0 0.0
        %1636 = vmatmul.mubr.f32.gmra.mxu0 %v602
        %v1637 = vpop.f32.mrf.mxu0
        %v1638 = vadd.f32 0.0, %v1637
        %v1639 = vpop.f32.mrf.mxu0
        %1640 = vmatprep.mubr.f32.mxu0 0.0
        %1641 = vmatmul.mubr.f32.gmra.mxu0 %v605
        %v1642 = vpop.f32.mrf.mxu0
        %v1643 = vadd.f32 0.0, %v1642
        %v1644 = vpop.f32.mrf.mxu0
        %1645 = vdwg.mxu0
        %v1646 = vmul.f32 %v1628, 0.001953125
        %v1647 = vmul.f32 %v1633, 0.001953125
        %v1648 = vmul.f32 %v1638, 0.001953125
        %v1649 = vmul.f32 %v1643, 0.001953125
        %v1650 = vmul.f32 %v1646, %v1646
        %v1651 = vmul.f32 %v1647, %v1647
        %v1652 = vsub.f32 %v1648, %v1650
        %v1653 = vsub.f32 %v1649, %v1651
        %v1654 = vmax.f32 %v1652, 0.0
        %v1655 = vmax.f32 %v1653, 0.0
        %v1656 = vadd.f32 %v1654, 1e-05
        %v1657 = vadd.f32 %v1655, 1e-05
        %v1658 = vrsqrt.pop %v1656
        %v1659 = vrsqrt.pop %v1657
        %1662 = vrot.lane.b32.xlu0 %v1658, 3
        %v1663 = vpop.permute.xlu0 %1662
        %1664 = vrot.lane.b32.xlu0 %v1659, 3
        %v1665 = vpop.permute.xlu0 %1664
        %v1668 = vmul.f32 %v570, %v1663
        %v1669 = vmul.f32 %v571, %v1665
        %1672 = vrot.lane.b32.xlu0 %v1668, 125
        %v1673 = vpop.permute.xlu0 %1672
        %1674 = vrot.lane.b32.xlu0 %v1669, 125
        %v1675 = vpop.permute.xlu0 %1674
        %v1678 = vmul.f32 %v1646, %v1673
        %v1679 = vmul.f32 %v1647, %v1675
        %1682 = vrot.lane.b32.xlu0 %v1678, 3
        %v1683 = vpop.permute.xlu0 %1682
        %1684 = vrot.lane.b32.xlu0 %v1679, 3
        %v1685 = vpop.permute.xlu0 %1684
        %v1688 = vsub.f32 %v572, %v1683
        %v1689 = vsub.f32 %v573, %v1685
        %1690 = vset.pattern.permute.xlu0 3
        %1691 = vperm.xlu0 %1690, %v1668
        %v1692 = vpop.permute.xlu0 %1691
        %1694 = vset.pattern.permute.xlu0 3
        %1695 = vperm.xlu0 %1694, %v1669
        %v1696 = vpop.permute.xlu0 %1695
        %v1698 = vmul.f32 %v1535, %v1692
        %v1699 = vmul.f32 %v1537, %v1692
        %v1700 = vmul.f32 %v1541, %v1696
        %v1701 = vmul.f32 %v1543, %v1696
        %1703 = vset.pattern.permute.xlu0 3
        %1704 = vperm.xlu0 %1703, %v1688
        %v1705 = vpop.permute.xlu0 %1704
        %1708 = vset.pattern.permute.xlu0 3
        %1709 = vperm.xlu0 %1708, %v1689
        %v1710 = vpop.permute.xlu0 %1709
        %v1712 = vadd.f32 %v1698, %v1705
        %v1713 = vadd.f32 %v1699, %v1705
        %v1714 = vadd.f32 %v1700, %v1710
        %v1715 = vadd.f32 %v1701, %v1710
        %1716 = vrot.lane.b32.xlu0 %v1712, 51
        %v1717 = vpop.permute.xlu0 %1716
        %1718 = vrot.lane.b32.xlu0 %v1714, 51
        %v1719 = vpop.permute.xlu0 %1718
        %1720 = vrot.lane.b32.xlu0 %v1713, 51
        %v1721 = vpop.permute.xlu0 %1720
        %1722 = vrot.lane.b32.xlu0 %v1715, 51
        %v1723 = vpop.permute.xlu0 %1722
        %vm1724 = vcmp.lt.s32.totalorder %v1091, 51
        %v1725 = vsel %vm1724, %v1717, %v1721
        %v1726 = vsel %vm1724, %v1719, %v1723
        %v1727 = vsel %vm1724, %v1721, %v1717
        %v1728 = vsel %vm1724, %v1723, %v1719
        %s1729 = scalar_lea.vmem %s8, 4
        %v1730 = vld [vmem:[%s1729] ss:$8 sm:$0x3]
        %v1732 = vlaneseq
        %v1733 = vshrl.u32 %v1732, 7
        %v1734 = vsub.s32 0, %v1733
        %v1735 = vrot.slane %v1730, %v1734
        %v1736 = vlaneseq
        %v1737 = vshrl.u32 %v1736, 7
        %v1738 = vsub.s32 1, %v1737
        %v1739 = vrot.slane %v1730, %v1738
        %v1742 = vmul.f32 %v1727, %v1735
        %v1743 = vmul.f32 %v1725, %v1739
        %v1744 = vmul.f32 %v1728, %v1735
        %v1745 = vmul.f32 %v1726, %v1739
        %1746 = vrot.lane.b32.xlu0 %v1712, 48
        %v1747 = vpop.permute.xlu0 %1746
        %1748 = vrot.lane.b32.xlu0 %v1714, 48
        %v1749 = vpop.permute.xlu0 %1748
        %1750 = vrot.lane.b32.xlu0 %v1713, 48
        %v1751 = vpop.permute.xlu0 %1750
        %1752 = vrot.lane.b32.xlu0 %v1715, 48
        %v1753 = vpop.permute.xlu0 %1752
        %vm1754 = vcmp.lt.s32.totalorder %v1091, 48
        %v1755 = vsel %vm1754, %v1747, %v1751
        %v1756 = vsel %vm1754, %v1749, %v1753
        %v1757 = vsel %vm1754, %v1751, %v1747
        %v1758 = vsel %vm1754, %v1753, %v1749
        %s1759 = scalar_lea.vmem %s8, 5
        %v1760 = vld [vmem:[%s1759] ss:$8 sm:$0x3]
        %v1762 = vlaneseq
        %v1763 = vshrl.u32 %v1762, 7
        %v1764 = vsub.s32 0, %v1763
        %v1765 = vrot.slane %v1760, %v1764
        %v1766 = vlaneseq
        %v1767 = vshrl.u32 %v1766, 7
        %v1768 = vsub.s32 1, %v1767
        %v1769 = vrot.slane %v1760, %v1768
        %v1772 = vmul.f32 %v1757, %v1765
        %v1773 = vmul.f32 %v1755, %v1769
        %v1774 = vmul.f32 %v1758, %v1765
        %v1775 = vmul.f32 %v1756, %v1769
        %1776 = vrot.lane.b32.xlu0 %v1712, 45
        %v1777 = vpop.permute.xlu0 %1776
        %1778 = vrot.lane.b32.xlu0 %v1714, 45
        %v1779 = vpop.permute.xlu0 %1778
        %1780 = vrot.lane.b32.xlu0 %v1713, 45
        %v1781 = vpop.permute.xlu0 %1780
        %1782 = vrot.lane.b32.xlu0 %v1715, 45
        %v1783 = vpop.permute.xlu0 %1782
        %vm1784 = vcmp.lt.s32.totalorder %v1091, 45
        %v1785 = vsel %vm1784, %v1777, %v1781
        %v1786 = vsel %vm1784, %v1779, %v1783
        %v1787 = vsel %vm1784, %v1781, %v1777
        %v1788 = vsel %vm1784, %v1783, %v1779
        %s1789 = scalar_lea.vmem %s8, 6
        %v1790 = vld [vmem:[%s1789] ss:$8 sm:$0x3]
        %v1792 = vlaneseq
        %v1793 = vshrl.u32 %v1792, 7
        %v1794 = vsub.s32 0, %v1793
        %v1795 = vrot.slane %v1790, %v1794
        %v1796 = vlaneseq
        %v1797 = vshrl.u32 %v1796, 7
        %v1798 = vsub.s32 1, %v1797
        %v1799 = vrot.slane %v1790, %v1798
        %v1802 = vmul.f32 %v1787, %v1795
        %v1803 = vmul.f32 %v1785, %v1799
        %v1804 = vmul.f32 %v1788, %v1795
        %v1805 = vmul.f32 %v1786, %v1799
        %1806 = vrot.lane.b32.xlu0 %v1712, 3
        %v1807 = vpop.permute.xlu0 %1806
        %1808 = vrot.lane.b32.xlu0 %v1714, 3
        %v1809 = vpop.permute.xlu0 %1808
        %1810 = vrot.lane.b32.xlu0 %v1713, 3
        %v1811 = vpop.permute.xlu0 %1810
        %1812 = vrot.lane.b32.xlu0 %v1715, 3
        %v1813 = vpop.permute.xlu0 %1812
        %vm1814 = vcmp.lt.s32.totalorder %v1091, 3
        %v1815 = vsel %vm1814, %v1807, %v1811
        %v1816 = vsel %vm1814, %v1809, %v1813
        %v1817 = vsel %vm1814, %v1811, %v1807
        %v1818 = vsel %vm1814, %v1813, %v1809
        %s1819 = scalar_lea.vmem %s8, 7
        %v1820 = vld [vmem:[%s1819] ss:$8 sm:$0x3]
        %v1822 = vlaneseq
        %v1823 = vshrl.u32 %v1822, 7
        %v1824 = vsub.s32 0, %v1823
        %v1825 = vrot.slane %v1820, %v1824
        %v1826 = vlaneseq
        %v1827 = vshrl.u32 %v1826, 7
        %v1828 = vsub.s32 1, %v1827
        %v1829 = vrot.slane %v1820, %v1828
        %v1832 = vmul.f32 %v1817, %v1825
        %v1833 = vmul.f32 %v1815, %v1829
        %v1834 = vmul.f32 %v1818, %v1825
        %v1835 = vmul.f32 %v1816, %v1829
        %1836 = vrot.lane.b32.xlu0 %v1712, 125
        %v1837 = vpop.permute.xlu0 %1836
        %1838 = vrot.lane.b32.xlu0 %v1714, 125
        %v1839 = vpop.permute.xlu0 %1838
        %1840 = vrot.lane.b32.xlu0 %v1713, 125
        %v1841 = vpop.permute.xlu0 %1840
        %1842 = vrot.lane.b32.xlu0 %v1715, 125
        %v1843 = vpop.permute.xlu0 %1842
        %vm1844 = vcmp.lt.s32.totalorder %v1091, 125
        %v1845 = vsel %vm1844, %v1837, %v1841
        %v1846 = vsel %vm1844, %v1839, %v1843
        %v1847 = vsel %vm1844, %v1841, %v1837
        %v1848 = vsel %vm1844, %v1843, %v1839
        %s1849 = scalar_lea.vmem %s8, 16
        %v1850 = vld [vmem:[%s1849] ss:$8 sm:$0x3]
        %v1852 = vlaneseq
        %v1853 = vshrl.u32 %v1852, 7
        %v1854 = vsub.s32 0, %v1853
        %v1855 = vrot.slane %v1850, %v1854
        %v1856 = vlaneseq
        %v1857 = vshrl.u32 %v1856, 7
        %v1858 = vsub.s32 1, %v1857
        %v1859 = vrot.slane %v1850, %v1858
        %v1862 = vmul.f32 %v1845, %v1855
        %v1863 = vmul.f32 %v1847, %v1859
        %v1864 = vmul.f32 %v1846, %v1855
        %v1865 = vmul.f32 %v1848, %v1859
        %1866 = vrot.lane.b32.xlu0 %v1712, 83
        %v1867 = vpop.permute.xlu0 %1866
        %1868 = vrot.lane.b32.xlu0 %v1714, 83
        %v1869 = vpop.permute.xlu0 %1868
        %1870 = vrot.lane.b32.xlu0 %v1713, 83
        %v1871 = vpop.permute.xlu0 %1870
        %1872 = vrot.lane.b32.xlu0 %v1715, 83
        %v1873 = vpop.permute.xlu0 %1872
        %vm1874 = vcmp.lt.s32.totalorder %v1091, 83
        %v1875 = vsel %vm1874, %v1867, %v1871
        %v1876 = vsel %vm1874, %v1869, %v1873
        %v1877 = vsel %vm1874, %v1871, %v1867
        %v1878 = vsel %vm1874, %v1873, %v1869
        %s1879 = scalar_lea.vmem %s8, 17
        %v1880 = vld [vmem:[%s1879] ss:$8 sm:$0x3]
        %v1882 = vlaneseq
        %v1883 = vshrl.u32 %v1882, 7
        %v1884 = vsub.s32 0, %v1883
        %v1885 = vrot.slane %v1880, %v1884
        %v1886 = vlaneseq
        %v1887 = vshrl.u32 %v1886, 7
        %v1888 = vsub.s32 1, %v1887
        %v1889 = vrot.slane %v1880, %v1888
        %v1892 = vmul.f32 %v1875, %v1885
        %v1893 = vmul.f32 %v1877, %v1889
        %v1894 = vmul.f32 %v1876, %v1885
        %v1895 = vmul.f32 %v1878, %v1889
        %1896 = vrot.lane.b32.xlu0 %v1712, 80
        %v1897 = vpop.permute.xlu0 %1896
        %1898 = vrot.lane.b32.xlu0 %v1714, 80
        %v1899 = vpop.permute.xlu0 %1898
        %1900 = vrot.lane.b32.xlu0 %v1713, 80
        %v1901 = vpop.permute.xlu0 %1900
        %1902 = vrot.lane.b32.xlu0 %v1715, 80
        %v1903 = vpop.permute.xlu0 %1902
        %vm1904 = vcmp.lt.s32.totalorder %v1091, 80
        %v1905 = vsel %vm1904, %v1897, %v1901
        %v1906 = vsel %vm1904, %v1899, %v1903
        %v1907 = vsel %vm1904, %v1901, %v1897
        %v1908 = vsel %vm1904, %v1903, %v1899
        %s1909 = scalar_lea.vmem %s8, 18
        %v1910 = vld [vmem:[%s1909] ss:$8 sm:$0x3]
        %v1912 = vlaneseq
        %v1913 = vshrl.u32 %v1912, 7
        %v1914 = vsub.s32 0, %v1913
        %v1915 = vrot.slane %v1910, %v1914
        %v1916 = vlaneseq
        %v1917 = vshrl.u32 %v1916, 7
        %v1918 = vsub.s32 1, %v1917
        %v1919 = vrot.slane %v1910, %v1918
        %v1922 = vmul.f32 %v1905, %v1915
        %v1923 = vmul.f32 %v1907, %v1919
        %v1924 = vmul.f32 %v1906, %v1915
        %v1925 = vmul.f32 %v1908, %v1919
        %1926 = vrot.lane.b32.xlu0 %v1712, 77
        %v1927 = vpop.permute.xlu0 %1926
        %1928 = vrot.lane.b32.xlu0 %v1714, 77
        %v1929 = vpop.permute.xlu0 %1928
        %1930 = vrot.lane.b32.xlu0 %v1713, 77
        %v1931 = vpop.permute.xlu0 %1930
        %1932 = vrot.lane.b32.xlu0 %v1715, 77
        %v1933 = vpop.permute.xlu0 %1932
        %vm1934 = vcmp.lt.s32.totalorder %v1091, 77
        %v1935 = vsel %vm1934, %v1927, %v1931
        %v1936 = vsel %vm1934, %v1929, %v1933
        %v1937 = vsel %vm1934, %v1931, %v1927
        %v1938 = vsel %vm1934, %v1933, %v1929
        %s1939 = scalar_lea.vmem %s8, 19
        %v1940 = vld [vmem:[%s1939] ss:$8 sm:$0x3]
        %v1942 = vlaneseq
        %v1943 = vshrl.u32 %v1942, 7
        %v1944 = vsub.s32 0, %v1943
        %v1945 = vrot.slane %v1940, %v1944
        %v1946 = vlaneseq
        %v1947 = vshrl.u32 %v1946, 7
        %v1948 = vsub.s32 1, %v1947
        %v1949 = vrot.slane %v1940, %v1948
        %v1952 = vmul.f32 %v1935, %v1945
        %v1953 = vmul.f32 %v1937, %v1949
        %v1954 = vmul.f32 %v1936, %v1945
        %v1955 = vmul.f32 %v1938, %v1949
        %v1956 = vld [vmem:[%s4] sm:$0xff]
        %v1957 = vld [vmem:[%s4 + $0x8] sm:$0xff]
        %v1958 = vld [vmem:[%s4 + $0x10] sm:$0xff]
        %v1959 = vld [vmem:[%s4 + $0x18] sm:$0xff]
        %v1961 = vsel %vm450, %v1957, 0
        %v1964 = vsel %vm450, %v1959, 0
        %1966 = vmatprep.subr.mxu0 %v1925
        %1967 = vmatpush1.msra.mxu0 %v1924
        %1968 = vmatprep.subr.mxu0 %v1923
        %1969 = vmatpush1.msra.mxu0 %v1922
        %1970 = vmatprep.subr.mxu0 %v1895
        %1971 = vmatpush1.msra.mxu0 %v1894
        %1972 = vmatprep.subr.mxu0 %v1893
        %1973 = vmatpush1.msra.mxu0 %v1892
        %1974 = vmatprep.subr.mxu0 %v1865
        %1975 = vmatpush1.msra.mxu0 %v1864
        %1976 = vmatprep.subr.mxu0 %v1863
        %1977 = vmatpush1.msra.mxu0 %v1862
        %1978 = vmatprep.subr.mxu0 %v1715
        %1979 = vmatpush1.msra.mxu0 %v1714
        %1980 = vmatprep.subr.mxu0 %v1713
        %1981 = vmatpush1.msra.mxu0 %v1712
        %1982 = vmatprep.subr.mxu0 %v1835
        %1983 = vmatpush1.msra.mxu0 %v1834
        %1984 = vmatprep.subr.mxu0 %v1833
        %1985 = vmatpush1.msra.mxu0 %v1832
        %1986 = vmatprep.subr.mxu0 %v1805
        %1987 = vmatpush1.msra.mxu0 %v1804
        %1988 = vmatprep.subr.mxu0 %v1803
        %1989 = vmatpush1.msra.mxu0 %v1802
        %1990 = vmatprep.subr.mxu0 %v1775
        %1991 = vmatpush1.msra.mxu0 %v1774
        %1992 = vmatprep.subr.mxu0 %v1773
        %1993 = vmatpush1.msra.mxu0 %v1772
        %1994 = vmatprep.subr.mxu0 %v1745
        %1995 = vmatpush1.msra.mxu0 %v1744
        %1996 = vmatprep.subr.mxu0 %v1743
        %1997 = vmatpush1.msra.mxu0 %v1742
        %1998 = vmatprep.subr.mxu0 0.0
        %1999 = vmatpush2.msra.mxu0 0.0
        %2000 = vmatprep.subr.mxu0 0.0
        %2001 = vmatpush2.msra.mxu0 0.0
        %2002 = vmatprep.subr.mxu0 0.0
        %2003 = vmatpush2.msra.mxu0 0.0
        %2004 = vmatprep.subr.mxu0 0.0
        %2005 = vmatpush2.msra.mxu0 0.0
        %2006 = vmatprep.subr.mxu0 0.0
        %2007 = vmatpush2.msra.mxu0 0.0
        %2008 = vmatprep.subr.mxu0 0.0
        %2009 = vmatpush2.msra.mxu0 0.0
        %2010 = vmatprep.subr.mxu0 0.0
        %2011 = vmatpush2.msra.mxu0 0.0
        %2012 = vmatprep.subr.mxu0 0.0
        %2013 = vmatpush2.msra.mxu0 0.0
        %2014 = vmatprep.subr.mxu0 0.0
        %2015 = vmatpush2.msra.mxu0 0.0
        %2016 = vmatprep.subr.mxu0 0.0
        %2017 = vmatpush2.msra.mxu0 0.0
        %2018 = vmatprep.subr.mxu0 0.0
        %2019 = vmatpush2.msra.mxu0 0.0
        %2020 = vmatprep.subr.mxu0 0.0
        %2021 = vmatpush2.msra.mxu0 0.0
        %2022 = vmatprep.subr.mxu0 0.0
        %2023 = vmatpush2.msra.mxu0 0.0
        %2024 = vmatprep.subr.mxu0 0.0
        %2025 = vmatpush2.msra.mxu0 0.0
        %2026 = vmatprep.subr.mxu0 %v1955
        %2027 = vmatpush2.msra.mxu0 %v1954
        %2028 = vmatprep.subr.mxu0 %v1953
        %2029 = vmatpush2.msra.mxu0 %v1952
        %2030 = vmatprep.mubr.f32.mxu0 %v1961
        %2031 = vmatmul.mubr.f32.gmra.mxu0 %v1956
        %v2032 = vpop.f32.mrf.mxu0
        %v2033 = vadd.f32 0.0, %v2032
        %v2034 = vpop.f32.mrf.mxu0
        %v2035 = vadd.f32 0.0, %v2034
        %2036 = vmatprep.mubr.f32.mxu0 %v1964
        %2037 = vmatmul.mubr.f32.gmra.mxu0 %v1958
        %v2038 = vpop.f32.mrf.mxu0
        %v2039 = vadd.f32 0.0, %v2038
        %v2040 = vpop.f32.mrf.mxu0
        %v2041 = vadd.f32 0.0, %v2040
        %2042 = vdwg.mxu0
        %v2043 = vadd.f32 %v2033, %v2035
        %2044 = vadd.xlane.f32.xlu0 %v2043
        %v2045 = vpop.xlane.xlu0 %2044
        %v2046 = vadd.f32 %v2039, %v2041
        %2047 = vadd.xlane.f32.xlu0 %v2046
        %v2048 = vpop.xlane.xlu0 %2047
        %v2049 = vmul.f32 %v2033, %v2033
        %v2050 = vmul.f32 %v2035, %v2035
        %v2051 = vmul.f32 %v2039, %v2039
        %v2052 = vmul.f32 %v2041, %v2041
        %v2053 = vadd.f32 %v2049, %v2050
        %2054 = vadd.xlane.f32.xlu0 %v2053
        %v2055 = vpop.xlane.xlu0 %2054
        %v2056 = vadd.f32 %v2051, %v2052
        %2057 = vadd.xlane.f32.xlu0 %v2056
        %v2058 = vpop.xlane.xlu0 %2057
        %2059 = vmatprep.subr.mxu0 0.0
        %2060 = vmatpush1.msra.mxu0 0.0
        %2061 = vmatprep.subr.mxu0 0.0
        %2062 = vmatpush1.msra.mxu0 0.0
        %2063 = vmatprep.subr.mxu0 0.0
        %2064 = vmatpush1.msra.mxu0 0.0
        %2065 = vmatprep.subr.mxu0 0.0
        %2066 = vmatpush1.msra.mxu0 0.0
        %2067 = vmatprep.subr.mxu0 0.0
        %2068 = vmatpush1.msra.mxu0 0.0
        %2069 = vmatprep.subr.mxu0 0.0
        %2070 = vmatpush1.msra.mxu0 0.0
        %2071 = vmatprep.subr.mxu0 0.0
        %2072 = vmatpush1.msra.mxu0 0.0
        %2073 = vmatprep.subr.mxu0 0.0
        %2074 = vmatpush1.msra.mxu0 0.0
        %2075 = vmatprep.subr.mxu0 0.0
        %2076 = vmatpush1.msra.mxu0 0.0
        %2077 = vmatprep.subr.mxu0 0.0
        %2078 = vmatpush1.msra.mxu0 0.0
        %2079 = vmatprep.subr.mxu0 0.0
        %2080 = vmatpush1.msra.mxu0 0.0
        %2081 = vmatprep.subr.mxu0 0.0
        %2082 = vmatpush1.msra.mxu0 0.0
        %2083 = vmatprep.subr.mxu0 0.0
        %2084 = vmatpush1.msra.mxu0 %v2058
        %2085 = vmatprep.subr.mxu0 0.0
        %2086 = vmatpush1.msra.mxu0 %v2055
        %2087 = vmatprep.subr.mxu0 0.0
        %2088 = vmatpush1.msra.mxu0 %v2048
        %2089 = vmatprep.subr.mxu0 0.0
        %2090 = vmatpush1.msra.mxu0 %v2045
        %2091 = vmatprep.subr.mxu0 0.0
        %2092 = vmatpush2.msra.mxu0 0.0
        %2093 = vmatprep.subr.mxu0 0.0
        %2094 = vmatpush2.msra.mxu0 0.0
        %2095 = vmatprep.subr.mxu0 0.0
        %2096 = vmatpush2.msra.mxu0 0.0
        %2097 = vmatprep.subr.mxu0 0.0
        %2098 = vmatpush2.msra.mxu0 0.0
        %2099 = vmatprep.subr.mxu0 0.0
        %2100 = vmatpush2.msra.mxu0 0.0
        %2101 = vmatprep.subr.mxu0 0.0
        %2102 = vmatpush2.msra.mxu0 0.0
        %2103 = vmatprep.subr.mxu0 0.0
        %2104 = vmatpush2.msra.mxu0 0.0
        %2105 = vmatprep.subr.mxu0 0.0
        %2106 = vmatpush2.msra.mxu0 0.0
        %2107 = vmatprep.subr.mxu0 0.0
        %2108 = vmatpush2.msra.mxu0 0.0
        %2109 = vmatprep.subr.mxu0 0.0
        %2110 = vmatpush2.msra.mxu0 0.0
        %2111 = vmatprep.subr.mxu0 0.0
        %2112 = vmatpush2.msra.mxu0 0.0
        %2113 = vmatprep.subr.mxu0 0.0
        %2114 = vmatpush2.msra.mxu0 0.0
        %2115 = vmatprep.subr.mxu0 0.0
        %2116 = vmatpush2.msra.mxu0 0.0
        %2117 = vmatprep.subr.mxu0 0.0
        %2118 = vmatpush2.msra.mxu0 0.0
        %2119 = vmatprep.subr.mxu0 0.0
        %2120 = vmatpush2.msra.mxu0 0.0
        %2121 = vmatprep.subr.mxu0 0.0
        %2122 = vmatpush2.msra.mxu0 0.0
        %2123 = vmatprep.mubr.f32.mxu0 0.0
        %2124 = vmatmul.mubr.f32.gmra.mxu0 %v596
        %v2125 = vpop.f32.mrf.mxu0
        %v2126 = vadd.f32 0.0, %v2125
        %v2127 = vpop.f32.mrf.mxu0
        %2128 = vmatprep.mubr.f32.mxu0 0.0
        %2129 = vmatmul.mubr.f32.gmra.mxu0 %v599
        %v2130 = vpop.f32.mrf.mxu0
        %v2131 = vadd.f32 0.0, %v2130
        %v2132 = vpop.f32.mrf.mxu0
        %2133 = vmatprep.mubr.f32.mxu0 0.0
        %2134 = vmatmul.mubr.f32.gmra.mxu0 %v602
        %v2135 = vpop.f32.mrf.mxu0
        %v2136 = vadd.f32 0.0, %v2135
        %v2137 = vpop.f32.mrf.mxu0
        %2138 = vmatprep.mubr.f32.mxu0 0.0
        %2139 = vmatmul.mubr.f32.gmra.mxu0 %v605
        %v2140 = vpop.f32.mrf.mxu0
        %v2141 = vadd.f32 0.0, %v2140
        %v2142 = vpop.f32.mrf.mxu0
        %2143 = vdwg.mxu0
        %v2144 = vmul.f32 %v2126, 0.001953125
        %v2145 = vmul.f32 %v2131, 0.001953125
        %v2146 = vmul.f32 %v2136, 0.001953125
        %v2147 = vmul.f32 %v2141, 0.001953125
        %v2148 = vmul.f32 %v2144, %v2144
        %v2149 = vmul.f32 %v2145, %v2145
        %v2150 = vsub.f32 %v2146, %v2148
        %v2151 = vsub.f32 %v2147, %v2149
        %v2152 = vmax.f32 %v2150, 0.0
        %v2153 = vmax.f32 %v2151, 0.0
        %v2154 = vadd.f32 %v2152, 1e-05
        %v2155 = vadd.f32 %v2153, 1e-05
        %v2156 = vrsqrt.pop %v2154
        %v2157 = vrsqrt.pop %v2155
        %2160 = vrot.lane.b32.xlu0 %v2156, 4
        %v2161 = vpop.permute.xlu0 %2160
        %2162 = vrot.lane.b32.xlu0 %v2157, 4
        %v2163 = vpop.permute.xlu0 %2162
        %v2166 = vmul.f32 %v570, %v2161
        %v2167 = vmul.f32 %v571, %v2163
        %2170 = vrot.lane.b32.xlu0 %v2166, 124
        %v2171 = vpop.permute.xlu0 %2170
        %2172 = vrot.lane.b32.xlu0 %v2167, 124
        %v2173 = vpop.permute.xlu0 %2172
        %v2176 = vmul.f32 %v2144, %v2171
        %v2177 = vmul.f32 %v2145, %v2173
        %2180 = vrot.lane.b32.xlu0 %v2176, 4
        %v2181 = vpop.permute.xlu0 %2180
        %2182 = vrot.lane.b32.xlu0 %v2177, 4
        %v2183 = vpop.permute.xlu0 %2182
        %v2186 = vsub.f32 %v572, %v2181
        %v2187 = vsub.f32 %v573, %v2183
        %2188 = vset.pattern.permute.xlu0 4
        %2189 = vperm.xlu0 %2188, %v2166
        %v2190 = vpop.permute.xlu0 %2189
        %2192 = vset.pattern.permute.xlu0 4
        %2193 = vperm.xlu0 %2192, %v2167
        %v2194 = vpop.permute.xlu0 %2193
        %v2196 = vmul.f32 %v2033, %v2190
        %v2197 = vmul.f32 %v2035, %v2190
        %v2198 = vmul.f32 %v2039, %v2194
        %v2199 = vmul.f32 %v2041, %v2194
        %2201 = vset.pattern.permute.xlu0 4
        %2202 = vperm.xlu0 %2201, %v2186
        %v2203 = vpop.permute.xlu0 %2202
        %2206 = vset.pattern.permute.xlu0 4
        %2207 = vperm.xlu0 %2206, %v2187
        %v2208 = vpop.permute.xlu0 %2207
        %v2210 = vadd.f32 %v2196, %v2203
        %v2211 = vadd.f32 %v2197, %v2203
        %v2212 = vadd.f32 %v2198, %v2208
        %v2213 = vadd.f32 %v2199, %v2208
        %2214 = vrot.lane.b32.xlu0 %v736, 17
        %v2215 = vpop.permute.xlu0 %2214
        %2216 = vrot.lane.b32.xlu0 %v738, 17
        %v2217 = vpop.permute.xlu0 %2216
        %2218 = vrot.lane.b32.xlu0 %v737, 17
        %v2219 = vpop.permute.xlu0 %2218
        %2220 = vrot.lane.b32.xlu0 %v739, 17
        %v2221 = vpop.permute.xlu0 %2220
        %vm2222 = vcmp.lt.s32.totalorder %v1091, 17
        %v2223 = vsel %vm2222, %v2215, %v2219
        %v2224 = vsel %vm2222, %v2217, %v2221
        %v2225 = vsel %vm2222, %v2219, %v2215
        %v2226 = vsel %vm2222, %v2221, %v2217
        %s2227 = scalar_lea.vmem %s8, 20
        %v2228 = vld [vmem:[%s2227] ss:$8 sm:$0x3]
        %v2230 = vlaneseq
        %v2231 = vshrl.u32 %v2230, 7
        %v2232 = vsub.s32 0, %v2231
        %v2233 = vrot.slane %v2228, %v2232
        %v2234 = vlaneseq
        %v2235 = vshrl.u32 %v2234, 7
        %v2236 = vsub.s32 1, %v2235
        %v2237 = vrot.slane %v2228, %v2236
        %v2240 = vmul.f32 %v2225, %v2233
        %v2241 = vmul.f32 %v2223, %v2237
        %v2242 = vmul.f32 %v2226, %v2233
        %v2243 = vmul.f32 %v2224, %v2237
        %2244 = vrot.lane.b32.xlu0 %v2210, 17
        %v2245 = vpop.permute.xlu0 %2244
        %2246 = vrot.lane.b32.xlu0 %v2212, 17
        %v2247 = vpop.permute.xlu0 %2246
        %2248 = vrot.lane.b32.xlu0 %v2211, 17
        %v2249 = vpop.permute.xlu0 %2248
        %2250 = vrot.lane.b32.xlu0 %v2213, 17
        %v2251 = vpop.permute.xlu0 %2250
        %v2252 = vsel %vm2222, %v2245, %v2249
        %v2253 = vsel %vm2222, %v2247, %v2251
        %v2254 = vsel %vm2222, %v2249, %v2245
        %v2255 = vsel %vm2222, %v2251, %v2247
        %v2256 = vmul.f32 %v2254, %v2233
        %v2257 = vmul.f32 %v2252, %v2237
        %v2258 = vmul.f32 %v2255, %v2233
        %v2259 = vmul.f32 %v2253, %v2237
        %2260 = vrot.lane.b32.xlu0 %v736, 16
        %v2261 = vpop.permute.xlu0 %2260
        %2262 = vrot.lane.b32.xlu0 %v738, 16
        %v2263 = vpop.permute.xlu0 %2262
        %2264 = vrot.lane.b32.xlu0 %v737, 16
        %v2265 = vpop.permute.xlu0 %2264
        %2266 = vrot.lane.b32.xlu0 %v739, 16
        %v2267 = vpop.permute.xlu0 %2266
        %v2268 = vsel %vm1408, %v2261, %v2265
        %v2269 = vsel %vm1408, %v2263, %v2267
        %v2270 = vsel %vm1408, %v2265, %v2261
        %v2271 = vsel %vm1408, %v2267, %v2263
        %v2272 = vmul.f32 %v2270, %v1419
        %v2273 = vmul.f32 %v2268, %v1423
        %v2274 = vmul.f32 %v2271, %v1419
        %v2275 = vmul.f32 %v2269, %v1423
        %2276 = vrot.lane.b32.xlu0 %v2210, 16
        %v2277 = vpop.permute.xlu0 %2276
        %2278 = vrot.lane.b32.xlu0 %v2212, 16
        %v2279 = vpop.permute.xlu0 %2278
        %2280 = vrot.lane.b32.xlu0 %v2211, 16
        %v2281 = vpop.permute.xlu0 %2280
        %2282 = vrot.lane.b32.xlu0 %v2213, 16
        %v2283 = vpop.permute.xlu0 %2282
        %v2284 = vsel %vm1408, %v2277, %v2281
        %v2285 = vsel %vm1408, %v2279, %v2283
        %v2286 = vsel %vm1408, %v2281, %v2277
        %v2287 = vsel %vm1408, %v2283, %v2279
        %v2288 = vmul.f32 %v2286, %v1419
        %v2289 = vmul.f32 %v2284, %v1423
        %v2290 = vmul.f32 %v2287, %v1419
        %v2291 = vmul.f32 %v2285, %v1423
        %2292 = vrot.lane.b32.xlu0 %v736, 15
        %v2293 = vpop.permute.xlu0 %2292
        %2294 = vrot.lane.b32.xlu0 %v738, 15
        %v2295 = vpop.permute.xlu0 %2294
        %2296 = vrot.lane.b32.xlu0 %v737, 15
        %v2297 = vpop.permute.xlu0 %2296
        %2298 = vrot.lane.b32.xlu0 %v739, 15
        %v2299 = vpop.permute.xlu0 %2298
        %vm2300 = vcmp.lt.s32.totalorder %v1091, 15
        %v2301 = vsel %vm2300, %v2293, %v2297
        %v2302 = vsel %vm2300, %v2295, %v2299
        %v2303 = vsel %vm2300, %v2297, %v2293
        %v2304 = vsel %vm2300, %v2299, %v2295
        %s2305 = scalar_lea.vmem %s8, 21
        %v2306 = vld [vmem:[%s2305] ss:$8 sm:$0x3]
        %v2308 = vlaneseq
        %v2309 = vshrl.u32 %v2308, 7
        %v2310 = vsub.s32 0, %v2309
        %v2311 = vrot.slane %v2306, %v2310
        %v2312 = vlaneseq
        %v2313 = vshrl.u32 %v2312, 7
        %v2314 = vsub.s32 1, %v2313
        %v2315 = vrot.slane %v2306, %v2314
        %v2318 = vmul.f32 %v2303, %v2311
        %v2319 = vmul.f32 %v2301, %v2315
        %v2320 = vmul.f32 %v2304, %v2311
        %v2321 = vmul.f32 %v2302, %v2315
        %2322 = vrot.lane.b32.xlu0 %v2210, 15
        %v2323 = vpop.permute.xlu0 %2322
        %2324 = vrot.lane.b32.xlu0 %v2212, 15
        %v2325 = vpop.permute.xlu0 %2324
        %2326 = vrot.lane.b32.xlu0 %v2211, 15
        %v2327 = vpop.permute.xlu0 %2326
        %2328 = vrot.lane.b32.xlu0 %v2213, 15
        %v2329 = vpop.permute.xlu0 %2328
        %v2330 = vsel %vm2300, %v2323, %v2327
        %v2331 = vsel %vm2300, %v2325, %v2329
        %v2332 = vsel %vm2300, %v2327, %v2323
        %v2333 = vsel %vm2300, %v2329, %v2325
        %v2334 = vmul.f32 %v2332, %v2311
        %v2335 = vmul.f32 %v2330, %v2315
        %v2336 = vmul.f32 %v2333, %v2311
        %v2337 = vmul.f32 %v2331, %v2315
        %2338 = vrot.lane.b32.xlu0 %v736, 1
        %v2339 = vpop.permute.xlu0 %2338
        %2340 = vrot.lane.b32.xlu0 %v738, 1
        %v2341 = vpop.permute.xlu0 %2340
        %2342 = vrot.lane.b32.xlu0 %v737, 1
        %v2343 = vpop.permute.xlu0 %2342
        %2344 = vrot.lane.b32.xlu0 %v739, 1
        %v2345 = vpop.permute.xlu0 %2344
        %v2346 = vsel %vm1092, %v2339, %v2343
        %v2347 = vsel %vm1092, %v2341, %v2345
        %v2348 = vsel %vm1092, %v2343, %v2339
        %v2349 = vsel %vm1092, %v2345, %v2341
        %v2350 = vmul.f32 %v2348, %v1102
        %v2351 = vmul.f32 %v2346, %v1106
        %v2352 = vmul.f32 %v2349, %v1102
        %v2353 = vmul.f32 %v2347, %v1106
        %2354 = vrot.lane.b32.xlu0 %v2210, 1
        %v2355 = vpop.permute.xlu0 %2354
        %2356 = vrot.lane.b32.xlu0 %v2212, 1
        %v2357 = vpop.permute.xlu0 %2356
        %2358 = vrot.lane.b32.xlu0 %v2211, 1
        %v2359 = vpop.permute.xlu0 %2358
        %2360 = vrot.lane.b32.xlu0 %v2213, 1
        %v2361 = vpop.permute.xlu0 %2360
        %v2362 = vsel %vm1092, %v2355, %v2359
        %v2363 = vsel %vm1092, %v2357, %v2361
        %v2364 = vsel %vm1092, %v2359, %v2355
        %v2365 = vsel %vm1092, %v2361, %v2357
        %v2366 = vmul.f32 %v2364, %v1102
        %v2367 = vmul.f32 %v2362, %v1106
        %v2368 = vmul.f32 %v2365, %v1102
        %v2369 = vmul.f32 %v2363, %v1106
        %2370 = vrot.lane.b32.xlu0 %v736, 127
        %v2371 = vpop.permute.xlu0 %2370
        %2372 = vrot.lane.b32.xlu0 %v738, 127
        %v2373 = vpop.permute.xlu0 %2372
        %2374 = vrot.lane.b32.xlu0 %v737, 127
        %v2375 = vpop.permute.xlu0 %2374
        %2376 = vrot.lane.b32.xlu0 %v739, 127
        %v2377 = vpop.permute.xlu0 %2376
        %v2378 = vsel %vm1121, %v2371, %v2375
        %v2379 = vsel %vm1121, %v2373, %v2377
        %v2380 = vsel %vm1121, %v2375, %v2371
        %v2381 = vsel %vm1121, %v2377, %v2373
        %v2382 = vmul.f32 %v2378, %v1132
        %v2383 = vmul.f32 %v2380, %v1136
        %v2384 = vmul.f32 %v2379, %v1132
        %v2385 = vmul.f32 %v2381, %v1136
        %2386 = vrot.lane.b32.xlu0 %v2210, 127
        %v2387 = vpop.permute.xlu0 %2386
        %2388 = vrot.lane.b32.xlu0 %v2212, 127
        %v2389 = vpop.permute.xlu0 %2388
        %2390 = vrot.lane.b32.xlu0 %v2211, 127
        %v2391 = vpop.permute.xlu0 %2390
        %2392 = vrot.lane.b32.xlu0 %v2213, 127
        %v2393 = vpop.permute.xlu0 %2392
        %v2394 = vsel %vm1121, %v2387, %v2391
        %v2395 = vsel %vm1121, %v2389, %v2393
        %v2396 = vsel %vm1121, %v2391, %v2387
        %v2397 = vsel %vm1121, %v2393, %v2389
        %v2398 = vmul.f32 %v2394, %v1132
        %v2399 = vmul.f32 %v2396, %v1136
        %v2400 = vmul.f32 %v2395, %v1132
        %v2401 = vmul.f32 %v2397, %v1136
        %2402 = vrot.lane.b32.xlu0 %v736, 113
        %v2403 = vpop.permute.xlu0 %2402
        %2404 = vrot.lane.b32.xlu0 %v738, 113
        %v2405 = vpop.permute.xlu0 %2404
        %2406 = vrot.lane.b32.xlu0 %v737, 113
        %v2407 = vpop.permute.xlu0 %2406
        %2408 = vrot.lane.b32.xlu0 %v739, 113
        %v2409 = vpop.permute.xlu0 %2408
        %vm2410 = vcmp.lt.s32.totalorder %v1091, 113
        %v2411 = vsel %vm2410, %v2403, %v2407
        %v2412 = vsel %vm2410, %v2405, %v2409
        %v2413 = vsel %vm2410, %v2407, %v2403
        %v2414 = vsel %vm2410, %v2409, %v2405
        %s2415 = scalar_lea.vmem %s8, 22
        %v2416 = vld [vmem:[%s2415] ss:$8 sm:$0x3]
        %v2418 = vlaneseq
        %v2419 = vshrl.u32 %v2418, 7
        %v2420 = vsub.s32 0, %v2419
        %v2421 = vrot.slane %v2416, %v2420
        %v2422 = vlaneseq
        %v2423 = vshrl.u32 %v2422, 7
        %v2424 = vsub.s32 1, %v2423
        %v2425 = vrot.slane %v2416, %v2424
        %v2428 = vmul.f32 %v2411, %v2421
        %v2429 = vmul.f32 %v2413, %v2425
        %v2430 = vmul.f32 %v2412, %v2421
        %v2431 = vmul.f32 %v2414, %v2425
        %2432 = vrot.lane.b32.xlu0 %v2210, 113
        %v2433 = vpop.permute.xlu0 %2432
        %2434 = vrot.lane.b32.xlu0 %v2212, 113
        %v2435 = vpop.permute.xlu0 %2434
        %2436 = vrot.lane.b32.xlu0 %v2211, 113
        %v2437 = vpop.permute.xlu0 %2436
        %2438 = vrot.lane.b32.xlu0 %v2213, 113
        %v2439 = vpop.permute.xlu0 %2438
        %v2440 = vsel %vm2410, %v2433, %v2437
        %v2441 = vsel %vm2410, %v2435, %v2439
        %v2442 = vsel %vm2410, %v2437, %v2433
        %v2443 = vsel %vm2410, %v2439, %v2435
        %v2444 = vmul.f32 %v2440, %v2421
        %v2445 = vmul.f32 %v2442, %v2425
        %v2446 = vmul.f32 %v2441, %v2421
        %v2447 = vmul.f32 %v2443, %v2425
        %2448 = vrot.lane.b32.xlu0 %v736, 112
        %v2449 = vpop.permute.xlu0 %2448
        %2450 = vrot.lane.b32.xlu0 %v738, 112
        %v2451 = vpop.permute.xlu0 %2450
        %2452 = vrot.lane.b32.xlu0 %v737, 112
        %v2453 = vpop.permute.xlu0 %2452
        %2454 = vrot.lane.b32.xlu0 %v739, 112
        %v2455 = vpop.permute.xlu0 %2454
        %v2456 = vsel %vm1438, %v2449, %v2453
        %v2457 = vsel %vm1438, %v2451, %v2455
        %v2458 = vsel %vm1438, %v2453, %v2449
        %v2459 = vsel %vm1438, %v2455, %v2451
        %v2460 = vmul.f32 %v2456, %v1449
        %v2461 = vmul.f32 %v2458, %v1453
        %v2462 = vmul.f32 %v2457, %v1449
        %v2463 = vmul.f32 %v2459, %v1453
        %2464 = vrot.lane.b32.xlu0 %v2210, 112
        %v2465 = vpop.permute.xlu0 %2464
        %2466 = vrot.lane.b32.xlu0 %v2212, 112
        %v2467 = vpop.permute.xlu0 %2466
        %2468 = vrot.lane.b32.xlu0 %v2211, 112
        %v2469 = vpop.permute.xlu0 %2468
        %2470 = vrot.lane.b32.xlu0 %v2213, 112
        %v2471 = vpop.permute.xlu0 %2470
        %v2472 = vsel %vm1438, %v2465, %v2469
        %v2473 = vsel %vm1438, %v2467, %v2471
        %v2474 = vsel %vm1438, %v2469, %v2465
        %v2475 = vsel %vm1438, %v2471, %v2467
        %v2476 = vmul.f32 %v2472, %v1449
        %v2477 = vmul.f32 %v2474, %v1453
        %v2478 = vmul.f32 %v2473, %v1449
        %v2479 = vmul.f32 %v2475, %v1453
        %2480 = vrot.lane.b32.xlu0 %v736, 111
        %v2481 = vpop.permute.xlu0 %2480
        %2482 = vrot.lane.b32.xlu0 %v738, 111
        %v2483 = vpop.permute.xlu0 %2482
        %2484 = vrot.lane.b32.xlu0 %v737, 111
        %v2485 = vpop.permute.xlu0 %2484
        %2486 = vrot.lane.b32.xlu0 %v739, 111
        %v2487 = vpop.permute.xlu0 %2486
        %vm2488 = vcmp.lt.s32.totalorder %v1091, 111
        %v2489 = vsel %vm2488, %v2481, %v2485
        %v2490 = vsel %vm2488, %v2483, %v2487
        %v2491 = vsel %vm2488, %v2485, %v2481
        %v2492 = vsel %vm2488, %v2487, %v2483
        %s2493 = scalar_lea.vmem %s8, 23
        %v2494 = vld [vmem:[%s2493] ss:$8 sm:$0x3]
        %v2496 = vlaneseq
        %v2497 = vshrl.u32 %v2496, 7
        %v2498 = vsub.s32 0, %v2497
        %v2499 = vrot.slane %v2494, %v2498
        %v2500 = vlaneseq
        %v2501 = vshrl.u32 %v2500, 7
        %v2502 = vsub.s32 1, %v2501
        %v2503 = vrot.slane %v2494, %v2502
        %v2506 = vmul.f32 %v2489, %v2499
        %v2507 = vmul.f32 %v2491, %v2503
        %v2508 = vmul.f32 %v2490, %v2499
        %v2509 = vmul.f32 %v2492, %v2503
        %2510 = vrot.lane.b32.xlu0 %v2210, 111
        %v2511 = vpop.permute.xlu0 %2510
        %2512 = vrot.lane.b32.xlu0 %v2212, 111
        %v2513 = vpop.permute.xlu0 %2512
        %2514 = vrot.lane.b32.xlu0 %v2211, 111
        %v2515 = vpop.permute.xlu0 %2514
        %2516 = vrot.lane.b32.xlu0 %v2213, 111
        %v2517 = vpop.permute.xlu0 %2516
        %v2518 = vsel %vm2488, %v2511, %v2515
        %v2519 = vsel %vm2488, %v2513, %v2517
        %v2520 = vsel %vm2488, %v2515, %v2511
        %v2521 = vsel %vm2488, %v2517, %v2513
        %v2522 = vmul.f32 %v2518, %v2499
        %v2523 = vmul.f32 %v2520, %v2503
        %v2524 = vmul.f32 %v2519, %v2499
        %v2525 = vmul.f32 %v2521, %v2503
        %v2526 = vld [vmem:[%s5] sm:$0xff]
        %v2527 = vld [vmem:[%s5 + $0x8] sm:$0xff]
        %v2528 = vld [vmem:[%s5 + $0x10] sm:$0xff]
        %v2529 = vld [vmem:[%s5 + $0x18] sm:$0xff]
        %v2530 = vld [vmem:[%s5 + $0x20] sm:$0xff]
        %v2531 = vld [vmem:[%s5 + $0x28] sm:$0xff]
        %v2533 = vsel %vm594, %v2528, 0
        %v2536 = vsel %vm594, %v2531, 0
        %2538 = vmatprep.subr.mxu0 %v2369
        %2539 = vmatpush1.msra.mxu0 %v2368
        %2540 = vmatprep.subr.mxu0 %v2367
        %2541 = vmatpush1.msra.mxu0 %v2366
        %2542 = vmatprep.subr.mxu0 %v2353
        %2543 = vmatpush1.msra.mxu0 %v2352
        %2544 = vmatprep.subr.mxu0 %v2351
        %2545 = vmatpush1.msra.mxu0 %v2350
        %2546 = vmatprep.subr.mxu0 %v2337
        %2547 = vmatpush1.msra.mxu0 %v2336
        %2548 = vmatprep.subr.mxu0 %v2335
        %2549 = vmatpush1.msra.mxu0 %v2334
        %2550 = vmatprep.subr.mxu0 %v2321
        %2551 = vmatpush1.msra.mxu0 %v2320
        %2552 = vmatprep.subr.mxu0 %v2319
        %2553 = vmatpush1.msra.mxu0 %v2318
        %2554 = vmatprep.subr.mxu0 %v2291
        %2555 = vmatpush1.msra.mxu0 %v2290
        %2556 = vmatprep.subr.mxu0 %v2289
        %2557 = vmatpush1.msra.mxu0 %v2288
        %2558 = vmatprep.subr.mxu0 %v2275
        %2559 = vmatpush1.msra.mxu0 %v2274
        %2560 = vmatprep.subr.mxu0 %v2273
        %2561 = vmatpush1.msra.mxu0 %v2272
        %2562 = vmatprep.subr.mxu0 %v2259
        %2563 = vmatpush1.msra.mxu0 %v2258
        %2564 = vmatprep.subr.mxu0 %v2257
        %2565 = vmatpush1.msra.mxu0 %v2256
        %2566 = vmatprep.subr.mxu0 %v2243
        %2567 = vmatpush1.msra.mxu0 %v2242
        %2568 = vmatprep.subr.mxu0 %v2241
        %2569 = vmatpush1.msra.mxu0 %v2240
        %2570 = vmatprep.subr.mxu0 %v2479
        %2571 = vmatpush2.msra.mxu0 %v2478
        %2572 = vmatprep.subr.mxu0 %v2477
        %2573 = vmatpush2.msra.mxu0 %v2476
        %2574 = vmatprep.subr.mxu0 %v2463
        %2575 = vmatpush2.msra.mxu0 %v2462
        %2576 = vmatprep.subr.mxu0 %v2461
        %2577 = vmatpush2.msra.mxu0 %v2460
        %2578 = vmatprep.subr.mxu0 %v2447
        %2579 = vmatpush2.msra.mxu0 %v2446
        %2580 = vmatprep.subr.mxu0 %v2445
        %2581 = vmatpush2.msra.mxu0 %v2444
        %2582 = vmatprep.subr.mxu0 %v2431
        %2583 = vmatpush2.msra.mxu0 %v2430
        %2584 = vmatprep.subr.mxu0 %v2429
        %2585 = vmatpush2.msra.mxu0 %v2428
        %2586 = vmatprep.subr.mxu0 %v2401
        %2587 = vmatpush2.msra.mxu0 %v2400
        %2588 = vmatprep.subr.mxu0 %v2399
        %2589 = vmatpush2.msra.mxu0 %v2398
        %2590 = vmatprep.subr.mxu0 %v2385
        %2591 = vmatpush2.msra.mxu0 %v2384
        %2592 = vmatprep.subr.mxu0 %v2383
        %2593 = vmatpush2.msra.mxu0 %v2382
        %2594 = vmatprep.subr.mxu0 %v2213
        %2595 = vmatpush2.msra.mxu0 %v2212
        %2596 = vmatprep.subr.mxu0 %v2211
        %2597 = vmatpush2.msra.mxu0 %v2210
        %2598 = vmatprep.subr.mxu0 %v739
        %2599 = vmatpush2.msra.mxu0 %v738
        %2600 = vmatprep.subr.mxu0 %v737
        %2601 = vmatpush2.msra.mxu0 %v736
        %2602 = vmatprep.mubr.f32.mxu0 %v2527
        %2603 = vmatmul.mubr.f32.gmra.mxu0 %v2526
        %v2604 = vpop.f32.mrf.mxu0
        %v2605 = vadd.f32 0.0, %v2604
        %v2606 = vpop.f32.mrf.mxu0
        %v2607 = vadd.f32 0.0, %v2606
        %2608 = vmatprep.mubr.f32.mxu0 %v2530
        %2609 = vmatmul.mubr.f32.gmra.mxu0 %v2529
        %v2610 = vpop.f32.mrf.mxu0
        %v2611 = vadd.f32 0.0, %v2610
        %v2612 = vpop.f32.mrf.mxu0
        %v2613 = vadd.f32 0.0, %v2612
        %2614 = vdwg.mxu0
        %2615 = vmatprep.subr.mxu0 0.0
        %2616 = vmatpush1.msra.mxu0 0.0
        %2617 = vmatprep.subr.mxu0 0.0
        %2618 = vmatpush1.msra.mxu0 0.0
        %2619 = vmatprep.subr.mxu0 0.0
        %2620 = vmatpush1.msra.mxu0 0.0
        %2621 = vmatprep.subr.mxu0 0.0
        %2622 = vmatpush1.msra.mxu0 0.0
        %2623 = vmatprep.subr.mxu0 0.0
        %2624 = vmatpush1.msra.mxu0 0.0
        %2625 = vmatprep.subr.mxu0 0.0
        %2626 = vmatpush1.msra.mxu0 0.0
        %2627 = vmatprep.subr.mxu0 0.0
        %2628 = vmatpush1.msra.mxu0 0.0
        %2629 = vmatprep.subr.mxu0 0.0
        %2630 = vmatpush1.msra.mxu0 0.0
        %2631 = vmatprep.subr.mxu0 0.0
        %2632 = vmatpush1.msra.mxu0 0.0
        %2633 = vmatprep.subr.mxu0 0.0
        %2634 = vmatpush1.msra.mxu0 0.0
        %2635 = vmatprep.subr.mxu0 0.0
        %2636 = vmatpush1.msra.mxu0 0.0
        %2637 = vmatprep.subr.mxu0 0.0
        %2638 = vmatpush1.msra.mxu0 0.0
        %2639 = vmatprep.subr.mxu0 %v2525
        %2640 = vmatpush1.msra.mxu0 %v2524
        %2641 = vmatprep.subr.mxu0 %v2523
        %2642 = vmatpush1.msra.mxu0 %v2522
        %2643 = vmatprep.subr.mxu0 %v2509
        %2644 = vmatpush1.msra.mxu0 %v2508
        %2645 = vmatprep.subr.mxu0 %v2507
        %2646 = vmatpush1.msra.mxu0 %v2506
        %2647 = vmatprep.subr.mxu0 0.0
        %2648 = vmatpush2.msra.mxu0 0.0
        %2649 = vmatprep.subr.mxu0 0.0
        %2650 = vmatpush2.msra.mxu0 0.0
        %2651 = vmatprep.subr.mxu0 0.0
        %2652 = vmatpush2.msra.mxu0 0.0
        %2653 = vmatprep.subr.mxu0 0.0
        %2654 = vmatpush2.msra.mxu0 0.0
        %2655 = vmatprep.subr.mxu0 0.0
        %2656 = vmatpush2.msra.mxu0 0.0
        %2657 = vmatprep.subr.mxu0 0.0
        %2658 = vmatpush2.msra.mxu0 0.0
        %2659 = vmatprep.subr.mxu0 0.0
        %2660 = vmatpush2.msra.mxu0 0.0
        %2661 = vmatprep.subr.mxu0 0.0
        %2662 = vmatpush2.msra.mxu0 0.0
        %2663 = vmatprep.subr.mxu0 0.0
        %2664 = vmatpush2.msra.mxu0 0.0
        %2665 = vmatprep.subr.mxu0 0.0
        %2666 = vmatpush2.msra.mxu0 0.0
        %2667 = vmatprep.subr.mxu0 0.0
        %2668 = vmatpush2.msra.mxu0 0.0
        %2669 = vmatprep.subr.mxu0 0.0
        %2670 = vmatpush2.msra.mxu0 0.0
        %2671 = vmatprep.subr.mxu0 0.0
        %2672 = vmatpush2.msra.mxu0 0.0
        %2673 = vmatprep.subr.mxu0 0.0
        %2674 = vmatpush2.msra.mxu0 0.0
        %2675 = vmatprep.subr.mxu0 0.0
        %2676 = vmatpush2.msra.mxu0 0.0
        %2677 = vmatprep.subr.mxu0 0.0
        %2678 = vmatpush2.msra.mxu0 0.0
        %2679 = vmatprep.mubr.f32.mxu0 0.0
        %2680 = vmatmul.mubr.f32.gmra.mxu0 %v2533
        %v2681 = vpop.f32.mrf.mxu0
        %v2682 = vadd.f32 %v2605, %v2681
        %v2683 = vpop.f32.mrf.mxu0
        %v2684 = vadd.f32 %v2607, %v2683
        %2685 = vmatprep.mubr.f32.mxu0 0.0
        %2686 = vmatmul.mubr.f32.gmra.mxu0 %v2536
        %v2687 = vpop.f32.mrf.mxu0
        %v2688 = vadd.f32 %v2611, %v2687
        %v2689 = vpop.f32.mrf.mxu0
        %v2690 = vadd.f32 %v2613, %v2689
        %2691 = vdwg.mxu0
        %v2692 = vadd.f32 %v2682, %v2684
        %2693 = vadd.xlane.f32.xlu0 %v2692
        %v2694 = vpop.xlane.xlu0 %2693
        %v2695 = vadd.f32 %v2688, %v2690
        %2696 = vadd.xlane.f32.xlu0 %v2695
        %v2697 = vpop.xlane.xlu0 %2696
        %v2698 = vmul.f32 %v2682, %v2682
        %v2699 = vmul.f32 %v2684, %v2684
        %v2700 = vmul.f32 %v2688, %v2688
        %v2701 = vmul.f32 %v2690, %v2690
        %v2702 = vadd.f32 %v2698, %v2699
        %2703 = vadd.xlane.f32.xlu0 %v2702
        %v2704 = vpop.xlane.xlu0 %2703
        %v2705 = vadd.f32 %v2700, %v2701
        %2706 = vadd.xlane.f32.xlu0 %v2705
        %v2707 = vpop.xlane.xlu0 %2706
        %2708 = vmatprep.subr.mxu0 0.0
        %2709 = vmatpush1.msra.mxu0 0.0
        %2710 = vmatprep.subr.mxu0 0.0
        %2711 = vmatpush1.msra.mxu0 0.0
        %2712 = vmatprep.subr.mxu0 0.0
        %2713 = vmatpush1.msra.mxu0 0.0
        %2714 = vmatprep.subr.mxu0 0.0
        %2715 = vmatpush1.msra.mxu0 0.0
        %2716 = vmatprep.subr.mxu0 0.0
        %2717 = vmatpush1.msra.mxu0 0.0
        %2718 = vmatprep.subr.mxu0 0.0
        %2719 = vmatpush1.msra.mxu0 0.0
        %2720 = vmatprep.subr.mxu0 0.0
        %2721 = vmatpush1.msra.mxu0 0.0
        %2722 = vmatprep.subr.mxu0 0.0
        %2723 = vmatpush1.msra.mxu0 0.0
        %2724 = vmatprep.subr.mxu0 0.0
        %2725 = vmatpush1.msra.mxu0 0.0
        %2726 = vmatprep.subr.mxu0 0.0
        %2727 = vmatpush1.msra.mxu0 0.0
        %2728 = vmatprep.subr.mxu0 0.0
        %2729 = vmatpush1.msra.mxu0 0.0
        %2730 = vmatprep.subr.mxu0 0.0
        %2731 = vmatpush1.msra.mxu0 0.0
        %2732 = vmatprep.subr.mxu0 0.0
        %2733 = vmatpush1.msra.mxu0 %v2707
        %2734 = vmatprep.subr.mxu0 0.0
        %2735 = vmatpush1.msra.mxu0 %v2704
        %2736 = vmatprep.subr.mxu0 0.0
        %2737 = vmatpush1.msra.mxu0 %v2697
        %2738 = vmatprep.subr.mxu0 0.0
        %2739 = vmatpush1.msra.mxu0 %v2694
        %2740 = vmatprep.subr.mxu0 0.0
        %2741 = vmatpush2.msra.mxu0 0.0
        %2742 = vmatprep.subr.mxu0 0.0
        %2743 = vmatpush2.msra.mxu0 0.0
        %2744 = vmatprep.subr.mxu0 0.0
        %2745 = vmatpush2.msra.mxu0 0.0
        %2746 = vmatprep.subr.mxu0 0.0
        %2747 = vmatpush2.msra.mxu0 0.0
        %2748 = vmatprep.subr.mxu0 0.0
        %2749 = vmatpush2.msra.mxu0 0.0
        %2750 = vmatprep.subr.mxu0 0.0
        %2751 = vmatpush2.msra.mxu0 0.0
        %2752 = vmatprep.subr.mxu0 0.0
        %2753 = vmatpush2.msra.mxu0 0.0
        %2754 = vmatprep.subr.mxu0 0.0
        %2755 = vmatpush2.msra.mxu0 0.0
        %2756 = vmatprep.subr.mxu0 0.0
        %2757 = vmatpush2.msra.mxu0 0.0
        %2758 = vmatprep.subr.mxu0 0.0
        %2759 = vmatpush2.msra.mxu0 0.0
        %2760 = vmatprep.subr.mxu0 0.0
        %2761 = vmatpush2.msra.mxu0 0.0
        %2762 = vmatprep.subr.mxu0 0.0
        %2763 = vmatpush2.msra.mxu0 0.0
        %2764 = vmatprep.subr.mxu0 0.0
        %2765 = vmatpush2.msra.mxu0 0.0
        %2766 = vmatprep.subr.mxu0 0.0
        %2767 = vmatpush2.msra.mxu0 0.0
        %2768 = vmatprep.subr.mxu0 0.0
        %2769 = vmatpush2.msra.mxu0 0.0
        %2770 = vmatprep.subr.mxu0 0.0
        %2771 = vmatpush2.msra.mxu0 0.0
        %2772 = vmatprep.mubr.f32.mxu0 0.0
        %2773 = vmatmul.mubr.f32.gmra.mxu0 %v596
        %v2774 = vpop.f32.mrf.mxu0
        %v2775 = vadd.f32 0.0, %v2774
        %v2776 = vpop.f32.mrf.mxu0
        %2777 = vmatprep.mubr.f32.mxu0 0.0
        %2778 = vmatmul.mubr.f32.gmra.mxu0 %v599
        %v2779 = vpop.f32.mrf.mxu0
        %v2780 = vadd.f32 0.0, %v2779
        %v2781 = vpop.f32.mrf.mxu0
        %2782 = vmatprep.mubr.f32.mxu0 0.0
        %2783 = vmatmul.mubr.f32.gmra.mxu0 %v602
        %v2784 = vpop.f32.mrf.mxu0
        %v2785 = vadd.f32 0.0, %v2784
        %v2786 = vpop.f32.mrf.mxu0
        %2787 = vmatprep.mubr.f32.mxu0 0.0
        %2788 = vmatmul.mubr.f32.gmra.mxu0 %v605
        %v2789 = vpop.f32.mrf.mxu0
        %v2790 = vadd.f32 0.0, %v2789
        %v2791 = vpop.f32.mrf.mxu0
        %2792 = vdwg.mxu0
        %v2793 = vmul.f32 %v2775, 0.001953125
        %v2794 = vmul.f32 %v2780, 0.001953125
        %v2795 = vmul.f32 %v2785, 0.001953125
        %v2796 = vmul.f32 %v2790, 0.001953125
        %v2797 = vmul.f32 %v2793, %v2793
        %v2798 = vmul.f32 %v2794, %v2794
        %v2799 = vsub.f32 %v2795, %v2797
        %v2800 = vsub.f32 %v2796, %v2798
        %v2801 = vmax.f32 %v2799, 0.0
        %v2802 = vmax.f32 %v2800, 0.0
        %v2803 = vadd.f32 %v2801, 1e-05
        %v2804 = vadd.f32 %v2802, 1e-05
        %v2805 = vrsqrt.pop %v2803
        %v2806 = vrsqrt.pop %v2804
        %2809 = vrot.lane.b32.xlu0 %v2805, 5
        %v2810 = vpop.permute.xlu0 %2809
        %2811 = vrot.lane.b32.xlu0 %v2806, 5
        %v2812 = vpop.permute.xlu0 %2811
        %v2815 = vmul.f32 %v570, %v2810
        %v2816 = vmul.f32 %v571, %v2812
        %2819 = vrot.lane.b32.xlu0 %v2815, 123
        %v2820 = vpop.permute.xlu0 %2819
        %2821 = vrot.lane.b32.xlu0 %v2816, 123
        %v2822 = vpop.permute.xlu0 %2821
        %v2825 = vmul.f32 %v2793, %v2820
        %v2826 = vmul.f32 %v2794, %v2822
        %2829 = vrot.lane.b32.xlu0 %v2825, 5
        %v2830 = vpop.permute.xlu0 %2829
        %2831 = vrot.lane.b32.xlu0 %v2826, 5
        %v2832 = vpop.permute.xlu0 %2831
        %v2835 = vsub.f32 %v572, %v2830
        %v2836 = vsub.f32 %v573, %v2832
        %2837 = vset.pattern.permute.xlu0 5
        %2838 = vperm.xlu0 %2837, %v2815
        %v2839 = vpop.permute.xlu0 %2838
        %2841 = vset.pattern.permute.xlu0 5
        %2842 = vperm.xlu0 %2841, %v2816
        %v2843 = vpop.permute.xlu0 %2842
        %v2845 = vmul.f32 %v2682, %v2839
        %v2846 = vmul.f32 %v2684, %v2839
        %v2847 = vmul.f32 %v2688, %v2843
        %v2848 = vmul.f32 %v2690, %v2843
        %2850 = vset.pattern.permute.xlu0 5
        %2851 = vperm.xlu0 %2850, %v2835
        %v2852 = vpop.permute.xlu0 %2851
        %2855 = vset.pattern.permute.xlu0 5
        %2856 = vperm.xlu0 %2855, %v2836
        %v2857 = vpop.permute.xlu0 %2856
        %v2859 = vadd.f32 %v2845, %v2852
        %v2860 = vadd.f32 %v2846, %v2852
        %v2861 = vadd.f32 %v2847, %v2857
        %v2862 = vadd.f32 %v2848, %v2857
        %v2863 = vadd.f32 %v2859, %v1078
        %v2864 = vadd.f32 %v2860, %v1079
        %v2865 = vadd.f32 %v2861, %v1080
        %v2866 = vadd.f32 %v2862, %v1081
        %v2867 = vmax.f32 %v2863, 0.0
        %v2868 = vmax.f32 %v2864, 0.0
        %v2869 = vmax.f32 %v2865, 0.0
        %v2870 = vmax.f32 %v2866, 0.0
        %2871 = vst [vmem:[%s437] sm:$0xff] %v2867
        %2872 = vst [vmem:[%s437 + $0x8] sm:$0xff] %v2868
        %2873 = vst [vmem:[%s437 + $0x10] sm:$0xff] %v2869
        %2874 = vst [vmem:[%s437 + $0x18] sm:$0xff] %v2870
        %s2875 = sand.u32 %s291, 1
        %s2876 = scalar_lea.sflag [#allocation4], %s2875
        %s2877 = sand.u32 %s291, 1
        %s2878 = smul.addr %s2877, 32
        %s2879 = scalar_lea.vmem [#allocation3], %s2878
        // Predicated region
        $region92: #{tpu_custom_call.1} parent=86 // pred_check
          %p2880 = pneg %p301
        $region93: #{tpu_custom_call.1} parent=86 // pred_check_branch
          %2882 = sbr.rel (%p2880) target = $region95
        $region94: #{tpu_custom_call.1} parent=86 // pred_region
          %s2883 = smul.u32 2, %s26
          %s2885 = ssub.s32 512, 512
          %2886 = vsyncadd %s2876, %s2885
          %s2887 = smul.addr %s2883, 128
          %s2888 = scalar_lea.hbm %s12, %s2887
          %s2889 = sshll.u32 %s2879, 4
          %s2890 = int_to_ptr.vmem [resolvable:$true] %s2889
          %2895 = dma.vmem_to_hbm [thread:$0]  %s2890, 512, %s2888, %s2876, 256, 512, 16
        $region95: #{tpu_custom_call.1} parent=86 // pred_fallthru
          _
      $region87: #{tpu_custom_call.1} parent=5 // pred_fallthru
        _
      %p2896 = scmp.le.s32.totalorder 2, %s21
      // Predicated region
      $region96: #{tpu_custom_call.1} parent=5 // pred_check
        %p2897 = pneg %p2896
      $region97: #{tpu_custom_call.1} parent=5 // pred_check_branch
        %2899 = sbr.rel (%p2897) target = $region99
      $region98: #{tpu_custom_call.1} parent=5 // pred_region
        %s2900 = ssub.s32 %s21, 2
        // Predicated region
        $region100: #{tpu_custom_call.1} parent=98 // pred_check
          %p2901 = pneg %p307
        $region101: #{tpu_custom_call.1} parent=98 // pred_check_branch
          %2903 = sbr.rel (%p2901) target = $region103
        $region102: #{tpu_custom_call.1} parent=98 // pred_region
          %s2904 = sand.u32 %s292, 1
          %s2905 = scalar_lea.sflag [#allocation4], %s2904
          %s2906 = sand.u32 %s292, 1
          %s2907 = smul.addr %s2906, 32
          %s2908 = scalar_lea.vmem [#allocation3], %s2907
          %2909 = dma.done %s2905, 512
        $region103: #{tpu_custom_call.1} parent=98 // pred_fallthru
          _
      $region99: #{tpu_custom_call.1} parent=5 // pred_fallthru
        _
    $region6: #{tpu_custom_call.1} parent=1 // loop_footer
      %s25 = sadd.s32 1, %s21
    $region7: #{tpu_custom_call.1} parent=1 // loop_footer_branch
      %20 = sbr.rel target = $region3
    $region8: #{tpu_custom_call.1} parent=1 // loop_exit
      _
    %2910 = vsyncpa [#allocation4], 1
    %s2911 = scalar_lea.sflag [#allocation4], 1
    %2912 = vsyncpa %s2911, 1

</llo_original>
